<compile_context>
chip_gen: v5e
topology: v5e:2x2
jax: 0.10.0
libtpu: 0.0.40
codegen_flags: <defaults>
</compile_context>

<pallas_src>
import math
from functools import partial

import jax
import jax.numpy as jnp
from jax.experimental import pallas as pl
from jax.experimental.pallas import tpu as pltpu

BN_EPS = 1e-5

# Packed per-channel parameter block (see make_dpunit_params):
#   rows 0..8 : 3x3 depthwise taps, tap-major (ki*3 + kj)
#   row  9    : conv1 (1x1) bias
#   row 10    : folded (conv2 bias + BatchNorm) scale
#   row 11    : folded (conv2 bias + BatchNorm) shift
_PK_ROWS = 12
_PK_B1, _PK_SCALE, _PK_SHIFT = 9, 10, 11


# ---------------------------------------------------------------------------
# Kernel-body building blocks
# ---------------------------------------------------------------------------

def _zero_halo(mid_ref, H, W):
    """Zero only the 1-wide halo border of the padded depthwise scratch.

    Done every grid step (O(H+W) elements -- cheap) instead of zeroing the whole
    scratch; the interior is fully overwritten each step.  A pl.when(program_id==0)
    guard would be unsafe under a megacore 'parallel' split of the batch axis,
    because the core running the later iterations never sees step 0."""
    C = mid_ref.shape[-1]
    zrow = jnp.zeros((1, W + 2, C), jnp.float32)
    zcol = jnp.zeros((H + 2, 1, C), jnp.float32)
    mid_ref[0:1, :, :] = zrow
    mid_ref[H + 1:H + 2, :, :] = zrow
    mid_ref[:, 0:1, :] = zcol
    mid_ref[:, W + 1:W + 2, :] = zcol


def _store_interior(mid_ref, y, H, W):
    """Scatter the flat (H*W, C) 1x1-conv output into the scratch interior."""
    C = y.shape[-1]
    if W % 8 == 0:
        # layout-preserving reshape -> one vectorized store of the whole interior.
        mid_ref[1:H + 1, 1:W + 1, :] = y.reshape(H, W, C)
    else:
        # tiny-W fallback (test stages have W in {4, 2}); production W is padded to 8k.
        for h in range(H):
            mid_ref[h + 1, 1:W + 1, :] = y[h * W:(h + 1) * W, :]


def _flatten_hw(acc, H, W):
    """(H, W, C) -> (H*W, C) for the next 1x1 matmul."""
    C = acc.shape[-1]
    if W % 8 == 0:
        return acc.reshape(H * W, C)            # layout-preserving merge
    return jnp.concatenate([acc[h] for h in range(H)], axis=0)


def _dpunit_compute(x_flat, w1_ref, pk_ref, mid_ref, *, H, W, relu):
    """ConvDPUnit entirely in VMEM:
       1x1 conv (MXU) -> 3x3 depthwise (VPU) -> folded (bias+BN) affine (+ReLU).
       x_flat: (H*W, Cin); returns (H, W, Cout) f32."""
    C = w1_ref.shape[1]

    # 1x1 pointwise conv: one (H*W, Cin) @ (Cin, Cout) matmul with f32 accumulation.
    y = jnp.dot(x_flat, w1_ref[...], preferred_element_type=jnp.float32) + pk_ref[_PK_B1, :]

    # Padded VMEM scratch provides the 3x3 halo; the intermediate never touches HBM.
    _zero_halo(mid_ref, H, W)
    _store_interior(mid_ref, y, H, W)

    # 3x3 depthwise conv: 3 column-shifted slabs, each reused across 3 row offsets
    # (row shifts live on the untiled axis and are free).
    acc = jnp.zeros((H, W, C), jnp.float32)
    for kj in range(3):
        col = mid_ref[:, kj:kj + W, :]                    # (H+2, W, C)
        for ki in range(3):
            acc = acc + col[ki:ki + H] * pk_ref[ki * 3 + kj, :]

    # Folded (conv2 bias + BatchNorm) affine, then ReLU.
    acc = acc * pk_ref[_PK_SCALE, :] + pk_ref[_PK_SHIFT, :]
    if relu:
        acc = jnp.maximum(acc, 0.0)
    return acc


def _pool2x2(acc, stage_ref, o_pool_ref, H, W):
    """Fused 2x2 max pool epilogue; emits one full-block store."""
    Ho, Wo = H // 2, W // 2
    C = acc.shape[-1]
    a = acc.reshape(Ho, 2, W, C)                          # split of the untiled axis only
    rm = jnp.maximum(a[:, 0], a[:, 1])                    # (Ho, W, C) row-pair max
    if Wo >= 8:
        # Production path: stage into the (already consumed) scratch interior and
        # decimate columns with two strided reads -> one vector max + one store.
        stage_ref[1:Ho + 1, 1:W + 1, :] = rm
        ev = stage_ref[1:Ho + 1, pl.ds(1, Wo, 2), :]
        od = stage_ref[1:Ho + 1, pl.ds(2, Wo, 2), :]
        pooled = jnp.maximum(ev, od)
    else:
        # Tiny-W fallback: per-pair maxima assembled with one concat, still one store.
        pairs = [jnp.maximum(rm[:, 2 * wo:2 * wo + 1, :], rm[:, 2 * wo + 1:2 * wo + 2, :])
                 for wo in range(Wo)]
        pooled = jnp.concatenate(pairs, axis=1)
    o_pool_ref[0] = pooled.astype(o_pool_ref.dtype)


def _unpack_outs(rest, emit_full, pool):
    refs = list(rest)
    o_full = refs.pop(0) if emit_full else None
    o_pool = refs.pop(0) if pool else None
    return o_full, o_pool, refs                            # remaining refs are scratch


def _emit(acc, o_full, o_pool, stage_ref, H, W):
    if o_full is not None:
        o_full[0] = acc.astype(o_full.dtype)
    if o_pool is not None:
        _pool2x2(acc, stage_ref, o_pool, H, W)


# ---------------------------------------------------------------------------
# Kernels (one per stage)
# ---------------------------------------------------------------------------

def _head_stage_kernel(xcol_ref, wh_ref, hp_ref, w1_ref, pk_ref, *rest,
                       H, W, emit_full, pool):
    """Conv_head: 3x3/s2 conv (im2col matmul) + BN + ReLU + ConvDPUnit (+ fused pool)."""
    o_full, o_pool, (mid_ref,) = _unpack_outs(rest, emit_full, pool)
    z = jnp.dot(xcol_ref[0], wh_ref[...], preferred_element_type=jnp.float32)
    z = jnp.maximum(z * hp_ref[0, :] + hp_ref[1, :], 0.0)
    acc = _dpunit_compute(z.astype(jnp.bfloat16), w1_ref, pk_ref, mid_ref,
                          H=H, W=W, relu=True)
    _emit(acc, o_full, o_pool, mid_ref, H, W)


def _block_kernel(x_ref, w1a_ref, pka_ref, w1b_ref, pkb_ref, *rest,
                  H, W, relu2, emit_full, pool):
    """Conv4layerBlock: both ConvDPUnits fused in one kernel; the u1->u2 carry stays
    in VMEM/registers (no HBM round trip), with an optional fused 2x2 max pool."""
    o_full, o_pool, (mid1_ref, mid2_ref) = _unpack_outs(rest, emit_full, pool)
    acc1 = _dpunit_compute(x_ref[0], w1a_ref, pka_ref, mid1_ref, H=H, W=W, relu=True)
    x2 = _flatten_hw(acc1, H, W).astype(jnp.bfloat16)
    acc2 = _dpunit_compute(x2, w1b_ref, pkb_ref, mid2_ref, H=H, W=W, relu=relu2)
    _emit(acc2, o_full, o_pool, mid2_ref, H, W)


# ---------------------------------------------------------------------------
# pallas_call wrappers
# ---------------------------------------------------------------------------

def _out_shapes_specs(n, h, w, c, emit_full, pool):
    shapes, specs = [], []
    if emit_full:
        shapes.append(jax.ShapeDtypeStruct((n, h, w, c), jnp.bfloat16))
        specs.append(pl.BlockSpec((1, h, w, c), lambda b: (b, 0, 0, 0)))
    if pool:
        shapes.append(jax.ShapeDtypeStruct((n, h // 2, w // 2, c), jnp.bfloat16))
        specs.append(pl.BlockSpec((1, h // 2, w // 2, c), lambda b: (b, 0, 0, 0)))
    return shapes, specs


def _split_outs(outs, emit_full, pool):
    outs = list(outs) if isinstance(outs, (list, tuple)) else [outs]
    full = outs.pop(0) if emit_full else None
    pooled = outs.pop(0) if pool else None
    return full, pooled


def run_head_stage(x_nhwc, p, *, pool, emit_full):
    """Conv_head fused into one pallas_call (grid over batch; both v7x TCs get work)."""
    assert emit_full or pool
    n, h, w, cin = x_nhwc.shape
    ho, wo = h // 2, w // 2
    dp = p["dp"]
    cmid = p["wh"].shape[1]
    cout = dp["w1"].shape[1]
    m = ho * wo

    # glue: im2col patch extraction for the stride-2 head conv (tap-major, channel-minor).
    # TODO(synk): move this into the kernel (padded-input VMEM scratch + shifted slab
    #             reads) to avoid the expanded im2col HBM read at production resolutions.
    xp = jnp.pad(x_nhwc, ((0, 0), (1, 1), (1, 1), (0, 0)))
    patches = [xp[:, ki:ki + 2 * ho:2, kj:kj + 2 * wo:2, :]
               for ki in range(3) for kj in range(3)]
    xcol = jnp.concatenate(patches, axis=-1).reshape(n, m, 9 * cin).astype(jnp.bfloat16)

    out_shapes, out_specs = _out_shapes_specs(n, ho, wo, cout, emit_full, pool)
    outs = pl.pallas_call(
        partial(_head_stage_kernel, H=ho, W=wo, emit_full=emit_full, pool=pool),
        out_shape=tuple(out_shapes),
        grid=(n,),
        in_specs=[pl.BlockSpec((1, m, 9 * cin), lambda b: (b, 0, 0)),
                  pl.BlockSpec((9 * cin, cmid), lambda b: (0, 0)),
                  pl.BlockSpec((2, cmid), lambda b: (0, 0)),
                  pl.BlockSpec((cmid, cout), lambda b: (0, 0)),
                  pl.BlockSpec((_PK_ROWS, cout), lambda b: (0, 0))],
        out_specs=tuple(out_specs),
        scratch_shapes=[pltpu.VMEM((ho + 2, wo + 2, cout), jnp.float32)],
        compiler_params=pltpu.CompilerParams(dimension_semantics=("parallel",)),
    )(xcol, p["wh"], p["hp"], dp["w1"], dp["pk"])
    return _split_outs(outs, emit_full, pool)


def run_block(x_nhwc, p, *, relu2, pool, emit_full):
    """One fused Conv4layerBlock pallas_call (u1 + u2 + optional pool)."""
    assert emit_full or pool
    n, h, w, cin = x_nhwc.shape
    cmid = p["u1"]["w1"].shape[1]                 # == cin
    cout = p["u2"]["w1"].shape[1]
    m = h * w
    # (N,H,W,C) -> (N,H*W,C) is a free metadata reshape; matmul inputs carried in bf16.
    x_flat = x_nhwc.reshape(n, m, cin).astype(jnp.bfloat16)

    out_shapes, out_specs = _out_shapes_specs(n, h, w, cout, emit_full, pool)
    outs = pl.pallas_call(
        partial(_block_kernel, H=h, W=w, relu2=relu2, emit_full=emit_full, pool=pool),
        out_shape=tuple(out_shapes),
        grid=(n,),
        in_specs=[pl.BlockSpec((1, m, cin), lambda b: (b, 0, 0)),
                  pl.BlockSpec((cin, cmid), lambda b: (0, 0)),
                  pl.BlockSpec((_PK_ROWS, cmid), lambda b: (0, 0)),
                  pl.BlockSpec((cmid, cout), lambda b: (0, 0)),
                  pl.BlockSpec((_PK_ROWS, cout), lambda b: (0, 0))],
        out_specs=tuple(out_specs),
        scratch_shapes=[pltpu.VMEM((h + 2, w + 2, cmid), jnp.float32),
                        pltpu.VMEM((h + 2, w + 2, cout), jnp.float32)],
        compiler_params=pltpu.CompilerParams(dimension_semantics=("parallel",)),
    )(x_flat, p["u1"]["w1"], p["u1"]["pk"], p["u2"]["w1"], p["u2"]["pk"])
    return _split_outs(outs, emit_full, pool)


def yunet_backbone(x_nchw, params, stage_channels, downsample_idx, out_idx):
    # bf16 cast before the NCHW->NHWC transpose so the transpose moves half the bytes.
    x = jnp.transpose(x_nchw.astype(jnp.bfloat16), (0, 2, 3, 1))
    outs = []
    for i in range(len(stage_channels)):
        p = params[f"model{i}"]
        emit = i in out_idx
        pool = i in downsample_idx
        emit_full = emit or not pool
        if i == 0:
            full, pooled = run_head_stage(x, p, pool=pool, emit_full=emit_full)
        else:
            full, pooled = run_block(x, p, relu2=True, pool=pool, emit_full=emit_full)
        if emit:
            # PyTorch-facing map: NHWC (bf16) -> NCHW, f32 cast after the transpose.
            outs.append(jnp.transpose(full, (0, 3, 1, 2)).astype(jnp.float32))
        x = pooled if pool else full
    return outs


# ---------------------------------------------------------------------------
# Deterministic parameter initialization (mirrors init_weights, eval-mode BN folded)
# ---------------------------------------------------------------------------

def _xavier(key, fan_in, fan_out, shape):
    std = math.sqrt(2.0 / (fan_in + fan_out))
    return (std * jax.random.normal(key, shape)).astype(jnp.float32)


def _bn_fold(bias):
    # eval-mode BatchNorm2d with init running stats (mean 0, var 1, gamma 1, beta 0),
    # with the preceding conv bias folded in:  y = x * scale + shift
    s = 1.0 / math.sqrt(1.0 + BN_EPS)
    return jnp.full(bias.shape, s, jnp.float32), (bias * s).astype(jnp.float32)


def make_dpunit_params(key, cin, cout, with_bn=True):
    k1, k2 = jax.random.split(key)
    b1 = jnp.full((cout,), 0.02, jnp.float32)
    b2 = jnp.full((cout,), 0.02, jnp.float32)
    if with_bn:
        scale, shift = _bn_fold(b2)
    else:
        scale, shift = jnp.ones((cout,), jnp.float32), b2
    wdw = _xavier(k2, 9, 9 * cout, (9, cout))                       # dw 3x3, tap-major
    pk = jnp.concatenate([wdw, b1[None], scale[None], shift[None]], axis=0)   # (12, Cout)
    return {"w1": _xavier(k1, cin, cout, (cin, cout)).astype(jnp.bfloat16),   # 1x1 (Cin,Cout)
            "pk": pk}


def make_head_params(key, cin, cmid, cout):
    k1, k2 = jax.random.split(key)
    b = jnp.full((cmid,), 0.02, jnp.float32)
    scale, shift = _bn_fold(b)
    return {
        "wh": _xavier(k1, 9 * cin, 9 * cmid, (9 * cin, cmid)).astype(jnp.bfloat16),
        "hp": jnp.stack([scale, shift], axis=0),                    # (2, Cmid) folded BN
        "dp": make_dpunit_params(k2, cmid, cout, True),
    }


def make_block_params(key, cin, cout, with_bn=True):
    k1, k2 = jax.random.split(key)
    return {"u1": make_dpunit_params(k1, cin, cin, True),
            "u2": make_dpunit_params(k2, cin, cout, with_bn)}


def init_params(key, stage_channels):
    keys = jax.random.split(key, len(stage_channels))
    params = {"model0": make_head_params(keys[0], *stage_channels[0])}
    for i in range(1, len(stage_channels)):
        params[f"model{i}"] = make_block_params(keys[i], *stage_channels[i])
    return params


# ---------------------------------------------------------------------------

if __name__ == "__main__":
    stage_channels = [(4, 8, 16), (16, 32), (32, 48)]
    downsample_idx = (0, 1)
    out_idx = (1, 2)

    root = jax.random.PRNGKey(0)
    kp, kx = jax.random.split(root)
    params = init_params(kp, stage_channels)
    x = jax.random.normal(kx, (2, 4, 16, 16), jnp.float32)   # NCHW, like the PyTorch module

    fwd = jax.jit(partial(yunet_backbone,
                          stage_channels=stage_channels,
                          downsample_idx=downsample_idx,
                          out_idx=out_idx))
    outs = fwd(x, params)
    jax.block_until_ready(outs)

    assert outs[0].shape == (2, 32, 4, 4), outs[0].shape
    assert outs[1].shape == (2, 48, 2, 2), outs[1].shape
    print("KERNEL_OK")
</pallas_src>

<mosaic_0001>
module attributes {stable_mosaic.version = 11 : i64} {
  func.func @_head_stage_kernel(%arg0: i32, %arg1: memref<1x64x36xbf16, #tpu.memory_space<vmem>>, %arg2: memref<36x8xbf16, #tpu.memory_space<vmem>>, %arg3: memref<2x8xf32, #tpu.memory_space<vmem>>, %arg4: memref<8x16xbf16, #tpu.memory_space<vmem>>, %arg5: memref<12x16xf32, #tpu.memory_space<vmem>>, %arg6: memref<1x4x4x16xbf16, #tpu.memory_space<vmem>>, %arg7: memref<10x10x16xf32, #tpu.memory_space<vmem>>) attributes {dimension_semantics = [#tpu.dimension_semantics<parallel>], iteration_bounds = array<i64: 2>, scalar_prefetch = 0 : i64, scratch_operands = 1 : i64, tpu.core_type = #tpu.core_type<tc>, window_params = [{transform_indices = @transform_0, window_bounds = array<i64: 1, 64, 36>}, {pipeline_mode = #tpu.pipeline_mode<synchronous>, transform_indices = @transform_1, window_bounds = array<i64: 36, 8>}, {pipeline_mode = #tpu.pipeline_mode<synchronous>, transform_indices = @transform_2, window_bounds = array<i64: 2, 8>}, {pipeline_mode = #tpu.pipeline_mode<synchronous>, transform_indices = @transform_3, window_bounds = array<i64: 8, 16>}, {pipeline_mode = #tpu.pipeline_mode<synchronous>, transform_indices = @transform_4, window_bounds = array<i64: 12, 16>}, {transform_indices = @transform_5, window_bounds = array<i64: 1, 4, 4, 16>}]} {
    %c0 = arith.constant 0 : index
    %c0_0 = arith.constant 0 : index
    %c0_1 = arith.constant 0 : index
    %0 = vector.load %arg1[%c0, %c0_0, %c0_1] : memref<1x64x36xbf16, #tpu.memory_space<vmem>>, vector<1x64x36xbf16>
    %1 = vector.shape_cast %0 : vector<1x64x36xbf16> to vector<64x36xbf16>
    %c0_2 = arith.constant 0 : index
    %c0_3 = arith.constant 0 : index
    %2 = vector.load %arg2[%c0_2, %c0_3] : memref<36x8xbf16, #tpu.memory_space<vmem>>, vector<36x8xbf16>
    %cst = arith.constant dense<0.000000e+00> : vector<64x8xf32>
    %3 = tpu.matmul %1, %2, %cst {dimension_numbers = #tpu.dot_dimension_numbers<[1], [0], [0], [1], [0, 0, 1, 1], [], []>} : vector<64x36xbf16>, vector<36x8xbf16>, vector<64x8xf32> -> vector<64x8xf32>
    %c0_4 = arith.constant 0 : index
    %c0_5 = arith.constant 0 : index
    %4 = vector.load %arg3[%c0_4, %c0_5] : memref<2x8xf32, #tpu.memory_space<vmem>>, vector<1x8xf32>
    %5 = vector.shape_cast %4 : vector<1x8xf32> to vector<8xf32>
    %6 = vector.shape_cast %5 : vector<8xf32> to vector<1x8xf32>
    %7 = vector.broadcast %6 : vector<1x8xf32> to vector<64x8xf32>
    %8 = arith.mulf %3, %7 : vector<64x8xf32>
    %c1 = arith.constant 1 : index
    %c0_6 = arith.constant 0 : index
    %9 = vector.load %arg3[%c1, %c0_6] : memref<2x8xf32, #tpu.memory_space<vmem>>, vector<1x8xf32>
    %10 = vector.shape_cast %9 : vector<1x8xf32> to vector<8xf32>
    %11 = vector.shape_cast %10 : vector<8xf32> to vector<1x8xf32>
    %12 = vector.broadcast %11 : vector<1x8xf32> to vector<64x8xf32>
    %13 = arith.addf %8, %12 : vector<64x8xf32>
    %cst_7 = arith.constant 0.000000e+00 : f32
    %14 = vector.broadcast %cst_7 : f32 to vector<64x8xf32>
    %15 = arith.maximumf %13, %14 : vector<64x8xf32>
    %16 = arith.truncf %15 : vector<64x8xf32> to vector<64x8xbf16>
    %c0_8 = arith.constant 0 : index
    %c0_9 = arith.constant 0 : index
    %17 = vector.load %arg4[%c0_8, %c0_9] : memref<8x16xbf16, #tpu.memory_space<vmem>>, vector<8x16xbf16>
    %cst_10 = arith.constant dense<0.000000e+00> : vector<64x16xf32>
    %18 = tpu.matmul %16, %17, %cst_10 {dimension_numbers = #tpu.dot_dimension_numbers<[1], [0], [0], [1], [0, 0, 1, 1], [], []>} : vector<64x8xbf16>, vector<8x16xbf16>, vector<64x16xf32> -> vector<64x16xf32>
    %c9 = arith.constant 9 : index
    %c0_11 = arith.constant 0 : index
    %19 = vector.load %arg5[%c9, %c0_11] : memref<12x16xf32, #tpu.memory_space<vmem>>, vector<1x16xf32>
    %20 = vector.shape_cast %19 : vector<1x16xf32> to vector<16xf32>
    %21 = vector.shape_cast %20 : vector<16xf32> to vector<1x16xf32>
    %22 = vector.broadcast %21 : vector<1x16xf32> to vector<64x16xf32>
    %23 = arith.addf %18, %22 : vector<64x16xf32>
    %cst_12 = arith.constant 0.000000e+00 : f32
    %24 = vector.broadcast %cst_12 : f32 to vector<1x10x16xf32>
    %cst_13 = arith.constant 0.000000e+00 : f32
    %25 = vector.broadcast %cst_13 : f32 to vector<10x1x16xf32>
    %c0_14 = arith.constant 0 : index
    %c0_15 = arith.constant 0 : index
    %c0_16 = arith.constant 0 : index
    %26 = vector.load %arg7[%c0_14, %c0_15, %c0_16] : memref<10x10x16xf32, #tpu.memory_space<vmem>>, vector<1x10x16xf32>
    tpu.vector_store %arg7[%c0_14, %c0_15, %c0_16], %24 {strides = array<i32>} : memref<10x10x16xf32, #tpu.memory_space<vmem>>, vector<1x10x16xf32>,
    %c9_17 = arith.constant 9 : index
    %c0_18 = arith.constant 0 : index
    %c0_19 = arith.constant 0 : index
    %27 = vector.load %arg7[%c9_17, %c0_18, %c0_19] : memref<10x10x16xf32, #tpu.memory_space<vmem>>, vector<1x10x16xf32>
    tpu.vector_store %arg7[%c9_17, %c0_18, %c0_19], %24 {strides = array<i32>} : memref<10x10x16xf32, #tpu.memory_space<vmem>>, vector<1x10x16xf32>,
    %c0_20 = arith.constant 0 : index
    %c0_21 = arith.constant 0 : index
    %c0_22 = arith.constant 0 : index
    %28 = vector.load %arg7[%c0_20, %c0_21, %c0_22] : memref<10x10x16xf32, #tpu.memory_space<vmem>>, vector<10x1x16xf32>
    tpu.vector_store %arg7[%c0_20, %c0_21, %c0_22], %25 {strides = array<i32>} : memref<10x10x16xf32, #tpu.memory_space<vmem>>, vector<10x1x16xf32>,
    %c0_23 = arith.constant 0 : index
    %c9_24 = arith.constant 9 : index
    %c0_25 = arith.constant 0 : index
    %29 = vector.load %arg7[%c0_23, %c9_24, %c0_25] : memref<10x10x16xf32, #tpu.memory_space<vmem>>, vector<10x1x16xf32>
    tpu.vector_store %arg7[%c0_23, %c9_24, %c0_25], %25 {strides = array<i32>} : memref<10x10x16xf32, #tpu.memory_space<vmem>>, vector<10x1x16xf32>,
    %30 = vector.shape_cast %23 : vector<64x16xf32> to vector<8x8x16xf32>
    %c1_26 = arith.constant 1 : index
    %c1_27 = arith.constant 1 : index
    %c0_28 = arith.constant 0 : index
    %31 = vector.load %arg7[%c1_26, %c1_27, %c0_28] : memref<10x10x16xf32, #tpu.memory_space<vmem>>, vector<8x8x16xf32>
    tpu.vector_store %arg7[%c1_26, %c1_27, %c0_28], %30 {strides = array<i32>} : memref<10x10x16xf32, #tpu.memory_space<vmem>>, vector<8x8x16xf32>,
    %cst_29 = arith.constant 0.000000e+00 : f32
    %32 = vector.broadcast %cst_29 : f32 to vector<8x8x16xf32>
    %c0_30 = arith.constant 0 : index
    %c0_31 = arith.constant 0 : index
    %c0_32 = arith.constant 0 : index
    %33 = vector.load %arg7[%c0_30, %c0_31, %c0_32] : memref<10x10x16xf32, #tpu.memory_space<vmem>>, vector<10x8x16xf32>
    %34 = vector.extract_strided_slice %33 {offsets = [0, 0, 0], sizes = [8, 8, 16], strides = [1, 1, 1]} : vector<10x8x16xf32> to vector<8x8x16xf32>
    %c0_33 = arith.constant 0 : index
    %c0_34 = arith.constant 0 : index
    %35 = vector.load %arg5[%c0_33, %c0_34] : memref<12x16xf32, #tpu.memory_space<vmem>>, vector<1x16xf32>
    %36 = vector.shape_cast %35 : vector<1x16xf32> to vector<16xf32>
    %37 = vector.shape_cast %36 : vector<16xf32> to vector<1x1x16xf32>
    %38 = vector.broadcast %37 : vector<1x1x16xf32> to vector<8x8x16xf32>
    %39 = arith.mulf %34, %38 : vector<8x8x16xf32>
    %40 = arith.addf %32, %39 : vector<8x8x16xf32>
    %41 = vector.extract_strided_slice %33 {offsets = [1, 0, 0], sizes = [8, 8, 16], strides = [1, 1, 1]} : vector<10x8x16xf32> to vector<8x8x16xf32>
    %c3 = arith.constant 3 : index
    %c0_35 = arith.constant 0 : index
    %42 = vector.load %arg5[%c3, %c0_35] : memref<12x16xf32, #tpu.memory_space<vmem>>, vector<1x16xf32>
    %43 = vector.shape_cast %42 : vector<1x16xf32> to vector<16xf32>
    %44 = vector.shape_cast %43 : vector<16xf32> to vector<1x1x16xf32>
    %45 = vector.broadcast %44 : vector<1x1x16xf32> to vector<8x8x16xf32>
    %46 = arith.mulf %41, %45 : vector<8x8x16xf32>
    %47 = arith.addf %40, %46 : vector<8x8x16xf32>
    %48 = vector.extract_strided_slice %33 {offsets = [2, 0, 0], sizes = [8, 8, 16], strides = [1, 1, 1]} : vector<10x8x16xf32> to vector<8x8x16xf32>
    %c6 = arith.constant 6 : index
    %c0_36 = arith.constant 0 : index
    %49 = vector.load %arg5[%c6, %c0_36] : memref<12x16xf32, #tpu.memory_space<vmem>>, vector<1x16xf32>
    %50 = vector.shape_cast %49 : vector<1x16xf32> to vector<16xf32>
    %51 = vector.shape_cast %50 : vector<16xf32> to vector<1x1x16xf32>
    %52 = vector.broadcast %51 : vector<1x1x16xf32> to vector<8x8x16xf32>
    %53 = arith.mulf %48, %52 : vector<8x8x16xf32>
    %54 = arith.addf %47, %53 : vector<8x8x16xf32>
    %c0_37 = arith.constant 0 : index
    %c1_38 = arith.constant 1 : index
    %c0_39 = arith.constant 0 : index
    %55 = vector.load %arg7[%c0_37, %c1_38, %c0_39] : memref<10x10x16xf32, #tpu.memory_space<vmem>>, vector<10x8x16xf32>
    %56 = vector.extract_strided_slice %55 {offsets = [0, 0, 0], sizes = [8, 8, 16], strides = [1, 1, 1]} : vector<10x8x16xf32> to vector<8x8x16xf32>
    %c1_40 = arith.constant 1 : index
    %c0_41 = arith.constant 0 : index
    %57 = vector.load %arg5[%c1_40, %c0_41] : memref<12x16xf32, #tpu.memory_space<vmem>>, vector<1x16xf32>
    %58 = vector.shape_cast %57 : vector<1x16xf32> to vector<16xf32>
    %59 = vector.shape_cast %58 : vector<16xf32> to vector<1x1x16xf32>
    %60 = vector.broadcast %59 : vector<1x1x16xf32> to vector<8x8x16xf32>
    %61 = arith.mulf %56, %60 : vector<8x8x16xf32>
    %62 = arith.addf %54, %61 : vector<8x8x16xf32>
    %63 = vector.extract_strided_slice %55 {offsets = [1, 0, 0], sizes = [8, 8, 16], strides = [1, 1, 1]} : vector<10x8x16xf32> to vector<8x8x16xf32>
    %c4 = arith.constant 4 : index
    %c0_42 = arith.constant 0 : index
    %64 = vector.load %arg5[%c4, %c0_42] : memref<12x16xf32, #tpu.memory_space<vmem>>, vector<1x16xf32>
    %65 = vector.shape_cast %64 : vector<1x16xf32> to vector<16xf32>
    %66 = vector.shape_cast %65 : vector<16xf32> to vector<1x1x16xf32>
    %67 = vector.broadcast %66 : vector<1x1x16xf32> to vector<8x8x16xf32>
    %68 = arith.mulf %63, %67 : vector<8x8x16xf32>
    %69 = arith.addf %62, %68 : vector<8x8x16xf32>
    %70 = vector.extract_strided_slice %55 {offsets = [2, 0, 0], sizes = [8, 8, 16], strides = [1, 1, 1]} : vector<10x8x16xf32> to vector<8x8x16xf32>
    %c7 = arith.constant 7 : index
    %c0_43 = arith.constant 0 : index
    %71 = vector.load %arg5[%c7, %c0_43] : memref<12x16xf32, #tpu.memory_space<vmem>>, vector<1x16xf32>
    %72 = vector.shape_cast %71 : vector<1x16xf32> to vector<16xf32>
    %73 = vector.shape_cast %72 : vector<16xf32> to vector<1x1x16xf32>
    %74 = vector.broadcast %73 : vector<1x1x16xf32> to vector<8x8x16xf32>
    %75 = arith.mulf %70, %74 : vector<8x8x16xf32>
    %76 = arith.addf %69, %75 : vector<8x8x16xf32>
    %c0_44 = arith.constant 0 : index
    %c2 = arith.constant 2 : index
    %c0_45 = arith.constant 0 : index
    %77 = vector.load %arg7[%c0_44, %c2, %c0_45] : memref<10x10x16xf32, #tpu.memory_space<vmem>>, vector<10x8x16xf32>
    %78 = vector.extract_strided_slice %77 {offsets = [0, 0, 0], sizes = [8, 8, 16], strides = [1, 1, 1]} : vector<10x8x16xf32> to vector<8x8x16xf32>
    %c2_46 = arith.constant 2 : index
    %c0_47 = arith.constant 0 : index
    %79 = vector.load %arg5[%c2_46, %c0_47] : memref<12x16xf32, #tpu.memory_space<vmem>>, vector<1x16xf32>
    %80 = vector.shape_cast %79 : vector<1x16xf32> to vector<16xf32>
    %81 = vector.shape_cast %80 : vector<16xf32> to vector<1x1x16xf32>
    %82 = vector.broadcast %81 : vector<1x1x16xf32> to vector<8x8x16xf32>
    %83 = arith.mulf %78, %82 : vector<8x8x16xf32>
    %84 = arith.addf %76, %83 : vector<8x8x16xf32>
    %85 = vector.extract_strided_slice %77 {offsets = [1, 0, 0], sizes = [8, 8, 16], strides = [1, 1, 1]} : vector<10x8x16xf32> to vector<8x8x16xf32>
    %c5 = arith.constant 5 : index
    %c0_48 = arith.constant 0 : index
    %86 = vector.load %arg5[%c5, %c0_48] : memref<12x16xf32, #tpu.memory_space<vmem>>, vector<1x16xf32>
    %87 = vector.shape_cast %86 : vector<1x16xf32> to vector<16xf32>
    %88 = vector.shape_cast %87 : vector<16xf32> to vector<1x1x16xf32>
    %89 = vector.broadcast %88 : vector<1x1x16xf32> to vector<8x8x16xf32>
    %90 = arith.mulf %85, %89 : vector<8x8x16xf32>
    %91 = arith.addf %84, %90 : vector<8x8x16xf32>
    %92 = vector.extract_strided_slice %77 {offsets = [2, 0, 0], sizes = [8, 8, 16], strides = [1, 1, 1]} : vector<10x8x16xf32> to vector<8x8x16xf32>
    %c8 = arith.constant 8 : index
    %c0_49 = arith.constant 0 : index
    %93 = vector.load %arg5[%c8, %c0_49] : memref<12x16xf32, #tpu.memory_space<vmem>>, vector<1x16xf32>
    %94 = vector.shape_cast %93 : vector<1x16xf32> to vector<16xf32>
    %95 = vector.shape_cast %94 : vector<16xf32> to vector<1x1x16xf32>
    %96 = vector.broadcast %95 : vector<1x1x16xf32> to vector<8x8x16xf32>
    %97 = arith.mulf %92, %96 : vector<8x8x16xf32>
    %98 = arith.addf %91, %97 : vector<8x8x16xf32>
    %c10 = arith.constant 10 : index
    %c0_50 = arith.constant 0 : index
    %99 = vector.load %arg5[%c10, %c0_50] : memref<12x16xf32, #tpu.memory_space<vmem>>, vector<1x16xf32>
    %100 = vector.shape_cast %99 : vector<1x16xf32> to vector<16xf32>
    %101 = vector.shape_cast %100 : vector<16xf32> to vector<1x1x16xf32>
    %102 = vector.broadcast %101 : vector<1x1x16xf32> to vector<8x8x16xf32>
    %103 = arith.mulf %98, %102 : vector<8x8x16xf32>
    %c11 = arith.constant 11 : index
    %c0_51 = arith.constant 0 : index
    %104 = vector.load %arg5[%c11, %c0_51] : memref<12x16xf32, #tpu.memory_space<vmem>>, vector<1x16xf32>
    %105 = vector.shape_cast %104 : vector<1x16xf32> to vector<16xf32>
    %106 = vector.shape_cast %105 : vector<16xf32> to vector<1x1x16xf32>
    %107 = vector.broadcast %106 : vector<1x1x16xf32> to vector<8x8x16xf32>
    %108 = arith.addf %103, %107 : vector<8x8x16xf32>
    %cst_52 = arith.constant 0.000000e+00 : f32
    %109 = vector.broadcast %cst_52 : f32 to vector<8x8x16xf32>
    %110 = arith.maximumf %108, %109 : vector<8x8x16xf32>
    %111 = vector.shape_cast %110 : vector<8x8x16xf32> to vector<4x2x8x16xf32>
    %112 = vector.extract_strided_slice %111 {offsets = [0, 0, 0, 0], sizes = [4, 1, 8, 16], strides = [1, 1, 1, 1]} : vector<4x2x8x16xf32> to vector<4x1x8x16xf32>
    %113 = vector.shape_cast %112 : vector<4x1x8x16xf32> to vector<4x8x16xf32>
    %114 = vector.extract_strided_slice %111 {offsets = [0, 1, 0, 0], sizes = [4, 1, 8, 16], strides = [1, 1, 1, 1]} : vector<4x2x8x16xf32> to vector<4x1x8x16xf32>
    %115 = vector.shape_cast %114 : vector<4x1x8x16xf32> to vector<4x8x16xf32>
    %116 = arith.maximumf %113, %115 : vector<4x8x16xf32>
    %117 = vector.extract_strided_slice %116 {offsets = [0, 0, 0], sizes = [4, 1, 16], strides = [1, 1, 1]} : vector<4x8x16xf32> to vector<4x1x16xf32>
    %118 = vector.extract_strided_slice %116 {offsets = [0, 1, 0], sizes = [4, 1, 16], strides = [1, 1, 1]} : vector<4x8x16xf32> to vector<4x1x16xf32>
    %119 = arith.maximumf %117, %118 : vector<4x1x16xf32>
    %120 = vector.extract_strided_slice %116 {offsets = [0, 2, 0], sizes = [4, 1, 16], strides = [1, 1, 1]} : vector<4x8x16xf32> to vector<4x1x16xf32>
    %121 = vector.extract_strided_slice %116 {offsets = [0, 3, 0], sizes = [4, 1, 16], strides = [1, 1, 1]} : vector<4x8x16xf32> to vector<4x1x16xf32>
    %122 = arith.maximumf %120, %121 : vector<4x1x16xf32>
    %123 = vector.extract_strided_slice %116 {offsets = [0, 4, 0], sizes = [4, 1, 16], strides = [1, 1, 1]} : vector<4x8x16xf32> to vector<4x1x16xf32>
    %124 = vector.extract_strided_slice %116 {offsets = [0, 5, 0], sizes = [4, 1, 16], strides = [1, 1, 1]} : vector<4x8x16xf32> to vector<4x1x16xf32>
    %125 = arith.maximumf %123, %124 : vector<4x1x16xf32>
    %126 = vector.extract_strided_slice %116 {offsets = [0, 6, 0], sizes = [4, 1, 16], strides = [1, 1, 1]} : vector<4x8x16xf32> to vector<4x1x16xf32>
    %127 = vector.extract_strided_slice %116 {offsets = [0, 7, 0], sizes = [4, 1, 16], strides = [1, 1, 1]} : vector<4x8x16xf32> to vector<4x1x16xf32>
    %128 = arith.maximumf %126, %127 : vector<4x1x16xf32>
    %129 = tpu.concatenate %119, %122, %125, %128 in 1 : vector<4x1x16xf32>, vector<4x1x16xf32>, vector<4x1x16xf32>, vector<4x1x16xf32> -> vector<4x4x16xf32>
    %130 = arith.truncf %129 : vector<4x4x16xf32> to vector<4x4x16xbf16>
    %c0_53 = arith.constant 0 : index
    %c0_54 = arith.constant 0 : index
    %c0_55 = arith.constant 0 : index
    %c0_56 = arith.constant 0 : index
    %131 = vector.load %arg6[%c0_53, %c0_54, %c0_55, %c0_56] : memref<1x4x4x16xbf16, #tpu.memory_space<vmem>>, vector<1x4x4x16xbf16>
    %132 = vector.shape_cast %131 : vector<1x4x4x16xbf16> to vector<4x4x16xbf16>
    %133 = vector.shape_cast %130 : vector<4x4x16xbf16> to vector<1x4x4x16xbf16>
    tpu.vector_store %arg6[%c0_53, %c0_54, %c0_55, %c0_56], %133 {strides = array<i32>} : memref<1x4x4x16xbf16, #tpu.memory_space<vmem>>, vector<1x4x4x16xbf16>,
    return
  }
  func.func @transform_0(%arg0: i32) -> (i32, i32, i32) {
    %c0_i32 = arith.constant 0 : i32
    %c0_i32_0 = arith.constant 0 : i32
    %c0_i32_1 = arith.constant 0 : i32
    return %arg0, %c0_i32, %c0_i32_0 : i32, i32, i32
  }
  func.func @transform_1(%arg0: i32) -> (i32, i32) {
    %c0_i32 = arith.constant 0 : i32
    %c0_i32_0 = arith.constant 0 : i32
    %c0_i32_1 = arith.constant 0 : i32
    return %c0_i32, %c0_i32_0 : i32, i32
  }
  func.func @transform_2(%arg0: i32) -> (i32, i32) {
    %c0_i32 = arith.constant 0 : i32
    %c0_i32_0 = arith.constant 0 : i32
    %c0_i32_1 = arith.constant 0 : i32
    return %c0_i32, %c0_i32_0 : i32, i32
  }
  func.func @transform_3(%arg0: i32) -> (i32, i32) {
    %c0_i32 = arith.constant 0 : i32
    %c0_i32_0 = arith.constant 0 : i32
    %c0_i32_1 = arith.constant 0 : i32
    return %c0_i32, %c0_i32_0 : i32, i32
  }
  func.func @transform_4(%arg0: i32) -> (i32, i32) {
    %c0_i32 = arith.constant 0 : i32
    %c0_i32_0 = arith.constant 0 : i32
    %c0_i32_1 = arith.constant 0 : i32
    return %c0_i32, %c0_i32_0 : i32, i32
  }
  func.func @transform_5(%arg0: i32) -> (i32, i32, i32, i32) {
    %c0_i32 = arith.constant 0 : i32
    %c0_i32_0 = arith.constant 0 : i32
    %c0_i32_1 = arith.constant 0 : i32
    %c0_i32_2 = arith.constant 0 : i32
    return %arg0, %c0_i32, %c0_i32_0, %c0_i32_1 : i32, i32, i32, i32
  }
}

module attributes {stable_mosaic.version = 11 : i64} {
  func.func @_block_kernel(%arg0: i32, %arg1: memref<1x16x16xbf16, #tpu.memory_space<vmem>>, %arg2: memref<16x16xbf16, #tpu.memory_space<vmem>>, %arg3: memref<12x16xf32, #tpu.memory_space<vmem>>, %arg4: memref<16x32xbf16, #tpu.memory_space<vmem>>, %arg5: memref<12x32xf32, #tpu.memory_space<vmem>>, %arg6: memref<1x4x4x32xbf16, #tpu.memory_space<vmem>>, %arg7: memref<1x2x2x32xbf16, #tpu.memory_space<vmem>>, %arg8: memref<6x6x16xf32, #tpu.memory_space<vmem>>, %arg9: memref<6x6x32xf32, #tpu.memory_space<vmem>>) attributes {dimension_semantics = [#tpu.dimension_semantics<parallel>], iteration_bounds = array<i64: 2>, scalar_prefetch = 0 : i64, scratch_operands = 2 : i64, tpu.core_type = #tpu.core_type<tc>, window_params = [{transform_indices = @transform_0, window_bounds = array<i64: 1, 16, 16>}, {pipeline_mode = #tpu.pipeline_mode<synchronous>, transform_indices = @transform_1, window_bounds = array<i64: 16, 16>}, {pipeline_mode = #tpu.pipeline_mode<synchronous>, transform_indices = @transform_2, window_bounds = array<i64: 12, 16>}, {pipeline_mode = #tpu.pipeline_mode<synchronous>, transform_indices = @transform_3, window_bounds = array<i64: 16, 32>}, {pipeline_mode = #tpu.pipeline_mode<synchronous>, transform_indices = @transform_4, window_bounds = array<i64: 12, 32>}, {transform_indices = @transform_5, window_bounds = array<i64: 1, 4, 4, 32>}, {transform_indices = @transform_6, window_bounds = array<i64: 1, 2, 2, 32>}]} {
    %c0 = arith.constant 0 : index
    %c0_0 = arith.constant 0 : index
    %c0_1 = arith.constant 0 : index
    %0 = vector.load %arg1[%c0, %c0_0, %c0_1] : memref<1x16x16xbf16, #tpu.memory_space<vmem>>, vector<1x16x16xbf16>
    %1 = vector.shape_cast %0 : vector<1x16x16xbf16> to vector<16x16xbf16>
    %c0_2 = arith.constant 0 : index
    %c0_3 = arith.constant 0 : index
    %2 = vector.load %arg2[%c0_2, %c0_3] : memref<16x16xbf16, #tpu.memory_space<vmem>>, vector<16x16xbf16>
    %cst = arith.constant dense<0.000000e+00> : vector<16x16xf32>
    %3 = tpu.matmul %1, %2, %cst {dimension_numbers = #tpu.dot_dimension_numbers<[1], [0], [0], [1], [0, 0, 1, 1], [], []>} : vector<16x16xbf16>, vector<16x16xbf16>, vector<16x16xf32> -> vector<16x16xf32>
    %c9 = arith.constant 9 : index
    %c0_4 = arith.constant 0 : index
    %4 = vector.load %arg3[%c9, %c0_4] : memref<12x16xf32, #tpu.memory_space<vmem>>, vector<1x16xf32>
    %5 = vector.shape_cast %4 : vector<1x16xf32> to vector<16xf32>
    %6 = vector.shape_cast %5 : vector<16xf32> to vector<1x16xf32>
    %7 = vector.broadcast %6 : vector<1x16xf32> to vector<16x16xf32>
    %8 = arith.addf %3, %7 : vector<16x16xf32>
    %cst_5 = arith.constant 0.000000e+00 : f32
    %9 = vector.broadcast %cst_5 : f32 to vector<1x6x16xf32>
    %cst_6 = arith.constant 0.000000e+00 : f32
    %10 = vector.broadcast %cst_6 : f32 to vector<6x1x16xf32>
    %c0_7 = arith.constant 0 : index
    %c0_8 = arith.constant 0 : index
    %c0_9 = arith.constant 0 : index
    %11 = vector.load %arg8[%c0_7, %c0_8, %c0_9] : memref<6x6x16xf32, #tpu.memory_space<vmem>>, vector<1x6x16xf32>
    tpu.vector_store %arg8[%c0_7, %c0_8, %c0_9], %9 {strides = array<i32>} : memref<6x6x16xf32, #tpu.memory_space<vmem>>, vector<1x6x16xf32>,
    %c5 = arith.constant 5 : index
    %c0_10 = arith.constant 0 : index
    %c0_11 = arith.constant 0 : index
    %12 = vector.load %arg8[%c5, %c0_10, %c0_11] : memref<6x6x16xf32, #tpu.memory_space<vmem>>, vector<1x6x16xf32>
    tpu.vector_store %arg8[%c5, %c0_10, %c0_11], %9 {strides = array<i32>} : memref<6x6x16xf32, #tpu.memory_space<vmem>>, vector<1x6x16xf32>,
    %c0_12 = arith.constant 0 : index
    %c0_13 = arith.constant 0 : index
    %c0_14 = arith.constant 0 : index
    %13 = vector.load %arg8[%c0_12, %c0_13, %c0_14] : memref<6x6x16xf32, #tpu.memory_space<vmem>>, vector<6x1x16xf32>
    tpu.vector_store %arg8[%c0_12, %c0_13, %c0_14], %10 {strides = array<i32>} : memref<6x6x16xf32, #tpu.memory_space<vmem>>, vector<6x1x16xf32>,
    %c0_15 = arith.constant 0 : index
    %c5_16 = arith.constant 5 : index
    %c0_17 = arith.constant 0 : index
    %14 = vector.load %arg8[%c0_15, %c5_16, %c0_17] : memref<6x6x16xf32, #tpu.memory_space<vmem>>, vector<6x1x16xf32>
    tpu.vector_store %arg8[%c0_15, %c5_16, %c0_17], %10 {strides = array<i32>} : memref<6x6x16xf32, #tpu.memory_space<vmem>>, vector<6x1x16xf32>,
    %15 = vector.extract_strided_slice %8 {offsets = [0, 0], sizes = [4, 16], strides = [1, 1]} : vector<16x16xf32> to vector<4x16xf32>
    %c1 = arith.constant 1 : index
    %c1_18 = arith.constant 1 : index
    %c0_19 = arith.constant 0 : index
    %16 = vector.load %arg8[%c1, %c1_18, %c0_19] : memref<6x6x16xf32, #tpu.memory_space<vmem>>, vector<1x4x16xf32>
    %17 = vector.shape_cast %16 : vector<1x4x16xf32> to vector<4x16xf32>
    %18 = vector.shape_cast %15 : vector<4x16xf32> to vector<1x4x16xf32>
    tpu.vector_store %arg8[%c1, %c1_18, %c0_19], %18 {strides = array<i32>} : memref<6x6x16xf32, #tpu.memory_space<vmem>>, vector<1x4x16xf32>,
    %19 = vector.extract_strided_slice %8 {offsets = [4, 0], sizes = [4, 16], strides = [1, 1]} : vector<16x16xf32> to vector<4x16xf32>
    %c2 = arith.constant 2 : index
    %c1_20 = arith.constant 1 : index
    %c0_21 = arith.constant 0 : index
    %20 = vector.load %arg8[%c2, %c1_20, %c0_21] : memref<6x6x16xf32, #tpu.memory_space<vmem>>, vector<1x4x16xf32>
    %21 = vector.shape_cast %20 : vector<1x4x16xf32> to vector<4x16xf32>
    %22 = vector.shape_cast %19 : vector<4x16xf32> to vector<1x4x16xf32>
    tpu.vector_store %arg8[%c2, %c1_20, %c0_21], %22 {strides = array<i32>} : memref<6x6x16xf32, #tpu.memory_space<vmem>>, vector<1x4x16xf32>,
    %23 = vector.extract_strided_slice %8 {offsets = [8, 0], sizes = [4, 16], strides = [1, 1]} : vector<16x16xf32> to vector<4x16xf32>
    %c3 = arith.constant 3 : index
    %c1_22 = arith.constant 1 : index
    %c0_23 = arith.constant 0 : index
    %24 = vector.load %arg8[%c3, %c1_22, %c0_23] : memref<6x6x16xf32, #tpu.memory_space<vmem>>, vector<1x4x16xf32>
    %25 = vector.shape_cast %24 : vector<1x4x16xf32> to vector<4x16xf32>
    %26 = vector.shape_cast %23 : vector<4x16xf32> to vector<1x4x16xf32>
    tpu.vector_store %arg8[%c3, %c1_22, %c0_23], %26 {strides = array<i32>} : memref<6x6x16xf32, #tpu.memory_space<vmem>>, vector<1x4x16xf32>,
    %27 = vector.extract_strided_slice %8 {offsets = [12, 0], sizes = [4, 16], strides = [1, 1]} : vector<16x16xf32> to vector<4x16xf32>
    %c4 = arith.constant 4 : index
    %c1_24 = arith.constant 1 : index
    %c0_25 = arith.constant 0 : index
    %28 = vector.load %arg8[%c4, %c1_24, %c0_25] : memref<6x6x16xf32, #tpu.memory_space<vmem>>, vector<1x4x16xf32>
    %29 = vector.shape_cast %28 : vector<1x4x16xf32> to vector<4x16xf32>
    %30 = vector.shape_cast %27 : vector<4x16xf32> to vector<1x4x16xf32>
    tpu.vector_store %arg8[%c4, %c1_24, %c0_25], %30 {strides = array<i32>} : memref<6x6x16xf32, #tpu.memory_space<vmem>>, vector<1x4x16xf32>,
    %cst_26 = arith.constant 0.000000e+00 : f32
    %31 = vector.broadcast %cst_26 : f32 to vector<4x4x16xf32>
    %c0_27 = arith.constant 0 : index
    %c0_28 = arith.constant 0 : index
    %c0_29 = arith.constant 0 : index
    %32 = vector.load %arg8[%c0_27, %c0_28, %c0_29] : memref<6x6x16xf32, #tpu.memory_space<vmem>>, vector<6x4x16xf32>
    %33 = vector.extract_strided_slice %32 {offsets = [0, 0, 0], sizes = [4, 4, 16], strides = [1, 1, 1]} : vector<6x4x16xf32> to vector<4x4x16xf32>
    %c0_30 = arith.constant 0 : index
    %c0_31 = arith.constant 0 : index
    %34 = vector.load %arg3[%c0_30, %c0_31] : memref<12x16xf32, #tpu.memory_space<vmem>>, vector<1x16xf32>
    %35 = vector.shape_cast %34 : vector<1x16xf32> to vector<16xf32>
    %36 = vector.shape_cast %35 : vector<16xf32> to vector<1x1x16xf32>
    %37 = vector.broadcast %36 : vector<1x1x16xf32> to vector<4x4x16xf32>
    %38 = arith.mulf %33, %37 : vector<4x4x16xf32>
    %39 = arith.addf %31, %38 : vector<4x4x16xf32>
    %40 = vector.extract_strided_slice %32 {offsets = [1, 0, 0], sizes = [4, 4, 16], strides = [1, 1, 1]} : vector<6x4x16xf32> to vector<4x4x16xf32>
    %c3_32 = arith.constant 3 : index
    %c0_33 = arith.constant 0 : index
    %41 = vector.load %arg3[%c3_32, %c0_33] : memref<12x16xf32, #tpu.memory_space<vmem>>, vector<1x16xf32>
    %42 = vector.shape_cast %41 : vector<1x16xf32> to vector<16xf32>
    %43 = vector.shape_cast %42 : vector<16xf32> to vector<1x1x16xf32>
    %44 = vector.broadcast %43 : vector<1x1x16xf32> to vector<4x4x16xf32>
    %45 = arith.mulf %40, %44 : vector<4x4x16xf32>
    %46 = arith.addf %39, %45 : vector<4x4x16xf32>
    %47 = vector.extract_strided_slice %32 {offsets = [2, 0, 0], sizes = [4, 4, 16], strides = [1, 1, 1]} : vector<6x4x16xf32> to vector<4x4x16xf32>
    %c6 = arith.constant 6 : index
    %c0_34 = arith.constant 0 : index
    %48 = vector.load %arg3[%c6, %c0_34] : memref<12x16xf32, #tpu.memory_space<vmem>>, vector<1x16xf32>
    %49 = vector.shape_cast %48 : vector<1x16xf32> to vector<16xf32>
    %50 = vector.shape_cast %49 : vector<16xf32> to vector<1x1x16xf32>
    %51 = vector.broadcast %50 : vector<1x1x16xf32> to vector<4x4x16xf32>
    %52 = arith.mulf %47, %51 : vector<4x4x16xf32>
    %53 = arith.addf %46, %52 : vector<4x4x16xf32>
    %c0_35 = arith.constant 0 : index
    %c1_36 = arith.constant 1 : index
    %c0_37 = arith.constant 0 : index
    %54 = vector.load %arg8[%c0_35, %c1_36, %c0_37] : memref<6x6x16xf32, #tpu.memory_space<vmem>>, vector<6x4x16xf32>
    %55 = vector.extract_strided_slice %54 {offsets = [0, 0, 0], sizes = [4, 4, 16], strides = [1, 1, 1]} : vector<6x4x16xf32> to vector<4x4x16xf32>
    %c1_38 = arith.constant 1 : index
    %c0_39 = arith.constant 0 : index
    %56 = vector.load %arg3[%c1_38, %c0_39] : memref<12x16xf32, #tpu.memory_space<vmem>>, vector<1x16xf32>
    %57 = vector.shape_cast %56 : vector<1x16xf32> to vector<16xf32>
    %58 = vector.shape_cast %57 : vector<16xf32> to vector<1x1x16xf32>
    %59 = vector.broadcast %58 : vector<1x1x16xf32> to vector<4x4x16xf32>
    %60 = arith.mulf %55, %59 : vector<4x4x16xf32>
    %61 = arith.addf %53, %60 : vector<4x4x16xf32>
    %62 = vector.extract_strided_slice %54 {offsets = [1, 0, 0], sizes = [4, 4, 16], strides = [1, 1, 1]} : vector<6x4x16xf32> to vector<4x4x16xf32>
    %c4_40 = arith.constant 4 : index
    %c0_41 = arith.constant 0 : index
    %63 = vector.load %arg3[%c4_40, %c0_41] : memref<12x16xf32, #tpu.memory_space<vmem>>, vector<1x16xf32>
    %64 = vector.shape_cast %63 : vector<1x16xf32> to vector<16xf32>
    %65 = vector.shape_cast %64 : vector<16xf32> to vector<1x1x16xf32>
    %66 = vector.broadcast %65 : vector<1x1x16xf32> to vector<4x4x16xf32>
    %67 = arith.mulf %62, %66 : vector<4x4x16xf32>
    %68 = arith.addf %61, %67 : vector<4x4x16xf32>
    %69 = vector.extract_strided_slice %54 {offsets = [2, 0, 0], sizes = [4, 4, 16], strides = [1, 1, 1]} : vector<6x4x16xf32> to vector<4x4x16xf32>
    %c7 = arith.constant 7 : index
    %c0_42 = arith.constant 0 : index
    %70 = vector.load %arg3[%c7, %c0_42] : memref<12x16xf32, #tpu.memory_space<vmem>>, vector<1x16xf32>
    %71 = vector.shape_cast %70 : vector<1x16xf32> to vector<16xf32>
    %72 = vector.shape_cast %71 : vector<16xf32> to vector<1x1x16xf32>
    %73 = vector.broadcast %72 : vector<1x1x16xf32> to vector<4x4x16xf32>
    %74 = arith.mulf %69, %73 : vector<4x4x16xf32>
    %75 = arith.addf %68, %74 : vector<4x4x16xf32>
    %c0_43 = arith.constant 0 : index
    %c2_44 = arith.constant 2 : index
    %c0_45 = arith.constant 0 : index
    %76 = vector.load %arg8[%c0_43, %c2_44, %c0_45] : memref<6x6x16xf32, #tpu.memory_space<vmem>>, vector<6x4x16xf32>
    %77 = vector.extract_strided_slice %76 {offsets = [0, 0, 0], sizes = [4, 4, 16], strides = [1, 1, 1]} : vector<6x4x16xf32> to vector<4x4x16xf32>
    %c2_46 = arith.constant 2 : index
    %c0_47 = arith.constant 0 : index
    %78 = vector.load %arg3[%c2_46, %c0_47] : memref<12x16xf32, #tpu.memory_space<vmem>>, vector<1x16xf32>
    %79 = vector.shape_cast %78 : vector<1x16xf32> to vector<16xf32>
    %80 = vector.shape_cast %79 : vector<16xf32> to vector<1x1x16xf32>
    %81 = vector.broadcast %80 : vector<1x1x16xf32> to vector<4x4x16xf32>
    %82 = arith.mulf %77, %81 : vector<4x4x16xf32>
    %83 = arith.addf %75, %82 : vector<4x4x16xf32>
    %84 = vector.extract_strided_slice %76 {offsets = [1, 0, 0], sizes = [4, 4, 16], strides = [1, 1, 1]} : vector<6x4x16xf32> to vector<4x4x16xf32>
    %c5_48 = arith.constant 5 : index
    %c0_49 = arith.constant 0 : index
    %85 = vector.load %arg3[%c5_48, %c0_49] : memref<12x16xf32, #tpu.memory_space<vmem>>, vector<1x16xf32>
    %86 = vector.shape_cast %85 : vector<1x16xf32> to vector<16xf32>
    %87 = vector.shape_cast %86 : vector<16xf32> to vector<1x1x16xf32>
    %88 = vector.broadcast %87 : vector<1x1x16xf32> to vector<4x4x16xf32>
    %89 = arith.mulf %84, %88 : vector<4x4x16xf32>
    %90 = arith.addf %83, %89 : vector<4x4x16xf32>
    %91 = vector.extract_strided_slice %76 {offsets = [2, 0, 0], sizes = [4, 4, 16], strides = [1, 1, 1]} : vector<6x4x16xf32> to vector<4x4x16xf32>
    %c8 = arith.constant 8 : index
    %c0_50 = arith.constant 0 : index
    %92 = vector.load %arg3[%c8, %c0_50] : memref<12x16xf32, #tpu.memory_space<vmem>>, vector<1x16xf32>
    %93 = vector.shape_cast %92 : vector<1x16xf32> to vector<16xf32>
    %94 = vector.shape_cast %93 : vector<16xf32> to vector<1x1x16xf32>
    %95 = vector.broadcast %94 : vector<1x1x16xf32> to vector<4x4x16xf32>
    %96 = arith.mulf %91, %95 : vector<4x4x16xf32>
    %97 = arith.addf %90, %96 : vector<4x4x16xf32>
    %c10 = arith.constant 10 : index
    %c0_51 = arith.constant 0 : index
    %98 = vector.load %arg3[%c10, %c0_51] : memref<12x16xf32, #tpu.memory_space<vmem>>, vector<1x16xf32>
    %99 = vector.shape_cast %98 : vector<1x16xf32> to vector<16xf32>
    %100 = vector.shape_cast %99 : vector<16xf32> to vector<1x1x16xf32>
    %101 = vector.broadcast %100 : vector<1x1x16xf32> to vector<4x4x16xf32>
    %102 = arith.mulf %97, %101 : vector<4x4x16xf32>
    %c11 = arith.constant 11 : index
    %c0_52 = arith.constant 0 : index
    %103 = vector.load %arg3[%c11, %c0_52] : memref<12x16xf32, #tpu.memory_space<vmem>>, vector<1x16xf32>
    %104 = vector.shape_cast %103 : vector<1x16xf32> to vector<16xf32>
    %105 = vector.shape_cast %104 : vector<16xf32> to vector<1x1x16xf32>
    %106 = vector.broadcast %105 : vector<1x1x16xf32> to vector<4x4x16xf32>
    %107 = arith.addf %102, %106 : vector<4x4x16xf32>
    %cst_53 = arith.constant 0.000000e+00 : f32
    %108 = vector.broadcast %cst_53 : f32 to vector<4x4x16xf32>
    %109 = arith.maximumf %107, %108 : vector<4x4x16xf32>
    %110 = vector.extract_strided_slice %109 {offsets = [0, 0, 0], sizes = [1, 4, 16], strides = [1, 1, 1]} : vector<4x4x16xf32> to vector<1x4x16xf32>
    %111 = vector.shape_cast %110 : vector<1x4x16xf32> to vector<4x16xf32>
    %112 = vector.extract_strided_slice %109 {offsets = [1, 0, 0], sizes = [1, 4, 16], strides = [1, 1, 1]} : vector<4x4x16xf32> to vector<1x4x16xf32>
    %113 = vector.shape_cast %112 : vector<1x4x16xf32> to vector<4x16xf32>
    %114 = vector.extract_strided_slice %109 {offsets = [2, 0, 0], sizes = [1, 4, 16], strides = [1, 1, 1]} : vector<4x4x16xf32> to vector<1x4x16xf32>
    %115 = vector.shape_cast %114 : vector<1x4x16xf32> to vector<4x16xf32>
    %116 = vector.extract_strided_slice %109 {offsets = [3, 0, 0], sizes = [1, 4, 16], strides = [1, 1, 1]} : vector<4x4x16xf32> to vector<1x4x16xf32>
    %117 = vector.shape_cast %116 : vector<1x4x16xf32> to vector<4x16xf32>
    %118 = tpu.concatenate %111, %113, %115, %117 in 0 : vector<4x16xf32>, vector<4x16xf32>, vector<4x16xf32>, vector<4x16xf32> -> vector<16x16xf32>
    %119 = arith.truncf %118 : vector<16x16xf32> to vector<16x16xbf16>
    %c0_54 = arith.constant 0 : index
    %c0_55 = arith.constant 0 : index
    %120 = vector.load %arg4[%c0_54, %c0_55] : memref<16x32xbf16, #tpu.memory_space<vmem>>, vector<16x32xbf16>
    %cst_56 = arith.constant dense<0.000000e+00> : vector<16x32xf32>
    %121 = tpu.matmul %119, %120, %cst_56 {dimension_numbers = #tpu.dot_dimension_numbers<[1], [0], [0], [1], [0, 0, 1, 1], [], []>} : vector<16x16xbf16>, vector<16x32xbf16>, vector<16x32xf32> -> vector<16x32xf32>
    %c9_57 = arith.constant 9 : index
    %c0_58 = arith.constant 0 : index
    %122 = vector.load %arg5[%c9_57, %c0_58] : memref<12x32xf32, #tpu.memory_space<vmem>>, vector<1x32xf32>
    %123 = vector.shape_cast %122 : vector<1x32xf32> to vector<32xf32>
    %124 = vector.shape_cast %123 : vector<32xf32> to vector<1x32xf32>
    %125 = vector.broadcast %124 : vector<1x32xf32> to vector<16x32xf32>
    %126 = arith.addf %121, %125 : vector<16x32xf32>
    %cst_59 = arith.constant 0.000000e+00 : f32
    %127 = vector.broadcast %cst_59 : f32 to vector<1x6x32xf32>
    %cst_60 = arith.constant 0.000000e+00 : f32
    %128 = vector.broadcast %cst_60 : f32 to vector<6x1x32xf32>
    %c0_61 = arith.constant 0 : index
    %c0_62 = arith.constant 0 : index
    %c0_63 = arith.constant 0 : index
    %129 = vector.load %arg9[%c0_61, %c0_62, %c0_63] : memref<6x6x32xf32, #tpu.memory_space<vmem>>, vector<1x6x32xf32>
    tpu.vector_store %arg9[%c0_61, %c0_62, %c0_63], %127 {strides = array<i32>} : memref<6x6x32xf32, #tpu.memory_space<vmem>>, vector<1x6x32xf32>,
    %c5_64 = arith.constant 5 : index
    %c0_65 = arith.constant 0 : index
    %c0_66 = arith.constant 0 : index
    %130 = vector.load %arg9[%c5_64, %c0_65, %c0_66] : memref<6x6x32xf32, #tpu.memory_space<vmem>>, vector<1x6x32xf32>
    tpu.vector_store %arg9[%c5_64, %c0_65, %c0_66], %127 {strides = array<i32>} : memref<6x6x32xf32, #tpu.memory_space<vmem>>, vector<1x6x32xf32>,
    %c0_67 = arith.constant 0 : index
    %c0_68 = arith.constant 0 : index
    %c0_69 = arith.constant 0 : index
    %131 = vector.load %arg9[%c0_67, %c0_68, %c0_69] : memref<6x6x32xf32, #tpu.memory_space<vmem>>, vector<6x1x32xf32>
    tpu.vector_store %arg9[%c0_67, %c0_68, %c0_69], %128 {strides = array<i32>} : memref<6x6x32xf32, #tpu.memory_space<vmem>>, vector<6x1x32xf32>,
    %c0_70 = arith.constant 0 : index
    %c5_71 = arith.constant 5 : index
    %c0_72 = arith.constant 0 : index
    %132 = vector.load %arg9[%c0_70, %c5_71, %c0_72] : memref<6x6x32xf32, #tpu.memory_space<vmem>>, vector<6x1x32xf32>
    tpu.vector_store %arg9[%c0_70, %c5_71, %c0_72], %128 {strides = array<i32>} : memref<6x6x32xf32, #tpu.memory_space<vmem>>, vector<6x1x32xf32>,
    %133 = vector.extract_strided_slice %126 {offsets = [0, 0], sizes = [4, 32], strides = [1, 1]} : vector<16x32xf32> to vector<4x32xf32>
    %c1_73 = arith.constant 1 : index
    %c1_74 = arith.constant 1 : index
    %c0_75 = arith.constant 0 : index
    %134 = vector.load %arg9[%c1_73, %c1_74, %c0_75] : memref<6x6x32xf32, #tpu.memory_space<vmem>>, vector<1x4x32xf32>
    %135 = vector.shape_cast %134 : vector<1x4x32xf32> to vector<4x32xf32>
    %136 = vector.shape_cast %133 : vector<4x32xf32> to vector<1x4x32xf32>
    tpu.vector_store %arg9[%c1_73, %c1_74, %c0_75], %136 {strides = array<i32>} : memref<6x6x32xf32, #tpu.memory_space<vmem>>, vector<1x4x32xf32>,
    %137 = vector.extract_strided_slice %126 {offsets = [4, 0], sizes = [4, 32], strides = [1, 1]} : vector<16x32xf32> to vector<4x32xf32>
    %c2_76 = arith.constant 2 : index
    %c1_77 = arith.constant 1 : index
    %c0_78 = arith.constant 0 : index
    %138 = vector.load %arg9[%c2_76, %c1_77, %c0_78] : memref<6x6x32xf32, #tpu.memory_space<vmem>>, vector<1x4x32xf32>
    %139 = vector.shape_cast %138 : vector<1x4x32xf32> to vector<4x32xf32>
    %140 = vector.shape_cast %137 : vector<4x32xf32> to vector<1x4x32xf32>
    tpu.vector_store %arg9[%c2_76, %c1_77, %c0_78], %140 {strides = array<i32>} : memref<6x6x32xf32, #tpu.memory_space<vmem>>, vector<1x4x32xf32>,
    %141 = vector.extract_strided_slice %126 {offsets = [8, 0], sizes = [4, 32], strides = [1, 1]} : vector<16x32xf32> to vector<4x32xf32>
    %c3_79 = arith.constant 3 : index
    %c1_80 = arith.constant 1 : index
    %c0_81 = arith.constant 0 : index
    %142 = vector.load %arg9[%c3_79, %c1_80, %c0_81] : memref<6x6x32xf32, #tpu.memory_space<vmem>>, vector<1x4x32xf32>
    %143 = vector.shape_cast %142 : vector<1x4x32xf32> to vector<4x32xf32>
    %144 = vector.shape_cast %141 : vector<4x32xf32> to vector<1x4x32xf32>
    tpu.vector_store %arg9[%c3_79, %c1_80, %c0_81], %144 {strides = array<i32>} : memref<6x6x32xf32, #tpu.memory_space<vmem>>, vector<1x4x32xf32>,
    %145 = vector.extract_strided_slice %126 {offsets = [12, 0], sizes = [4, 32], strides = [1, 1]} : vector<16x32xf32> to vector<4x32xf32>
    %c4_82 = arith.constant 4 : index
    %c1_83 = arith.constant 1 : index
    %c0_84 = arith.constant 0 : index
    %146 = vector.load %arg9[%c4_82, %c1_83, %c0_84] : memref<6x6x32xf32, #tpu.memory_space<vmem>>, vector<1x4x32xf32>
    %147 = vector.shape_cast %146 : vector<1x4x32xf32> to vector<4x32xf32>
    %148 = vector.shape_cast %145 : vector<4x32xf32> to vector<1x4x32xf32>
    tpu.vector_store %arg9[%c4_82, %c1_83, %c0_84], %148 {strides = array<i32>} : memref<6x6x32xf32, #tpu.memory_space<vmem>>, vector<1x4x32xf32>,
    %cst_85 = arith.constant 0.000000e+00 : f32
    %149 = vector.broadcast %cst_85 : f32 to vector<4x4x32xf32>
    %c0_86 = arith.constant 0 : index
    %c0_87 = arith.constant 0 : index
    %c0_88 = arith.constant 0 : index
    %150 = vector.load %arg9[%c0_86, %c0_87, %c0_88] : memref<6x6x32xf32, #tpu.memory_space<vmem>>, vector<6x4x32xf32>
    %151 = vector.extract_strided_slice %150 {offsets = [0, 0, 0], sizes = [4, 4, 32], strides = [1, 1, 1]} : vector<6x4x32xf32> to vector<4x4x32xf32>
    %c0_89 = arith.constant 0 : index
    %c0_90 = arith.constant 0 : index
    %152 = vector.load %arg5[%c0_89, %c0_90] : memref<12x32xf32, #tpu.memory_space<vmem>>, vector<1x32xf32>
    %153 = vector.shape_cast %152 : vector<1x32xf32> to vector<32xf32>
    %154 = vector.shape_cast %153 : vector<32xf32> to vector<1x1x32xf32>
    %155 = vector.broadcast %154 : vector<1x1x32xf32> to vector<4x4x32xf32>
    %156 = arith.mulf %151, %155 : vector<4x4x32xf32>
    %157 = arith.addf %149, %156 : vector<4x4x32xf32>
    %158 = vector.extract_strided_slice %150 {offsets = [1, 0, 0], sizes = [4, 4, 32], strides = [1, 1, 1]} : vector<6x4x32xf32> to vector<4x4x32xf32>
    %c3_91 = arith.constant 3 : index
    %c0_92 = arith.constant 0 : index
    %159 = vector.load %arg5[%c3_91, %c0_92] : memref<12x32xf32, #tpu.memory_space<vmem>>, vector<1x32xf32>
    %160 = vector.shape_cast %159 : vector<1x32xf32> to vector<32xf32>
    %161 = vector.shape_cast %160 : vector<32xf32> to vector<1x1x32xf32>
    %162 = vector.broadcast %161 : vector<1x1x32xf32> to vector<4x4x32xf32>
    %163 = arith.mulf %158, %162 : vector<4x4x32xf32>
    %164 = arith.addf %157, %163 : vector<4x4x32xf32>
    %165 = vector.extract_strided_slice %150 {offsets = [2, 0, 0], sizes = [4, 4, 32], strides = [1, 1, 1]} : vector<6x4x32xf32> to vector<4x4x32xf32>
    %c6_93 = arith.constant 6 : index
    %c0_94 = arith.constant 0 : index
    %166 = vector.load %arg5[%c6_93, %c0_94] : memref<12x32xf32, #tpu.memory_space<vmem>>, vector<1x32xf32>
    %167 = vector.shape_cast %166 : vector<1x32xf32> to vector<32xf32>
    %168 = vector.shape_cast %167 : vector<32xf32> to vector<1x1x32xf32>
    %169 = vector.broadcast %168 : vector<1x1x32xf32> to vector<4x4x32xf32>
    %170 = arith.mulf %165, %169 : vector<4x4x32xf32>
    %171 = arith.addf %164, %170 : vector<4x4x32xf32>
    %c0_95 = arith.constant 0 : index
    %c1_96 = arith.constant 1 : index
    %c0_97 = arith.constant 0 : index
    %172 = vector.load %arg9[%c0_95, %c1_96, %c0_97] : memref<6x6x32xf32, #tpu.memory_space<vmem>>, vector<6x4x32xf32>
    %173 = vector.extract_strided_slice %172 {offsets = [0, 0, 0], sizes = [4, 4, 32], strides = [1, 1, 1]} : vector<6x4x32xf32> to vector<4x4x32xf32>
    %c1_98 = arith.constant 1 : index
    %c0_99 = arith.constant 0 : index
    %174 = vector.load %arg5[%c1_98, %c0_99] : memref<12x32xf32, #tpu.memory_space<vmem>>, vector<1x32xf32>
    %175 = vector.shape_cast %174 : vector<1x32xf32> to vector<32xf32>
    %176 = vector.shape_cast %175 : vector<32xf32> to vector<1x1x32xf32>
    %177 = vector.broadcast %176 : vector<1x1x32xf32> to vector<4x4x32xf32>
    %178 = arith.mulf %173, %177 : vector<4x4x32xf32>
    %179 = arith.addf %171, %178 : vector<4x4x32xf32>
    %180 = vector.extract_strided_slice %172 {offsets = [1, 0, 0], sizes = [4, 4, 32], strides = [1, 1, 1]} : vector<6x4x32xf32> to vector<4x4x32xf32>
    %c4_100 = arith.constant 4 : index
    %c0_101 = arith.constant 0 : index
    %181 = vector.load %arg5[%c4_100, %c0_101] : memref<12x32xf32, #tpu.memory_space<vmem>>, vector<1x32xf32>
    %182 = vector.shape_cast %181 : vector<1x32xf32> to vector<32xf32>
    %183 = vector.shape_cast %182 : vector<32xf32> to vector<1x1x32xf32>
    %184 = vector.broadcast %183 : vector<1x1x32xf32> to vector<4x4x32xf32>
    %185 = arith.mulf %180, %184 : vector<4x4x32xf32>
    %186 = arith.addf %179, %185 : vector<4x4x32xf32>
    %187 = vector.extract_strided_slice %172 {offsets = [2, 0, 0], sizes = [4, 4, 32], strides = [1, 1, 1]} : vector<6x4x32xf32> to vector<4x4x32xf32>
    %c7_102 = arith.constant 7 : index
    %c0_103 = arith.constant 0 : index
    %188 = vector.load %arg5[%c7_102, %c0_103] : memref<12x32xf32, #tpu.memory_space<vmem>>, vector<1x32xf32>
    %189 = vector.shape_cast %188 : vector<1x32xf32> to vector<32xf32>
    %190 = vector.shape_cast %189 : vector<32xf32> to vector<1x1x32xf32>
    %191 = vector.broadcast %190 : vector<1x1x32xf32> to vector<4x4x32xf32>
    %192 = arith.mulf %187, %191 : vector<4x4x32xf32>
    %193 = arith.addf %186, %192 : vector<4x4x32xf32>
    %c0_104 = arith.constant 0 : index
    %c2_105 = arith.constant 2 : index
    %c0_106 = arith.constant 0 : index
    %194 = vector.load %arg9[%c0_104, %c2_105, %c0_106] : memref<6x6x32xf32, #tpu.memory_space<vmem>>, vector<6x4x32xf32>
    %195 = vector.extract_strided_slice %194 {offsets = [0, 0, 0], sizes = [4, 4, 32], strides = [1, 1, 1]} : vector<6x4x32xf32> to vector<4x4x32xf32>
    %c2_107 = arith.constant 2 : index
    %c0_108 = arith.constant 0 : index
    %196 = vector.load %arg5[%c2_107, %c0_108] : memref<12x32xf32, #tpu.memory_space<vmem>>, vector<1x32xf32>
    %197 = vector.shape_cast %196 : vector<1x32xf32> to vector<32xf32>
    %198 = vector.shape_cast %197 : vector<32xf32> to vector<1x1x32xf32>
    %199 = vector.broadcast %198 : vector<1x1x32xf32> to vector<4x4x32xf32>
    %200 = arith.mulf %195, %199 : vector<4x4x32xf32>
    %201 = arith.addf %193, %200 : vector<4x4x32xf32>
    %202 = vector.extract_strided_slice %194 {offsets = [1, 0, 0], sizes = [4, 4, 32], strides = [1, 1, 1]} : vector<6x4x32xf32> to vector<4x4x32xf32>
    %c5_109 = arith.constant 5 : index
    %c0_110 = arith.constant 0 : index
    %203 = vector.load %arg5[%c5_109, %c0_110] : memref<12x32xf32, #tpu.memory_space<vmem>>, vector<1x32xf32>
    %204 = vector.shape_cast %203 : vector<1x32xf32> to vector<32xf32>
    %205 = vector.shape_cast %204 : vector<32xf32> to vector<1x1x32xf32>
    %206 = vector.broadcast %205 : vector<1x1x32xf32> to vector<4x4x32xf32>
    %207 = arith.mulf %202, %206 : vector<4x4x32xf32>
    %208 = arith.addf %201, %207 : vector<4x4x32xf32>
    %209 = vector.extract_strided_slice %194 {offsets = [2, 0, 0], sizes = [4, 4, 32], strides = [1, 1, 1]} : vector<6x4x32xf32> to vector<4x4x32xf32>
    %c8_111 = arith.constant 8 : index
    %c0_112 = arith.constant 0 : index
    %210 = vector.load %arg5[%c8_111, %c0_112] : memref<12x32xf32, #tpu.memory_space<vmem>>, vector<1x32xf32>
    %211 = vector.shape_cast %210 : vector<1x32xf32> to vector<32xf32>
    %212 = vector.shape_cast %211 : vector<32xf32> to vector<1x1x32xf32>
    %213 = vector.broadcast %212 : vector<1x1x32xf32> to vector<4x4x32xf32>
    %214 = arith.mulf %209, %213 : vector<4x4x32xf32>
    %215 = arith.addf %208, %214 : vector<4x4x32xf32>
    %c10_113 = arith.constant 10 : index
    %c0_114 = arith.constant 0 : index
    %216 = vector.load %arg5[%c10_113, %c0_114] : memref<12x32xf32, #tpu.memory_space<vmem>>, vector<1x32xf32>
    %217 = vector.shape_cast %216 : vector<1x32xf32> to vector<32xf32>
    %218 = vector.shape_cast %217 : vector<32xf32> to vector<1x1x32xf32>
    %219 = vector.broadcast %218 : vector<1x1x32xf32> to vector<4x4x32xf32>
    %220 = arith.mulf %215, %219 : vector<4x4x32xf32>
    %c11_115 = arith.constant 11 : index
    %c0_116 = arith.constant 0 : index
    %221 = vector.load %arg5[%c11_115, %c0_116] : memref<12x32xf32, #tpu.memory_space<vmem>>, vector<1x32xf32>
    %222 = vector.shape_cast %221 : vector<1x32xf32> to vector<32xf32>
    %223 = vector.shape_cast %222 : vector<32xf32> to vector<1x1x32xf32>
    %224 = vector.broadcast %223 : vector<1x1x32xf32> to vector<4x4x32xf32>
    %225 = arith.addf %220, %224 : vector<4x4x32xf32>
    %cst_117 = arith.constant 0.000000e+00 : f32
    %226 = vector.broadcast %cst_117 : f32 to vector<4x4x32xf32>
    %227 = arith.maximumf %225, %226 : vector<4x4x32xf32>
    %228 = arith.truncf %227 : vector<4x4x32xf32> to vector<4x4x32xbf16>
    %c0_118 = arith.constant 0 : index
    %c0_119 = arith.constant 0 : index
    %c0_120 = arith.constant 0 : index
    %c0_121 = arith.constant 0 : index
    %229 = vector.load %arg6[%c0_118, %c0_119, %c0_120, %c0_121] : memref<1x4x4x32xbf16, #tpu.memory_space<vmem>>, vector<1x4x4x32xbf16>
    %230 = vector.shape_cast %229 : vector<1x4x4x32xbf16> to vector<4x4x32xbf16>
    %231 = vector.shape_cast %228 : vector<4x4x32xbf16> to vector<1x4x4x32xbf16>
    tpu.vector_store %arg6[%c0_118, %c0_119, %c0_120, %c0_121], %231 {strides = array<i32>} : memref<1x4x4x32xbf16, #tpu.memory_space<vmem>>, vector<1x4x4x32xbf16>,
    %232 = vector.shape_cast %227 : vector<4x4x32xf32> to vector<2x2x4x32xf32>
    %233 = vector.extract_strided_slice %232 {offsets = [0, 0, 0, 0], sizes = [2, 1, 4, 32], strides = [1, 1, 1, 1]} : vector<2x2x4x32xf32> to vector<2x1x4x32xf32>
    %234 = vector.shape_cast %233 : vector<2x1x4x32xf32> to vector<2x4x32xf32>
    %235 = vector.extract_strided_slice %232 {offsets = [0, 1, 0, 0], sizes = [2, 1, 4, 32], strides = [1, 1, 1, 1]} : vector<2x2x4x32xf32> to vector<2x1x4x32xf32>
    %236 = vector.shape_cast %235 : vector<2x1x4x32xf32> to vector<2x4x32xf32>
    %237 = arith.maximumf %234, %236 : vector<2x4x32xf32>
    %238 = vector.extract_strided_slice %237 {offsets = [0, 0, 0], sizes = [2, 1, 32], strides = [1, 1, 1]} : vector<2x4x32xf32> to vector<2x1x32xf32>
    %239 = vector.extract_strided_slice %237 {offsets = [0, 1, 0], sizes = [2, 1, 32], strides = [1, 1, 1]} : vector<2x4x32xf32> to vector<2x1x32xf32>
    %240 = arith.maximumf %238, %239 : vector<2x1x32xf32>
    %241 = vector.extract_strided_slice %237 {offsets = [0, 2, 0], sizes = [2, 1, 32], strides = [1, 1, 1]} : vector<2x4x32xf32> to vector<2x1x32xf32>
    %242 = vector.extract_strided_slice %237 {offsets = [0, 3, 0], sizes = [2, 1, 32], strides = [1, 1, 1]} : vector<2x4x32xf32> to vector<2x1x32xf32>
    %243 = arith.maximumf %241, %242 : vector<2x1x32xf32>
    %244 = tpu.concatenate %240, %243 in 1 : vector<2x1x32xf32>, vector<2x1x32xf32> -> vector<2x2x32xf32>
    %245 = arith.truncf %244 : vector<2x2x32xf32> to vector<2x2x32xbf16>
    %c0_122 = arith.constant 0 : index
    %c0_123 = arith.constant 0 : index
    %c0_124 = arith.constant 0 : index
    %c0_125 = arith.constant 0 : index
    %246 = vector.load %arg7[%c0_122, %c0_123, %c0_124, %c0_125] : memref<1x2x2x32xbf16, #tpu.memory_space<vmem>>, vector<1x2x2x32xbf16>
    %247 = vector.shape_cast %246 : vector<1x2x2x32xbf16> to vector<2x2x32xbf16>
    %248 = vector.shape_cast %245 : vector<2x2x32xbf16> to vector<1x2x2x32xbf16>
    tpu.vector_store %arg7[%c0_122, %c0_123, %c0_124, %c0_125], %248 {strides = array<i32>} : memref<1x2x2x32xbf16, #tpu.memory_space<vmem>>, vector<1x2x2x32xbf16>,
    return
  }
  func.func @transform_0(%arg0: i32) -> (i32, i32, i32) {
    %c0_i32 = arith.constant 0 : i32
    %c0_i32_0 = arith.constant 0 : i32
    %c0_i32_1 = arith.constant 0 : i32
    return %arg0, %c0_i32, %c0_i32_0 : i32, i32, i32
  }
  func.func @transform_1(%arg0: i32) -> (i32, i32) {
    %c0_i32 = arith.constant 0 : i32
    %c0_i32_0 = arith.constant 0 : i32
    %c0_i32_1 = arith.constant 0 : i32
    return %c0_i32, %c0_i32_0 : i32, i32
  }
  func.func @transform_2(%arg0: i32) -> (i32, i32) {
    %c0_i32 = arith.constant 0 : i32
    %c0_i32_0 = arith.constant 0 : i32
    %c0_i32_1 = arith.constant 0 : i32
    return %c0_i32, %c0_i32_0 : i32, i32
  }
  func.func @transform_3(%arg0: i32) -> (i32, i32) {
    %c0_i32 = arith.constant 0 : i32
    %c0_i32_0 = arith.constant 0 : i32
    %c0_i32_1 = arith.constant 0 : i32
    return %c0_i32, %c0_i32_0 : i32, i32
  }
  func.func @transform_4(%arg0: i32) -> (i32, i32) {
    %c0_i32 = arith.constant 0 : i32
    %c0_i32_0 = arith.constant 0 : i32
    %c0_i32_1 = arith.constant 0 : i32
    return %c0_i32, %c0_i32_0 : i32, i32
  }
  func.func @transform_5(%arg0: i32) -> (i32, i32, i32, i32) {
    %c0_i32 = arith.constant 0 : i32
    %c0_i32_0 = arith.constant 0 : i32
    %c0_i32_1 = arith.constant 0 : i32
    %c0_i32_2 = arith.constant 0 : i32
    return %arg0, %c0_i32, %c0_i32_0, %c0_i32_1 : i32, i32, i32, i32
  }
  func.func @transform_6(%arg0: i32) -> (i32, i32, i32, i32) {
    %c0_i32 = arith.constant 0 : i32
    %c0_i32_0 = arith.constant 0 : i32
    %c0_i32_1 = arith.constant 0 : i32
    %c0_i32_2 = arith.constant 0 : i32
    return %arg0, %c0_i32, %c0_i32_0, %c0_i32_1 : i32, i32, i32, i32
  }
}

module attributes {stable_mosaic.version = 11 : i64} {
  func.func @_block_kernel(%arg0: i32, %arg1: memref<1x4x32xbf16, #tpu.memory_space<vmem>>, %arg2: memref<32x32xbf16, #tpu.memory_space<vmem>>, %arg3: memref<12x32xf32, #tpu.memory_space<vmem>>, %arg4: memref<32x48xbf16, #tpu.memory_space<vmem>>, %arg5: memref<12x48xf32, #tpu.memory_space<vmem>>, %arg6: memref<1x2x2x48xbf16, #tpu.memory_space<vmem>>, %arg7: memref<4x4x32xf32, #tpu.memory_space<vmem>>, %arg8: memref<4x4x48xf32, #tpu.memory_space<vmem>>) attributes {dimension_semantics = [#tpu.dimension_semantics<parallel>], iteration_bounds = array<i64: 2>, scalar_prefetch = 0 : i64, scratch_operands = 2 : i64, tpu.core_type = #tpu.core_type<tc>, window_params = [{transform_indices = @transform_0, window_bounds = array<i64: 1, 4, 32>}, {pipeline_mode = #tpu.pipeline_mode<synchronous>, transform_indices = @transform_1, window_bounds = array<i64: 32, 32>}, {pipeline_mode = #tpu.pipeline_mode<synchronous>, transform_indices = @transform_2, window_bounds = array<i64: 12, 32>}, {pipeline_mode = #tpu.pipeline_mode<synchronous>, transform_indices = @transform_3, window_bounds = array<i64: 32, 48>}, {pipeline_mode = #tpu.pipeline_mode<synchronous>, transform_indices = @transform_4, window_bounds = array<i64: 12, 48>}, {transform_indices = @transform_5, window_bounds = array<i64: 1, 2, 2, 48>}]} {
    %c0 = arith.constant 0 : index
    %c0_0 = arith.constant 0 : index
    %c0_1 = arith.constant 0 : index
    %0 = vector.load %arg1[%c0, %c0_0, %c0_1] : memref<1x4x32xbf16, #tpu.memory_space<vmem>>, vector<1x4x32xbf16>
    %1 = vector.shape_cast %0 : vector<1x4x32xbf16> to vector<4x32xbf16>
    %c0_2 = arith.constant 0 : index
    %c0_3 = arith.constant 0 : index
    %2 = vector.load %arg2[%c0_2, %c0_3] : memref<32x32xbf16, #tpu.memory_space<vmem>>, vector<32x32xbf16>
    %cst = arith.constant dense<0.000000e+00> : vector<4x32xf32>
    %3 = tpu.matmul %1, %2, %cst {dimension_numbers = #tpu.dot_dimension_numbers<[1], [0], [0], [1], [0, 0, 1, 1], [], []>} : vector<4x32xbf16>, vector<32x32xbf16>, vector<4x32xf32> -> vector<4x32xf32>
    %c9 = arith.constant 9 : index
    %c0_4 = arith.constant 0 : index
    %4 = vector.load %arg3[%c9, %c0_4] : memref<12x32xf32, #tpu.memory_space<vmem>>, vector<1x32xf32>
    %5 = vector.shape_cast %4 : vector<1x32xf32> to vector<32xf32>
    %6 = vector.shape_cast %5 : vector<32xf32> to vector<1x32xf32>
    %7 = vector.broadcast %6 : vector<1x32xf32> to vector<4x32xf32>
    %8 = arith.addf %3, %7 : vector<4x32xf32>
    %cst_5 = arith.constant 0.000000e+00 : f32
    %9 = vector.broadcast %cst_5 : f32 to vector<1x4x32xf32>
    %cst_6 = arith.constant 0.000000e+00 : f32
    %10 = vector.broadcast %cst_6 : f32 to vector<4x1x32xf32>
    %c0_7 = arith.constant 0 : index
    %c0_8 = arith.constant 0 : index
    %c0_9 = arith.constant 0 : index
    %11 = vector.load %arg7[%c0_7, %c0_8, %c0_9] : memref<4x4x32xf32, #tpu.memory_space<vmem>>, vector<1x4x32xf32>
    tpu.vector_store %arg7[%c0_7, %c0_8, %c0_9], %9 {strides = array<i32>} : memref<4x4x32xf32, #tpu.memory_space<vmem>>, vector<1x4x32xf32>,
    %c3 = arith.constant 3 : index
    %c0_10 = arith.constant 0 : index
    %c0_11 = arith.constant 0 : index
    %12 = vector.load %arg7[%c3, %c0_10, %c0_11] : memref<4x4x32xf32, #tpu.memory_space<vmem>>, vector<1x4x32xf32>
    tpu.vector_store %arg7[%c3, %c0_10, %c0_11], %9 {strides = array<i32>} : memref<4x4x32xf32, #tpu.memory_space<vmem>>, vector<1x4x32xf32>,
    %c0_12 = arith.constant 0 : index
    %c0_13 = arith.constant 0 : index
    %c0_14 = arith.constant 0 : index
    %13 = vector.load %arg7[%c0_12, %c0_13, %c0_14] : memref<4x4x32xf32, #tpu.memory_space<vmem>>, vector<4x1x32xf32>
    tpu.vector_store %arg7[%c0_12, %c0_13, %c0_14], %10 {strides = array<i32>} : memref<4x4x32xf32, #tpu.memory_space<vmem>>, vector<4x1x32xf32>,
    %c0_15 = arith.constant 0 : index
    %c3_16 = arith.constant 3 : index
    %c0_17 = arith.constant 0 : index
    %14 = vector.load %arg7[%c0_15, %c3_16, %c0_17] : memref<4x4x32xf32, #tpu.memory_space<vmem>>, vector<4x1x32xf32>
    tpu.vector_store %arg7[%c0_15, %c3_16, %c0_17], %10 {strides = array<i32>} : memref<4x4x32xf32, #tpu.memory_space<vmem>>, vector<4x1x32xf32>,
    %15 = vector.extract_strided_slice %8 {offsets = [0, 0], sizes = [2, 32], strides = [1, 1]} : vector<4x32xf32> to vector<2x32xf32>
    %c1 = arith.constant 1 : index
    %c1_18 = arith.constant 1 : index
    %c0_19 = arith.constant 0 : index
    %16 = vector.load %arg7[%c1, %c1_18, %c0_19] : memref<4x4x32xf32, #tpu.memory_space<vmem>>, vector<1x2x32xf32>
    %17 = vector.shape_cast %16 : vector<1x2x32xf32> to vector<2x32xf32>
    %18 = vector.shape_cast %15 : vector<2x32xf32> to vector<1x2x32xf32>
    tpu.vector_store %arg7[%c1, %c1_18, %c0_19], %18 {strides = array<i32>} : memref<4x4x32xf32, #tpu.memory_space<vmem>>, vector<1x2x32xf32>,
    %19 = vector.extract_strided_slice %8 {offsets = [2, 0], sizes = [2, 32], strides = [1, 1]} : vector<4x32xf32> to vector<2x32xf32>
    %c2 = arith.constant 2 : index
    %c1_20 = arith.constant 1 : index
    %c0_21 = arith.constant 0 : index
    %20 = vector.load %arg7[%c2, %c1_20, %c0_21] : memref<4x4x32xf32, #tpu.memory_space<vmem>>, vector<1x2x32xf32>
    %21 = vector.shape_cast %20 : vector<1x2x32xf32> to vector<2x32xf32>
    %22 = vector.shape_cast %19 : vector<2x32xf32> to vector<1x2x32xf32>
    tpu.vector_store %arg7[%c2, %c1_20, %c0_21], %22 {strides = array<i32>} : memref<4x4x32xf32, #tpu.memory_space<vmem>>, vector<1x2x32xf32>,
    %cst_22 = arith.constant 0.000000e+00 : f32
    %23 = vector.broadcast %cst_22 : f32 to vector<2x2x32xf32>
    %c0_23 = arith.constant 0 : index
    %c0_24 = arith.constant 0 : index
    %c0_25 = arith.constant 0 : index
    %24 = vector.load %arg7[%c0_23, %c0_24, %c0_25] : memref<4x4x32xf32, #tpu.memory_space<vmem>>, vector<4x2x32xf32>
    %25 = vector.extract_strided_slice %24 {offsets = [0, 0, 0], sizes = [2, 2, 32], strides = [1, 1, 1]} : vector<4x2x32xf32> to vector<2x2x32xf32>
    %c0_26 = arith.constant 0 : index
    %c0_27 = arith.constant 0 : index
    %26 = vector.load %arg3[%c0_26, %c0_27] : memref<12x32xf32, #tpu.memory_space<vmem>>, vector<1x32xf32>
    %27 = vector.shape_cast %26 : vector<1x32xf32> to vector<32xf32>
    %28 = vector.shape_cast %27 : vector<32xf32> to vector<1x1x32xf32>
    %29 = vector.broadcast %28 : vector<1x1x32xf32> to vector<2x2x32xf32>
    %30 = arith.mulf %25, %29 : vector<2x2x32xf32>
    %31 = arith.addf %23, %30 : vector<2x2x32xf32>
    %32 = vector.extract_strided_slice %24 {offsets = [1, 0, 0], sizes = [2, 2, 32], strides = [1, 1, 1]} : vector<4x2x32xf32> to vector<2x2x32xf32>
    %c3_28 = arith.constant 3 : index
    %c0_29 = arith.constant 0 : index
    %33 = vector.load %arg3[%c3_28, %c0_29] : memref<12x32xf32, #tpu.memory_space<vmem>>, vector<1x32xf32>
    %34 = vector.shape_cast %33 : vector<1x32xf32> to vector<32xf32>
    %35 = vector.shape_cast %34 : vector<32xf32> to vector<1x1x32xf32>
    %36 = vector.broadcast %35 : vector<1x1x32xf32> to vector<2x2x32xf32>
    %37 = arith.mulf %32, %36 : vector<2x2x32xf32>
    %38 = arith.addf %31, %37 : vector<2x2x32xf32>
    %39 = vector.extract_strided_slice %24 {offsets = [2, 0, 0], sizes = [2, 2, 32], strides = [1, 1, 1]} : vector<4x2x32xf32> to vector<2x2x32xf32>
    %c6 = arith.constant 6 : index
    %c0_30 = arith.constant 0 : index
    %40 = vector.load %arg3[%c6, %c0_30] : memref<12x32xf32, #tpu.memory_space<vmem>>, vector<1x32xf32>
    %41 = vector.shape_cast %40 : vector<1x32xf32> to vector<32xf32>
    %42 = vector.shape_cast %41 : vector<32xf32> to vector<1x1x32xf32>
    %43 = vector.broadcast %42 : vector<1x1x32xf32> to vector<2x2x32xf32>
    %44 = arith.mulf %39, %43 : vector<2x2x32xf32>
    %45 = arith.addf %38, %44 : vector<2x2x32xf32>
    %c0_31 = arith.constant 0 : index
    %c1_32 = arith.constant 1 : index
    %c0_33 = arith.constant 0 : index
    %46 = vector.load %arg7[%c0_31, %c1_32, %c0_33] : memref<4x4x32xf32, #tpu.memory_space<vmem>>, vector<4x2x32xf32>
    %47 = vector.extract_strided_slice %46 {offsets = [0, 0, 0], sizes = [2, 2, 32], strides = [1, 1, 1]} : vector<4x2x32xf32> to vector<2x2x32xf32>
    %c1_34 = arith.constant 1 : index
    %c0_35 = arith.constant 0 : index
    %48 = vector.load %arg3[%c1_34, %c0_35] : memref<12x32xf32, #tpu.memory_space<vmem>>, vector<1x32xf32>
    %49 = vector.shape_cast %48 : vector<1x32xf32> to vector<32xf32>
    %50 = vector.shape_cast %49 : vector<32xf32> to vector<1x1x32xf32>
    %51 = vector.broadcast %50 : vector<1x1x32xf32> to vector<2x2x32xf32>
    %52 = arith.mulf %47, %51 : vector<2x2x32xf32>
    %53 = arith.addf %45, %52 : vector<2x2x32xf32>
    %54 = vector.extract_strided_slice %46 {offsets = [1, 0, 0], sizes = [2, 2, 32], strides = [1, 1, 1]} : vector<4x2x32xf32> to vector<2x2x32xf32>
    %c4 = arith.constant 4 : index
    %c0_36 = arith.constant 0 : index
    %55 = vector.load %arg3[%c4, %c0_36] : memref<12x32xf32, #tpu.memory_space<vmem>>, vector<1x32xf32>
    %56 = vector.shape_cast %55 : vector<1x32xf32> to vector<32xf32>
    %57 = vector.shape_cast %56 : vector<32xf32> to vector<1x1x32xf32>
    %58 = vector.broadcast %57 : vector<1x1x32xf32> to vector<2x2x32xf32>
    %59 = arith.mulf %54, %58 : vector<2x2x32xf32>
    %60 = arith.addf %53, %59 : vector<2x2x32xf32>
    %61 = vector.extract_strided_slice %46 {offsets = [2, 0, 0], sizes = [2, 2, 32], strides = [1, 1, 1]} : vector<4x2x32xf32> to vector<2x2x32xf32>
    %c7 = arith.constant 7 : index
    %c0_37 = arith.constant 0 : index
    %62 = vector.load %arg3[%c7, %c0_37] : memref<12x32xf32, #tpu.memory_space<vmem>>, vector<1x32xf32>
    %63 = vector.shape_cast %62 : vector<1x32xf32> to vector<32xf32>
    %64 = vector.shape_cast %63 : vector<32xf32> to vector<1x1x32xf32>
    %65 = vector.broadcast %64 : vector<1x1x32xf32> to vector<2x2x32xf32>
    %66 = arith.mulf %61, %65 : vector<2x2x32xf32>
    %67 = arith.addf %60, %66 : vector<2x2x32xf32>
    %c0_38 = arith.constant 0 : index
    %c2_39 = arith.constant 2 : index
    %c0_40 = arith.constant 0 : index
    %68 = vector.load %arg7[%c0_38, %c2_39, %c0_40] : memref<4x4x32xf32, #tpu.memory_space<vmem>>, vector<4x2x32xf32>
    %69 = vector.extract_strided_slice %68 {offsets = [0, 0, 0], sizes = [2, 2, 32], strides = [1, 1, 1]} : vector<4x2x32xf32> to vector<2x2x32xf32>
    %c2_41 = arith.constant 2 : index
    %c0_42 = arith.constant 0 : index
    %70 = vector.load %arg3[%c2_41, %c0_42] : memref<12x32xf32, #tpu.memory_space<vmem>>, vector<1x32xf32>
    %71 = vector.shape_cast %70 : vector<1x32xf32> to vector<32xf32>
    %72 = vector.shape_cast %71 : vector<32xf32> to vector<1x1x32xf32>
    %73 = vector.broadcast %72 : vector<1x1x32xf32> to vector<2x2x32xf32>
    %74 = arith.mulf %69, %73 : vector<2x2x32xf32>
    %75 = arith.addf %67, %74 : vector<2x2x32xf32>
    %76 = vector.extract_strided_slice %68 {offsets = [1, 0, 0], sizes = [2, 2, 32], strides = [1, 1, 1]} : vector<4x2x32xf32> to vector<2x2x32xf32>
    %c5 = arith.constant 5 : index
    %c0_43 = arith.constant 0 : index
    %77 = vector.load %arg3[%c5, %c0_43] : memref<12x32xf32, #tpu.memory_space<vmem>>, vector<1x32xf32>
    %78 = vector.shape_cast %77 : vector<1x32xf32> to vector<32xf32>
    %79 = vector.shape_cast %78 : vector<32xf32> to vector<1x1x32xf32>
    %80 = vector.broadcast %79 : vector<1x1x32xf32> to vector<2x2x32xf32>
    %81 = arith.mulf %76, %80 : vector<2x2x32xf32>
    %82 = arith.addf %75, %81 : vector<2x2x32xf32>
    %83 = vector.extract_strided_slice %68 {offsets = [2, 0, 0], sizes = [2, 2, 32], strides = [1, 1, 1]} : vector<4x2x32xf32> to vector<2x2x32xf32>
    %c8 = arith.constant 8 : index
    %c0_44 = arith.constant 0 : index
    %84 = vector.load %arg3[%c8, %c0_44] : memref<12x32xf32, #tpu.memory_space<vmem>>, vector<1x32xf32>
    %85 = vector.shape_cast %84 : vector<1x32xf32> to vector<32xf32>
    %86 = vector.shape_cast %85 : vector<32xf32> to vector<1x1x32xf32>
    %87 = vector.broadcast %86 : vector<1x1x32xf32> to vector<2x2x32xf32>
    %88 = arith.mulf %83, %87 : vector<2x2x32xf32>
    %89 = arith.addf %82, %88 : vector<2x2x32xf32>
    %c10 = arith.constant 10 : index
    %c0_45 = arith.constant 0 : index
    %90 = vector.load %arg3[%c10, %c0_45] : memref<12x32xf32, #tpu.memory_space<vmem>>, vector<1x32xf32>
    %91 = vector.shape_cast %90 : vector<1x32xf32> to vector<32xf32>
    %92 = vector.shape_cast %91 : vector<32xf32> to vector<1x1x32xf32>
    %93 = vector.broadcast %92 : vector<1x1x32xf32> to vector<2x2x32xf32>
    %94 = arith.mulf %89, %93 : vector<2x2x32xf32>
    %c11 = arith.constant 11 : index
    %c0_46 = arith.constant 0 : index
    %95 = vector.load %arg3[%c11, %c0_46] : memref<12x32xf32, #tpu.memory_space<vmem>>, vector<1x32xf32>
    %96 = vector.shape_cast %95 : vector<1x32xf32> to vector<32xf32>
    %97 = vector.shape_cast %96 : vector<32xf32> to vector<1x1x32xf32>
    %98 = vector.broadcast %97 : vector<1x1x32xf32> to vector<2x2x32xf32>
    %99 = arith.addf %94, %98 : vector<2x2x32xf32>
    %cst_47 = arith.constant 0.000000e+00 : f32
    %100 = vector.broadcast %cst_47 : f32 to vector<2x2x32xf32>
    %101 = arith.maximumf %99, %100 : vector<2x2x32xf32>
    %102 = vector.extract_strided_slice %101 {offsets = [0, 0, 0], sizes = [1, 2, 32], strides = [1, 1, 1]} : vector<2x2x32xf32> to vector<1x2x32xf32>
    %103 = vector.shape_cast %102 : vector<1x2x32xf32> to vector<2x32xf32>
    %104 = vector.extract_strided_slice %101 {offsets = [1, 0, 0], sizes = [1, 2, 32], strides = [1, 1, 1]} : vector<2x2x32xf32> to vector<1x2x32xf32>
    %105 = vector.shape_cast %104 : vector<1x2x32xf32> to vector<2x32xf32>
    %106 = tpu.concatenate %103, %105 in 0 : vector<2x32xf32>, vector<2x32xf32> -> vector<4x32xf32>
    %107 = arith.truncf %106 : vector<4x32xf32> to vector<4x32xbf16>
    %c0_48 = arith.constant 0 : index
    %c0_49 = arith.constant 0 : index
    %108 = vector.load %arg4[%c0_48, %c0_49] : memref<32x48xbf16, #tpu.memory_space<vmem>>, vector<32x48xbf16>
    %cst_50 = arith.constant dense<0.000000e+00> : vector<4x48xf32>
    %109 = tpu.matmul %107, %108, %cst_50 {dimension_numbers = #tpu.dot_dimension_numbers<[1], [0], [0], [1], [0, 0, 1, 1], [], []>} : vector<4x32xbf16>, vector<32x48xbf16>, vector<4x48xf32> -> vector<4x48xf32>
    %c9_51 = arith.constant 9 : index
    %c0_52 = arith.constant 0 : index
    %110 = vector.load %arg5[%c9_51, %c0_52] : memref<12x48xf32, #tpu.memory_space<vmem>>, vector<1x48xf32>
    %111 = vector.shape_cast %110 : vector<1x48xf32> to vector<48xf32>
    %112 = vector.shape_cast %111 : vector<48xf32> to vector<1x48xf32>
    %113 = vector.broadcast %112 : vector<1x48xf32> to vector<4x48xf32>
    %114 = arith.addf %109, %113 : vector<4x48xf32>
    %cst_53 = arith.constant 0.000000e+00 : f32
    %115 = vector.broadcast %cst_53 : f32 to vector<1x4x48xf32>
    %cst_54 = arith.constant 0.000000e+00 : f32
    %116 = vector.broadcast %cst_54 : f32 to vector<4x1x48xf32>
    %c0_55 = arith.constant 0 : index
    %c0_56 = arith.constant 0 : index
    %c0_57 = arith.constant 0 : index
    %117 = vector.load %arg8[%c0_55, %c0_56, %c0_57] : memref<4x4x48xf32, #tpu.memory_space<vmem>>, vector<1x4x48xf32>
    tpu.vector_store %arg8[%c0_55, %c0_56, %c0_57], %115 {strides = array<i32>} : memref<4x4x48xf32, #tpu.memory_space<vmem>>, vector<1x4x48xf32>,
    %c3_58 = arith.constant 3 : index
    %c0_59 = arith.constant 0 : index
    %c0_60 = arith.constant 0 : index
    %118 = vector.load %arg8[%c3_58, %c0_59, %c0_60] : memref<4x4x48xf32, #tpu.memory_space<vmem>>, vector<1x4x48xf32>
    tpu.vector_store %arg8[%c3_58, %c0_59, %c0_60], %115 {strides = array<i32>} : memref<4x4x48xf32, #tpu.memory_space<vmem>>, vector<1x4x48xf32>,
    %c0_61 = arith.constant 0 : index
    %c0_62 = arith.constant 0 : index
    %c0_63 = arith.constant 0 : index
    %119 = vector.load %arg8[%c0_61, %c0_62, %c0_63] : memref<4x4x48xf32, #tpu.memory_space<vmem>>, vector<4x1x48xf32>
    tpu.vector_store %arg8[%c0_61, %c0_62, %c0_63], %116 {strides = array<i32>} : memref<4x4x48xf32, #tpu.memory_space<vmem>>, vector<4x1x48xf32>,
    %c0_64 = arith.constant 0 : index
    %c3_65 = arith.constant 3 : index
    %c0_66 = arith.constant 0 : index
    %120 = vector.load %arg8[%c0_64, %c3_65, %c0_66] : memref<4x4x48xf32, #tpu.memory_space<vmem>>, vector<4x1x48xf32>
    tpu.vector_store %arg8[%c0_64, %c3_65, %c0_66], %116 {strides = array<i32>} : memref<4x4x48xf32, #tpu.memory_space<vmem>>, vector<4x1x48xf32>,
    %121 = vector.extract_strided_slice %114 {offsets = [0, 0], sizes = [2, 48], strides = [1, 1]} : vector<4x48xf32> to vector<2x48xf32>
    %c1_67 = arith.constant 1 : index
    %c1_68 = arith.constant 1 : index
    %c0_69 = arith.constant 0 : index
    %122 = vector.load %arg8[%c1_67, %c1_68, %c0_69] : memref<4x4x48xf32, #tpu.memory_space<vmem>>, vector<1x2x48xf32>
    %123 = vector.shape_cast %122 : vector<1x2x48xf32> to vector<2x48xf32>
    %124 = vector.shape_cast %121 : vector<2x48xf32> to vector<1x2x48xf32>
    tpu.vector_store %arg8[%c1_67, %c1_68, %c0_69], %124 {strides = array<i32>} : memref<4x4x48xf32, #tpu.memory_space<vmem>>, vector<1x2x48xf32>,
    %125 = vector.extract_strided_slice %114 {offsets = [2, 0], sizes = [2, 48], strides = [1, 1]} : vector<4x48xf32> to vector<2x48xf32>
    %c2_70 = arith.constant 2 : index
    %c1_71 = arith.constant 1 : index
    %c0_72 = arith.constant 0 : index
    %126 = vector.load %arg8[%c2_70, %c1_71, %c0_72] : memref<4x4x48xf32, #tpu.memory_space<vmem>>, vector<1x2x48xf32>
    %127 = vector.shape_cast %126 : vector<1x2x48xf32> to vector<2x48xf32>
    %128 = vector.shape_cast %125 : vector<2x48xf32> to vector<1x2x48xf32>
    tpu.vector_store %arg8[%c2_70, %c1_71, %c0_72], %128 {strides = array<i32>} : memref<4x4x48xf32, #tpu.memory_space<vmem>>, vector<1x2x48xf32>,
    %cst_73 = arith.constant 0.000000e+00 : f32
    %129 = vector.broadcast %cst_73 : f32 to vector<2x2x48xf32>
    %c0_74 = arith.constant 0 : index
    %c0_75 = arith.constant 0 : index
    %c0_76 = arith.constant 0 : index
    %130 = vector.load %arg8[%c0_74, %c0_75, %c0_76] : memref<4x4x48xf32, #tpu.memory_space<vmem>>, vector<4x2x48xf32>
    %131 = vector.extract_strided_slice %130 {offsets = [0, 0, 0], sizes = [2, 2, 48], strides = [1, 1, 1]} : vector<4x2x48xf32> to vector<2x2x48xf32>
    %c0_77 = arith.constant 0 : index
    %c0_78 = arith.constant 0 : index
    %132 = vector.load %arg5[%c0_77, %c0_78] : memref<12x48xf32, #tpu.memory_space<vmem>>, vector<1x48xf32>
    %133 = vector.shape_cast %132 : vector<1x48xf32> to vector<48xf32>
    %134 = vector.shape_cast %133 : vector<48xf32> to vector<1x1x48xf32>
    %135 = vector.broadcast %134 : vector<1x1x48xf32> to vector<2x2x48xf32>
    %136 = arith.mulf %131, %135 : vector<2x2x48xf32>
    %137 = arith.addf %129, %136 : vector<2x2x48xf32>
    %138 = vector.extract_strided_slice %130 {offsets = [1, 0, 0], sizes = [2, 2, 48], strides = [1, 1, 1]} : vector<4x2x48xf32> to vector<2x2x48xf32>
    %c3_79 = arith.constant 3 : index
    %c0_80 = arith.constant 0 : index
    %139 = vector.load %arg5[%c3_79, %c0_80] : memref<12x48xf32, #tpu.memory_space<vmem>>, vector<1x48xf32>
    %140 = vector.shape_cast %139 : vector<1x48xf32> to vector<48xf32>
    %141 = vector.shape_cast %140 : vector<48xf32> to vector<1x1x48xf32>
    %142 = vector.broadcast %141 : vector<1x1x48xf32> to vector<2x2x48xf32>
    %143 = arith.mulf %138, %142 : vector<2x2x48xf32>
    %144 = arith.addf %137, %143 : vector<2x2x48xf32>
    %145 = vector.extract_strided_slice %130 {offsets = [2, 0, 0], sizes = [2, 2, 48], strides = [1, 1, 1]} : vector<4x2x48xf32> to vector<2x2x48xf32>
    %c6_81 = arith.constant 6 : index
    %c0_82 = arith.constant 0 : index
    %146 = vector.load %arg5[%c6_81, %c0_82] : memref<12x48xf32, #tpu.memory_space<vmem>>, vector<1x48xf32>
    %147 = vector.shape_cast %146 : vector<1x48xf32> to vector<48xf32>
    %148 = vector.shape_cast %147 : vector<48xf32> to vector<1x1x48xf32>
    %149 = vector.broadcast %148 : vector<1x1x48xf32> to vector<2x2x48xf32>
    %150 = arith.mulf %145, %149 : vector<2x2x48xf32>
    %151 = arith.addf %144, %150 : vector<2x2x48xf32>
    %c0_83 = arith.constant 0 : index
    %c1_84 = arith.constant 1 : index
    %c0_85 = arith.constant 0 : index
    %152 = vector.load %arg8[%c0_83, %c1_84, %c0_85] : memref<4x4x48xf32, #tpu.memory_space<vmem>>, vector<4x2x48xf32>
    %153 = vector.extract_strided_slice %152 {offsets = [0, 0, 0], sizes = [2, 2, 48], strides = [1, 1, 1]} : vector<4x2x48xf32> to vector<2x2x48xf32>
    %c1_86 = arith.constant 1 : index
    %c0_87 = arith.constant 0 : index
    %154 = vector.load %arg5[%c1_86, %c0_87] : memref<12x48xf32, #tpu.memory_space<vmem>>, vector<1x48xf32>
    %155 = vector.shape_cast %154 : vector<1x48xf32> to vector<48xf32>
    %156 = vector.shape_cast %155 : vector<48xf32> to vector<1x1x48xf32>
    %157 = vector.broadcast %156 : vector<1x1x48xf32> to vector<2x2x48xf32>
    %158 = arith.mulf %153, %157 : vector<2x2x48xf32>
    %159 = arith.addf %151, %158 : vector<2x2x48xf32>
    %160 = vector.extract_strided_slice %152 {offsets = [1, 0, 0], sizes = [2, 2, 48], strides = [1, 1, 1]} : vector<4x2x48xf32> to vector<2x2x48xf32>
    %c4_88 = arith.constant 4 : index
    %c0_89 = arith.constant 0 : index
    %161 = vector.load %arg5[%c4_88, %c0_89] : memref<12x48xf32, #tpu.memory_space<vmem>>, vector<1x48xf32>
    %162 = vector.shape_cast %161 : vector<1x48xf32> to vector<48xf32>
    %163 = vector.shape_cast %162 : vector<48xf32> to vector<1x1x48xf32>
    %164 = vector.broadcast %163 : vector<1x1x48xf32> to vector<2x2x48xf32>
    %165 = arith.mulf %160, %164 : vector<2x2x48xf32>
    %166 = arith.addf %159, %165 : vector<2x2x48xf32>
    %167 = vector.extract_strided_slice %152 {offsets = [2, 0, 0], sizes = [2, 2, 48], strides = [1, 1, 1]} : vector<4x2x48xf32> to vector<2x2x48xf32>
    %c7_90 = arith.constant 7 : index
    %c0_91 = arith.constant 0 : index
    %168 = vector.load %arg5[%c7_90, %c0_91] : memref<12x48xf32, #tpu.memory_space<vmem>>, vector<1x48xf32>
    %169 = vector.shape_cast %168 : vector<1x48xf32> to vector<48xf32>
    %170 = vector.shape_cast %169 : vector<48xf32> to vector<1x1x48xf32>
    %171 = vector.broadcast %170 : vector<1x1x48xf32> to vector<2x2x48xf32>
    %172 = arith.mulf %167, %171 : vector<2x2x48xf32>
    %173 = arith.addf %166, %172 : vector<2x2x48xf32>
    %c0_92 = arith.constant 0 : index
    %c2_93 = arith.constant 2 : index
    %c0_94 = arith.constant 0 : index
    %174 = vector.load %arg8[%c0_92, %c2_93, %c0_94] : memref<4x4x48xf32, #tpu.memory_space<vmem>>, vector<4x2x48xf32>
    %175 = vector.extract_strided_slice %174 {offsets = [0, 0, 0], sizes = [2, 2, 48], strides = [1, 1, 1]} : vector<4x2x48xf32> to vector<2x2x48xf32>
    %c2_95 = arith.constant 2 : index
    %c0_96 = arith.constant 0 : index
    %176 = vector.load %arg5[%c2_95, %c0_96] : memref<12x48xf32, #tpu.memory_space<vmem>>, vector<1x48xf32>
    %177 = vector.shape_cast %176 : vector<1x48xf32> to vector<48xf32>
    %178 = vector.shape_cast %177 : vector<48xf32> to vector<1x1x48xf32>
    %179 = vector.broadcast %178 : vector<1x1x48xf32> to vector<2x2x48xf32>
    %180 = arith.mulf %175, %179 : vector<2x2x48xf32>
    %181 = arith.addf %173, %180 : vector<2x2x48xf32>
    %182 = vector.extract_strided_slice %174 {offsets = [1, 0, 0], sizes = [2, 2, 48], strides = [1, 1, 1]} : vector<4x2x48xf32> to vector<2x2x48xf32>
    %c5_97 = arith.constant 5 : index
    %c0_98 = arith.constant 0 : index
    %183 = vector.load %arg5[%c5_97, %c0_98] : memref<12x48xf32, #tpu.memory_space<vmem>>, vector<1x48xf32>
    %184 = vector.shape_cast %183 : vector<1x48xf32> to vector<48xf32>
    %185 = vector.shape_cast %184 : vector<48xf32> to vector<1x1x48xf32>
    %186 = vector.broadcast %185 : vector<1x1x48xf32> to vector<2x2x48xf32>
    %187 = arith.mulf %182, %186 : vector<2x2x48xf32>
    %188 = arith.addf %181, %187 : vector<2x2x48xf32>
    %189 = vector.extract_strided_slice %174 {offsets = [2, 0, 0], sizes = [2, 2, 48], strides = [1, 1, 1]} : vector<4x2x48xf32> to vector<2x2x48xf32>
    %c8_99 = arith.constant 8 : index
    %c0_100 = arith.constant 0 : index
    %190 = vector.load %arg5[%c8_99, %c0_100] : memref<12x48xf32, #tpu.memory_space<vmem>>, vector<1x48xf32>
    %191 = vector.shape_cast %190 : vector<1x48xf32> to vector<48xf32>
    %192 = vector.shape_cast %191 : vector<48xf32> to vector<1x1x48xf32>
    %193 = vector.broadcast %192 : vector<1x1x48xf32> to vector<2x2x48xf32>
    %194 = arith.mulf %189, %193 : vector<2x2x48xf32>
    %195 = arith.addf %188, %194 : vector<2x2x48xf32>
    %c10_101 = arith.constant 10 : index
    %c0_102 = arith.constant 0 : index
    %196 = vector.load %arg5[%c10_101, %c0_102] : memref<12x48xf32, #tpu.memory_space<vmem>>, vector<1x48xf32>
    %197 = vector.shape_cast %196 : vector<1x48xf32> to vector<48xf32>
    %198 = vector.shape_cast %197 : vector<48xf32> to vector<1x1x48xf32>
    %199 = vector.broadcast %198 : vector<1x1x48xf32> to vector<2x2x48xf32>
    %200 = arith.mulf %195, %199 : vector<2x2x48xf32>
    %c11_103 = arith.constant 11 : index
    %c0_104 = arith.constant 0 : index
    %201 = vector.load %arg5[%c11_103, %c0_104] : memref<12x48xf32, #tpu.memory_space<vmem>>, vector<1x48xf32>
    %202 = vector.shape_cast %201 : vector<1x48xf32> to vector<48xf32>
    %203 = vector.shape_cast %202 : vector<48xf32> to vector<1x1x48xf32>
    %204 = vector.broadcast %203 : vector<1x1x48xf32> to vector<2x2x48xf32>
    %205 = arith.addf %200, %204 : vector<2x2x48xf32>
    %cst_105 = arith.constant 0.000000e+00 : f32
    %206 = vector.broadcast %cst_105 : f32 to vector<2x2x48xf32>
    %207 = arith.maximumf %205, %206 : vector<2x2x48xf32>
    %208 = arith.truncf %207 : vector<2x2x48xf32> to vector<2x2x48xbf16>
    %c0_106 = arith.constant 0 : index
    %c0_107 = arith.constant 0 : index
    %c0_108 = arith.constant 0 : index
    %c0_109 = arith.constant 0 : index
    %209 = vector.load %arg6[%c0_106, %c0_107, %c0_108, %c0_109] : memref<1x2x2x48xbf16, #tpu.memory_space<vmem>>, vector<1x2x2x48xbf16>
    %210 = vector.shape_cast %209 : vector<1x2x2x48xbf16> to vector<2x2x48xbf16>
    %211 = vector.shape_cast %208 : vector<2x2x48xbf16> to vector<1x2x2x48xbf16>
    tpu.vector_store %arg6[%c0_106, %c0_107, %c0_108, %c0_109], %211 {strides = array<i32>} : memref<1x2x2x48xbf16, #tpu.memory_space<vmem>>, vector<1x2x2x48xbf16>,
    return
  }
  func.func @transform_0(%arg0: i32) -> (i32, i32, i32) {
    %c0_i32 = arith.constant 0 : i32
    %c0_i32_0 = arith.constant 0 : i32
    %c0_i32_1 = arith.constant 0 : i32
    return %arg0, %c0_i32, %c0_i32_0 : i32, i32, i32
  }
  func.func @transform_1(%arg0: i32) -> (i32, i32) {
    %c0_i32 = arith.constant 0 : i32
    %c0_i32_0 = arith.constant 0 : i32
    %c0_i32_1 = arith.constant 0 : i32
    return %c0_i32, %c0_i32_0 : i32, i32
  }
  func.func @transform_2(%arg0: i32) -> (i32, i32) {
    %c0_i32 = arith.constant 0 : i32
    %c0_i32_0 = arith.constant 0 : i32
    %c0_i32_1 = arith.constant 0 : i32
    return %c0_i32, %c0_i32_0 : i32, i32
  }
  func.func @transform_3(%arg0: i32) -> (i32, i32) {
    %c0_i32 = arith.constant 0 : i32
    %c0_i32_0 = arith.constant 0 : i32
    %c0_i32_1 = arith.constant 0 : i32
    return %c0_i32, %c0_i32_0 : i32, i32
  }
  func.func @transform_4(%arg0: i32) -> (i32, i32) {
    %c0_i32 = arith.constant 0 : i32
    %c0_i32_0 = arith.constant 0 : i32
    %c0_i32_1 = arith.constant 0 : i32
    return %c0_i32, %c0_i32_0 : i32, i32
  }
  func.func @transform_5(%arg0: i32) -> (i32, i32, i32, i32) {
    %c0_i32 = arith.constant 0 : i32
    %c0_i32_0 = arith.constant 0 : i32
    %c0_i32_1 = arith.constant 0 : i32
    %c0_i32_2 = arith.constant 0 : i32
    return %arg0, %c0_i32, %c0_i32_0, %c0_i32_1 : i32, i32, i32, i32
  }
}

</mosaic_0001>

<llo_original>
// kernel: yunet_backbone.3
$region0: #{yunet_backbone.3}
  #allocation0 [shape = 'u32[]', space=smem, size = 0x4, offset = 0x4, fixed_abs, tag = 'smem constant byte address 0x4 - core index']
  #allocation1 [shape = 'u32[72,128]{1,0:T(1,128)}', space=vmem, size = 0x9000, scoped, tag = 'internal scratch']
  #allocation2 [shape = 'f32[10,10,16]{2,1,0:T(8,128)}', space=vmem, size = 0x14000, scoped, tag = 'scratch operand']
  %s0 = inlined_call_operand.vmem [shape: bf16[2,64,36], index: 0, kind: input, shape index: {}]
  %s1 = inlined_call_operand.vmem [shape: bf16[36,8], index: 1, kind: input, shape index: {}]
  %s2 = inlined_call_operand.vmem [shape: f32[2,8], index: 2, kind: input, shape index: {}]
  %s3 = inlined_call_operand.vmem [shape: bf16[8,16], index: 3, kind: input, shape index: {}]
  %s4 = inlined_call_operand.vmem [shape: f32[12,16], index: 4, kind: input, shape index: {}]
  %s5 = inlined_call_operand.vmem [shape: bf16[2,4,4,16], index: 5, kind: output, shape index: {}]
  %s6 = sld [smem:[#allocation0]]
  $region53: #{yunet_backbone.3} parent=0
    _
  %s8 = ssub.s32 1, %s6
  %s9 = scalar_select 0, %s8, %s6
  loop: start=0, step=1, limit=4
  $region2: #{yunet_backbone.3} parent=0 // loop_pre_header
    _
  $region3: #{yunet_backbone.3} parent=0 // loop_header
    %s11 = sphi 0, %s15
    %p12 = scmp.ge.s32.totalorder %s11, 4
    %s21 = sphi 0, %s23
    %s24 = sphi 0, %s21
    %s25 = sphi 0, %s24
    %s41 = sphi 0, %s25
    %s45 = sphi 0, %s45
    %s47 = sphi 0, %s45
    %s48 = sphi 0, %s47
    %s62 = sphi 0, %s48
    %s66 = sphi 0, %s66
    %s68 = sphi 0, %s66
    %s69 = sphi 0, %s68
    %s83 = sphi 0, %s69
    %s87 = sphi 0, %s87
    %s89 = sphi 0, %s87
    %s90 = sphi 0, %s89
    %s104 = sphi 0, %s90
    %s108 = sphi 0, %s108
    %s110 = sphi 0, %s108
    %s111 = sphi 0, %s110
    %s125 = sphi 0, %s111
    %s131 = sphi 0, %s133
    %s134 = sphi 0, %s131
    %s135 = sphi 0, %s134
    %s151 = sphi 0, %s135
  $region4: #{yunet_backbone.3} parent=0 // loop_header_branch
    %14 = sbr.rel (%p12) target = $region8
  $region5: #{yunet_backbone.3} parent=0 // loop_body
    %s16 = ssub.s32 %s11, 1
    %s17 = ssub.s32 %s11, 2
    %s18 = sadd.s32 %s11, 1
    %s19 = ssub.s32 %s11, %s18
    %p20 = scmp.eq.s32.totalorder %s19, 0
    %s22 = sadd.s32 %s21, 1
    %s23 = scalar_select %p20, %s21, %s22
    %p26 = pneg %p20
    %p27 = scmp.eq.s32.totalorder %s11, 1
    %p28 = por %p26, %p27
    %p29 = scmp.ne.s32.totalorder %s21, %s24
    %p30 = scmp.eq.s32.totalorder %s11, 0
    %p31 = por %p29, %p30
    %p32 = scmp.ne.s32.totalorder %s21, %s24
    %p33 = scmp.eq.s32.totalorder %s16, 1
    %p34 = por %p32, %p33
    %p35 = scmp.ne.s32.totalorder %s24, %s25
    %p36 = scmp.eq.s32.totalorder %s16, 0
    %p37 = por %p35, %p36
    %p38 = scmp.ne.s32.totalorder %s24, %s25
    %p39 = scmp.eq.s32.totalorder %s17, 1
    %p40 = por %p38, %p39
    %p42 = scmp.ne.s32.totalorder %s25, %s41
    %p43 = scmp.eq.s32.totalorder %s17, 0
    %p44 = por %p42, %p43
    %s46 = sadd.s32 %s45, 1
    %p49 = scmp.eq.s32.totalorder %s11, 1
    %p50 = scmp.ne.s32.totalorder %s45, %s47
    %p51 = scmp.eq.s32.totalorder %s11, 0
    %p52 = por %p50, %p51
    %p53 = scmp.ne.s32.totalorder %s45, %s47
    %p54 = scmp.eq.s32.totalorder %s16, 1
    %p55 = por %p53, %p54
    %p56 = scmp.ne.s32.totalorder %s47, %s48
    %p57 = scmp.eq.s32.totalorder %s16, 0
    %p58 = por %p56, %p57
    %p59 = scmp.ne.s32.totalorder %s47, %s48
    %p60 = scmp.eq.s32.totalorder %s17, 1
    %p61 = por %p59, %p60
    %p63 = scmp.ne.s32.totalorder %s48, %s62
    %p64 = scmp.eq.s32.totalorder %s17, 0
    %p65 = por %p63, %p64
    %s67 = sadd.s32 %s66, 1
    %p70 = scmp.eq.s32.totalorder %s11, 1
    %p71 = scmp.ne.s32.totalorder %s66, %s68
    %p72 = scmp.eq.s32.totalorder %s11, 0
    %p73 = por %p71, %p72
    %p74 = scmp.ne.s32.totalorder %s66, %s68
    %p75 = scmp.eq.s32.totalorder %s16, 1
    %p76 = por %p74, %p75
    %p77 = scmp.ne.s32.totalorder %s68, %s69
    %p78 = scmp.eq.s32.totalorder %s16, 0
    %p79 = por %p77, %p78
    %p80 = scmp.ne.s32.totalorder %s68, %s69
    %p81 = scmp.eq.s32.totalorder %s17, 1
    %p82 = por %p80, %p81
    %p84 = scmp.ne.s32.totalorder %s69, %s83
    %p85 = scmp.eq.s32.totalorder %s17, 0
    %p86 = por %p84, %p85
    %s88 = sadd.s32 %s87, 1
    %p91 = scmp.eq.s32.totalorder %s11, 1
    %p92 = scmp.ne.s32.totalorder %s87, %s89
    %p93 = scmp.eq.s32.totalorder %s11, 0
    %p94 = por %p92, %p93
    %p95 = scmp.ne.s32.totalorder %s87, %s89
    %p96 = scmp.eq.s32.totalorder %s16, 1
    %p97 = por %p95, %p96
    %p98 = scmp.ne.s32.totalorder %s89, %s90
    %p99 = scmp.eq.s32.totalorder %s16, 0
    %p100 = por %p98, %p99
    %p101 = scmp.ne.s32.totalorder %s89, %s90
    %p102 = scmp.eq.s32.totalorder %s17, 1
    %p103 = por %p101, %p102
    %p105 = scmp.ne.s32.totalorder %s90, %s104
    %p106 = scmp.eq.s32.totalorder %s17, 0
    %p107 = por %p105, %p106
    %s109 = sadd.s32 %s108, 1
    %p112 = scmp.eq.s32.totalorder %s11, 1
    %p113 = scmp.ne.s32.totalorder %s108, %s110
    %p114 = scmp.eq.s32.totalorder %s11, 0
    %p115 = por %p113, %p114
    %p116 = scmp.ne.s32.totalorder %s108, %s110
    %p117 = scmp.eq.s32.totalorder %s16, 1
    %p118 = por %p116, %p117
    %p119 = scmp.ne.s32.totalorder %s110, %s111
    %p120 = scmp.eq.s32.totalorder %s16, 0
    %p121 = por %p119, %p120
    %p122 = scmp.ne.s32.totalorder %s110, %s111
    %p123 = scmp.eq.s32.totalorder %s17, 1
    %p124 = por %p122, %p123
    %p126 = scmp.ne.s32.totalorder %s111, %s125
    %p127 = scmp.eq.s32.totalorder %s17, 0
    %p128 = por %p126, %p127
    %s129 = ssub.s32 %s11, %s18
    %p130 = scmp.eq.s32.totalorder %s129, 0
    %s132 = sadd.s32 %s131, 1
    %s133 = scalar_select %p130, %s131, %s132
    %p136 = pneg %p130
    %p137 = scmp.eq.s32.totalorder %s11, 1
    %p138 = por %p136, %p137
    %p139 = scmp.ne.s32.totalorder %s131, %s134
    %p140 = scmp.eq.s32.totalorder %s11, 0
    %p141 = por %p139, %p140
    %p142 = scmp.ne.s32.totalorder %s131, %s134
    %p143 = scmp.eq.s32.totalorder %s16, 1
    %p144 = por %p142, %p143
    %p145 = scmp.ne.s32.totalorder %s134, %s135
    %p146 = scmp.eq.s32.totalorder %s16, 0
    %p147 = por %p145, %p146
    %p148 = scmp.ne.s32.totalorder %s134, %s135
    %p149 = scmp.eq.s32.totalorder %s17, 1
    %p150 = por %p148, %p149
    %p152 = scmp.ne.s32.totalorder %s135, %s151
    %p153 = scmp.eq.s32.totalorder %s17, 0
    %p154 = por %p152, %p153
    %p155 = scmp.le.s32.totalorder 1, %s11
    %p156 = scmp.lt.s32.totalorder %s11, 3
    %p157 = pnand %p155, %p156
    %p158 = pneg %p157
    // Predicated region
    $region9: #{yunet_backbone.3} parent=5 // pred_check
      _
    $region10: #{yunet_backbone.3} parent=5 // pred_check_branch
      %160 = sbr.rel (%p157) target = $region12
    $region11: #{yunet_backbone.3} parent=5 // pred_region
      %s161 = ssub.s32 %s11, 1
      // Predicated region
      $region13: #{yunet_backbone.3} parent=11 // pred_check
        %p162 = pneg %p58
      $region14: #{yunet_backbone.3} parent=11 // pred_check_branch
        %164 = sbr.rel (%p162) target = $region16
      $region15: #{yunet_backbone.3} parent=11 // pred_region
        _
      $region16: #{yunet_backbone.3} parent=11 // pred_fallthru
        _
      // Predicated region
      $region17: #{yunet_backbone.3} parent=11 // pred_check
        %p165 = pneg %p79
      $region18: #{yunet_backbone.3} parent=11 // pred_check_branch
        %167 = sbr.rel (%p165) target = $region20
      $region19: #{yunet_backbone.3} parent=11 // pred_region
        _
      $region20: #{yunet_backbone.3} parent=11 // pred_fallthru
        _
      // Predicated region
      $region21: #{yunet_backbone.3} parent=11 // pred_check
        %p168 = pneg %p100
      $region22: #{yunet_backbone.3} parent=11 // pred_check_branch
        %170 = sbr.rel (%p168) target = $region24
      $region23: #{yunet_backbone.3} parent=11 // pred_region
        _
      $region24: #{yunet_backbone.3} parent=11 // pred_fallthru
        _
      // Predicated region
      $region25: #{yunet_backbone.3} parent=11 // pred_check
        %p171 = pneg %p121
      $region26: #{yunet_backbone.3} parent=11 // pred_check_branch
        %173 = sbr.rel (%p171) target = $region28
      $region27: #{yunet_backbone.3} parent=11 // pred_region
        _
      $region28: #{yunet_backbone.3} parent=11 // pred_fallthru
        _
    $region12: #{yunet_backbone.3} parent=5 // pred_fallthru
      _
    %p174 = scmp.lt.s32.totalorder %s11, 2
    // Predicated region
    $region29: #{yunet_backbone.3} parent=5 // pred_check
      %p175 = pneg %p174
    $region30: #{yunet_backbone.3} parent=5 // pred_check_branch
      %177 = sbr.rel (%p175) target = $region32
    $region31: #{yunet_backbone.3} parent=5 // pred_region
      // Predicated region
      $region33: #{yunet_backbone.3} parent=31 // pred_check
        %p178 = pneg %p31
      $region34: #{yunet_backbone.3} parent=31 // pred_check_branch
        %180 = sbr.rel (%p178) target = $region36
      $region35: #{yunet_backbone.3} parent=31 // pred_region
        %p181 = scmp.lt.s32.totalorder %s11, 1
        %s182 = scalar_select %p181, %s11, 1
        %s183 = smul.addr %s182, 8
        %s184 = smul.addr %s183, 4
        %s185 = scalar_lea.vmem %s0, %s184
      $region36: #{yunet_backbone.3} parent=31 // pred_fallthru
        _
    $region32: #{yunet_backbone.3} parent=5 // pred_fallthru
      _
    %p186 = scmp.le.s32.totalorder 1, %s11
    %p187 = scmp.lt.s32.totalorder %s11, 3
    %p188 = pnand %p186, %p187
    %p189 = pneg %p188
    // Predicated region
    $region37: #{yunet_backbone.3} parent=5 // pred_check
      _
    $region38: #{yunet_backbone.3} parent=5 // pred_check_branch
      %191 = sbr.rel (%p188) target = $region40
    $region39: #{yunet_backbone.3} parent=5 // pred_region
      %s192 = ssub.s32 %s11, 1
      %p193 = scmp.lt.s32.totalorder %s16, 1
      %s194 = scalar_select %p193, %s16, 1
      %s195 = smul.addr %s194, 8
      %s196 = smul.addr %s195, 4
      %s197 = scalar_lea.vmem %s0, %s196
      %p198 = pneg %p37
      %p199 = pneg %p34
      %p200 = pneg %p58
      %p201 = pneg %p55
      %p202 = pneg %p79
      %p203 = pneg %p76
      %p204 = pneg %p100
      %p205 = pneg %p97
      %p206 = pneg %p121
      %p207 = pneg %p118
      %p208 = pneg %p147
      %p209 = pneg %p144
      %p210 = scmp.lt.s32.totalorder %s16, 1
      %s211 = scalar_select %p210, %s16, 1
      %s212 = smul.addr %s211, 4
      %s213 = smul.addr %s212, 2
      %s214 = scalar_lea.vmem %s5, %s213
      %p215 = scmp.lt.s32.totalorder %s16, 1
      %s216 = scalar_select %p215, %s16, 1
      %s217 = smul.addr %s216, 8
      %s218 = smul.addr %s217, 4
      %s219 = scalar_lea.vmem %s0, %s218
      %p220 = scmp.lt.s32.totalorder %s16, 1
      %s221 = scalar_select %p220, %s16, 1
      %s222 = smul.addr %s221, 4
      %s223 = smul.addr %s222, 2
      %s224 = scalar_lea.vmem %s5, %s223
      %v226 = vld [vmem:[%s219] sm:$0xf]
      %v227 = vld [vmem:[%s219 + $0x4] sm:$0xf]
      %v228 = vld [vmem:[%s219 + $0x8] sm:$0xf]
      %v229 = vld [vmem:[%s219 + $0xc] sm:$0xf]
      %v230 = vld [vmem:[%s219 + $0x10] sm:$0xf]
      %v231 = vld [vmem:[%s219 + $0x14] sm:$0xf]
      %v232 = vld [vmem:[%s219 + $0x18] sm:$0xf]
      %v233 = vld [vmem:[%s219 + $0x1c] sm:$0xf]
      %v234 = vld [vmem:[%s1] sm:$0xf]
      %v235 = vld [vmem:[%s1 + $0x4] sm:$0xf]
      %v236 = vld [vmem:[%s1 + $0x8] sm:$0xf]
      %v237 = vld [vmem:[%s1 + $0xc] sm:$0xf]
      %v238 = vld [vmem:[%s1 + $0x10] sm:$0x3]
      %v247 = vunpack.c.l.b16 %v226
      %v248 = vunpack.c.l.b16 %v227
      %v249 = vunpack.c.l.b16 %v228
      %v250 = vunpack.c.l.b16 %v229
      %v251 = vunpack.c.l.b16 %v230
      %v252 = vunpack.c.l.b16 %v231
      %v253 = vunpack.c.l.b16 %v232
      %v254 = vunpack.c.l.b16 %v233
      %v255 = vpack.c.b16 %v248, %v247
      %v256 = vpack.c.b16 %v250, %v249
      %v257 = vpack.c.b16 %v252, %v251
      %v258 = vpack.c.b16 %v254, %v253
      %v264 = vunpack.c.l.b16 %v234
      %v265 = vunpack.c.l.b16 %v235
      %v266 = vunpack.c.l.b16 %v236
      %v267 = vunpack.c.l.b16 %v237
      %v268 = vunpack.c.l.b16 %v238
      %v269 = vpack.c.b16 %v265, %v264
      %v270 = vpack.c.b16 %v267, %v266
      %v271 = vpack.c.b16 %v268, %v268
      %vm274 = vcmask 293888
      %v276 = vsel %vm274, %v255, 0
      %v279 = vsel %vm274, %v256, 0
      %v282 = vsel %vm274, %v257, 0
      %v285 = vsel %vm274, %v258, 0
      %vm287 = vcmask 1041408
      %v289 = vsel %vm287, %v271, 0
      %291 = vmatpush.bf16.msra.mxu0 0
      %292 = vmatpush.bf16.msra.mxu0 0
      %293 = vmatpush.bf16.msra.mxu0 0
      %294 = vmatpush.bf16.msra.mxu0 0
      %295 = vmatpush.bf16.msra.mxu0 0
      %296 = vmatpush.bf16.msra.mxu0 %v289
      %297 = vmatpush.bf16.msra.mxu0 %v270
      %298 = vmatpush.bf16.msra.mxu0 %v269
      %299 = vmatmul.bf16.gmra.mxu0 %v276
      %v300 = vpop.f32.mrf.mxu0
      %v301 = vadd.f32 0.0, %v300
      %v302 = vpop.f32.mrf.mxu0
      %v303 = vadd.f32 0.0, %v302
      %304 = vmatmul.bf16.gmra.mxu0 %v279
      %v305 = vpop.f32.mrf.mxu0
      %v306 = vadd.f32 0.0, %v305
      %v307 = vpop.f32.mrf.mxu0
      %v308 = vadd.f32 0.0, %v307
      %309 = vmatmul.bf16.gmra.mxu0 %v282
      %v310 = vpop.f32.mrf.mxu0
      %v311 = vadd.f32 0.0, %v310
      %v312 = vpop.f32.mrf.mxu0
      %v313 = vadd.f32 0.0, %v312
      %314 = vmatmul.bf16.gmra.mxu0 %v285
      %v315 = vpop.f32.mrf.mxu0
      %v316 = vadd.f32 0.0, %v315
      %v317 = vpop.f32.mrf.mxu0
      %v318 = vadd.f32 0.0, %v317
      %319 = vdwg.mxu0
      %v320 = vld [vmem:[%s2] sm:$0x1]
      %v321 = vperm.slane %v320, 0
      %v322 = vmul.f32 %v301, %v321
      %v323 = vmul.f32 %v303, %v321
      %v324 = vmul.f32 %v306, %v321
      %v325 = vmul.f32 %v308, %v321
      %v326 = vmul.f32 %v311, %v321
      %v327 = vmul.f32 %v313, %v321
      %v328 = vmul.f32 %v316, %v321
      %v329 = vmul.f32 %v318, %v321
      %v330 = vld [vmem:[%s2 + $0x1] sm:$0x1]
      %v331 = vperm.slane %v330, 0
      %v332 = vadd.f32 %v322, %v331
      %v333 = vadd.f32 %v323, %v331
      %v334 = vadd.f32 %v324, %v331
      %v335 = vadd.f32 %v325, %v331
      %v336 = vadd.f32 %v326, %v331
      %v337 = vadd.f32 %v327, %v331
      %v338 = vadd.f32 %v328, %v331
      %v339 = vadd.f32 %v329, %v331
      %v340 = vmax.f32 %v332, 0.0
      %v341 = vmax.f32 %v333, 0.0
      %v342 = vmax.f32 %v334, 0.0
      %v343 = vmax.f32 %v335, 0.0
      %v344 = vmax.f32 %v336, 0.0
      %v345 = vmax.f32 %v337, 0.0
      %v346 = vmax.f32 %v338, 0.0
      %v347 = vmax.f32 %v339, 0.0
      %v348 = vpack.c.bf16 %v341, %v340
      %v349 = vpack.c.bf16 %v343, %v342
      %v350 = vpack.c.bf16 %v345, %v344
      %v351 = vpack.c.bf16 %v347, %v346
      %v352 = vld [vmem:[%s3] sm:$0xf]
      %v353 = vld [vmem:[%s4 + $0x9] sm:$0x1]
      %v354 = vperm.slane %v353, 0
      %vm355 = vcmask 64512
      %v357 = vsel %vm355, %v348, 0
      %v360 = vsel %vm355, %v349, 0
      %v363 = vsel %vm355, %v350, 0
      %v366 = vsel %vm355, %v351, 0
      %vm368 = vcmask 1043456
      %v370 = vsel %vm368, %v352, 0
      %372 = vmatpush.bf16.msra.mxu0 0
      %373 = vmatpush.bf16.msra.mxu0 0
      %374 = vmatpush.bf16.msra.mxu0 0
      %375 = vmatpush.bf16.msra.mxu0 0
      %376 = vmatpush.bf16.msra.mxu0 0
      %377 = vmatpush.bf16.msra.mxu0 0
      %378 = vmatpush.bf16.msra.mxu0 0
      %379 = vmatpush.bf16.msra.mxu0 %v370
      %380 = vmatmul.bf16.gmra.mxu0 %v357
      %v381 = vpop.f32.mrf.mxu0
      %v382 = vadd.f32 %v354, %v381
      %v383 = vpop.f32.mrf.mxu0
      %v384 = vadd.f32 %v354, %v383
      %385 = vmatmul.bf16.gmra.mxu0 %v360
      %v386 = vpop.f32.mrf.mxu0
      %v387 = vadd.f32 %v354, %v386
      %v388 = vpop.f32.mrf.mxu0
      %v389 = vadd.f32 %v354, %v388
      %390 = vmatmul.bf16.gmra.mxu0 %v363
      %v391 = vpop.f32.mrf.mxu0
      %v392 = vadd.f32 %v354, %v391
      %v393 = vpop.f32.mrf.mxu0
      %v394 = vadd.f32 %v354, %v393
      %395 = vmatmul.bf16.gmra.mxu0 %v366
      %v396 = vpop.f32.mrf.mxu0
      %v397 = vadd.f32 %v354, %v396
      %v398 = vpop.f32.mrf.mxu0
      %v399 = vadd.f32 %v354, %v398
      %400 = vdwg.mxu0
      %vm401 = vcmask 130048
      %402 = vst.msk [vmem:[#allocation2] sm:$0xff] %vm401, 0.0
      %vm403 = vcmask 123904
      %404 = vst.msk [vmem:[#allocation2 + $0x8] sm:$0x3] %vm403, 0.0
      %s405 = scalar_lea.vmem [#allocation2], 144
      %406 = vst.msk [vmem:[%s405] sm:$0xff] %vm401, 0.0
      %407 = vst.msk [vmem:[%s405 + $0x8] sm:$0x3] %vm403, 0.0
      %vm408 = vcmask 122880
      %409 = vst.msk [vmem:[#allocation2] sm:$0x1] %vm408, 0.0
      %410 = vst.msk [vmem:[#allocation2 + $0x10] sm:$0x1] %vm408, 0.0
      %411 = vst.msk [vmem:[#allocation2 + $0x20] sm:$0x1] %vm408, 0.0
      %412 = vst.msk [vmem:[#allocation2 + $0x30] sm:$0x1] %vm408, 0.0
      %413 = vst.msk [vmem:[#allocation2 + $0x40] sm:$0x1] %vm408, 0.0
      %414 = vst.msk [vmem:[#allocation2 + $0x50] sm:$0x1] %vm408, 0.0
      %415 = vst.msk [vmem:[#allocation2 + $0x60] sm:$0x1] %vm408, 0.0
      %416 = vst.msk [vmem:[#allocation2 + $0x70] sm:$0x1] %vm408, 0.0
      %417 = vst.msk [vmem:[#allocation2 + $0x80] sm:$0x1] %vm408, 0.0
      %418 = vst.msk [vmem:[#allocation2 + $0x90] sm:$0x1] %vm408, 0.0
      %419 = vst.msk [vmem:[#allocation2 + $0x9] sm:$0x1] %vm408, 0.0
      %420 = vst.msk [vmem:[#allocation2 + $0x19] sm:$0x1] %vm408, 0.0
      %421 = vst.msk [vmem:[#allocation2 + $0x29] sm:$0x1] %vm408, 0.0
      %422 = vst.msk [vmem:[#allocation2 + $0x39] sm:$0x1] %vm408, 0.0
      %423 = vst.msk [vmem:[#allocation2 + $0x49] sm:$0x1] %vm408, 0.0
      %424 = vst.msk [vmem:[#allocation2 + $0x59] sm:$0x1] %vm408, 0.0
      %425 = vst.msk [vmem:[#allocation2 + $0x69] sm:$0x1] %vm408, 0.0
      %426 = vst.msk [vmem:[#allocation2 + $0x79] sm:$0x1] %vm408, 0.0
      %427 = vst.msk [vmem:[#allocation2 + $0x89] sm:$0x1] %vm408, 0.0
      %428 = vst.msk [vmem:[#allocation2 + $0x99] sm:$0x1] %vm408, 0.0
      %s429 = scalar_lea.vmem [#allocation2], 16
      %430 = vst.msk [vmem:[%s429 + $0x1] sm:$0xff] %vm401, %v382
      %431 = vst.msk [vmem:[%s429 + $0x11] sm:$0xff] %vm401, %v384
      %432 = vst.msk [vmem:[%s429 + $0x21] sm:$0xff] %vm401, %v387
      %433 = vst.msk [vmem:[%s429 + $0x31] sm:$0xff] %vm401, %v389
      %434 = vst.msk [vmem:[%s429 + $0x41] sm:$0xff] %vm401, %v392
      %435 = vst.msk [vmem:[%s429 + $0x51] sm:$0xff] %vm401, %v394
      %436 = vst.msk [vmem:[%s429 + $0x61] sm:$0xff] %vm401, %v397
      %437 = vst.msk [vmem:[%s429 + $0x71] sm:$0xff] %vm401, %v399
      %v438 = vld [vmem:[#allocation2] sm:$0xff]
      %v439 = vld [vmem:[#allocation2 + $0x10] sm:$0xff]
      %v440 = vld [vmem:[#allocation2 + $0x20] sm:$0xff]
      %v441 = vld [vmem:[#allocation2 + $0x30] sm:$0xff]
      %v442 = vld [vmem:[#allocation2 + $0x40] sm:$0xff]
      %v443 = vld [vmem:[#allocation2 + $0x50] sm:$0xff]
      %v444 = vld [vmem:[#allocation2 + $0x60] sm:$0xff]
      %v445 = vld [vmem:[#allocation2 + $0x70] sm:$0xff]
      %v446 = vld [vmem:[#allocation2 + $0x80] sm:$0xff]
      %v447 = vld [vmem:[#allocation2 + $0x90] sm:$0xff]
      %v448 = vld [vmem:[%s4] sm:$0x1]
      %v449 = vperm.slane %v448, 0
      %v450 = vmul.f32 %v438, %v449
      %v451 = vmul.f32 %v439, %v449
      %v452 = vmul.f32 %v440, %v449
      %v453 = vmul.f32 %v441, %v449
      %v454 = vmul.f32 %v442, %v449
      %v455 = vmul.f32 %v443, %v449
      %v456 = vmul.f32 %v444, %v449
      %v457 = vmul.f32 %v445, %v449
      %v458 = vadd.f32 %v450, 0.0
      %v459 = vadd.f32 %v451, 0.0
      %v460 = vadd.f32 %v452, 0.0
      %v461 = vadd.f32 %v453, 0.0
      %v462 = vadd.f32 %v454, 0.0
      %v463 = vadd.f32 %v455, 0.0
      %v464 = vadd.f32 %v456, 0.0
      %v465 = vadd.f32 %v457, 0.0
      %v466 = vld [vmem:[%s4 + $0x3] sm:$0x1]
      %v467 = vperm.slane %v466, 0
      %v468 = vmul.f32 %v439, %v467
      %v469 = vmul.f32 %v440, %v467
      %v470 = vmul.f32 %v441, %v467
      %v471 = vmul.f32 %v442, %v467
      %v472 = vmul.f32 %v443, %v467
      %v473 = vmul.f32 %v444, %v467
      %v474 = vmul.f32 %v445, %v467
      %v475 = vmul.f32 %v446, %v467
      %v476 = vadd.f32 %v458, %v468
      %v477 = vadd.f32 %v459, %v469
      %v478 = vadd.f32 %v460, %v470
      %v479 = vadd.f32 %v461, %v471
      %v480 = vadd.f32 %v462, %v472
      %v481 = vadd.f32 %v463, %v473
      %v482 = vadd.f32 %v464, %v474
      %v483 = vadd.f32 %v465, %v475
      %v484 = vld [vmem:[%s4 + $0x6] sm:$0x1]
      %v485 = vperm.slane %v484, 0
      %v486 = vmul.f32 %v440, %v485
      %v487 = vmul.f32 %v441, %v485
      %v488 = vmul.f32 %v442, %v485
      %v489 = vmul.f32 %v443, %v485
      %v490 = vmul.f32 %v444, %v485
      %v491 = vmul.f32 %v445, %v485
      %v492 = vmul.f32 %v446, %v485
      %v493 = vmul.f32 %v447, %v485
      %v494 = vadd.f32 %v476, %v486
      %v495 = vadd.f32 %v477, %v487
      %v496 = vadd.f32 %v478, %v488
      %v497 = vadd.f32 %v479, %v489
      %v498 = vadd.f32 %v480, %v490
      %v499 = vadd.f32 %v481, %v491
      %v500 = vadd.f32 %v482, %v492
      %v501 = vadd.f32 %v483, %v493
      %v502 = vld [vmem:[#allocation2 + $0x1] sm:$0xff]
      %v503 = vld [vmem:[#allocation2 + $0x11] sm:$0xff]
      %v504 = vld [vmem:[#allocation2 + $0x21] sm:$0xff]
      %v505 = vld [vmem:[#allocation2 + $0x31] sm:$0xff]
      %v506 = vld [vmem:[#allocation2 + $0x41] sm:$0xff]
      %v507 = vld [vmem:[#allocation2 + $0x51] sm:$0xff]
      %v508 = vld [vmem:[#allocation2 + $0x61] sm:$0xff]
      %v509 = vld [vmem:[#allocation2 + $0x71] sm:$0xff]
      %v510 = vld [vmem:[#allocation2 + $0x81] sm:$0xff]
      %v511 = vld [vmem:[#allocation2 + $0x91] sm:$0xff]
      %v512 = vld [vmem:[%s4 + $0x1] sm:$0x1]
      %v513 = vperm.slane %v512, 0
      %v514 = vmul.f32 %v502, %v513
      %v515 = vmul.f32 %v503, %v513
      %v516 = vmul.f32 %v504, %v513
      %v517 = vmul.f32 %v505, %v513
      %v518 = vmul.f32 %v506, %v513
      %v519 = vmul.f32 %v507, %v513
      %v520 = vmul.f32 %v508, %v513
      %v521 = vmul.f32 %v509, %v513
      %v522 = vadd.f32 %v494, %v514
      %v523 = vadd.f32 %v495, %v515
      %v524 = vadd.f32 %v496, %v516
      %v525 = vadd.f32 %v497, %v517
      %v526 = vadd.f32 %v498, %v518
      %v527 = vadd.f32 %v499, %v519
      %v528 = vadd.f32 %v500, %v520
      %v529 = vadd.f32 %v501, %v521
      %v530 = vld [vmem:[%s4 + $0x4] sm:$0x1]
      %v531 = vperm.slane %v530, 0
      %v532 = vmul.f32 %v503, %v531
      %v533 = vmul.f32 %v504, %v531
      %v534 = vmul.f32 %v505, %v531
      %v535 = vmul.f32 %v506, %v531
      %v536 = vmul.f32 %v507, %v531
      %v537 = vmul.f32 %v508, %v531
      %v538 = vmul.f32 %v509, %v531
      %v539 = vmul.f32 %v510, %v531
      %v540 = vadd.f32 %v522, %v532
      %v541 = vadd.f32 %v523, %v533
      %v542 = vadd.f32 %v524, %v534
      %v543 = vadd.f32 %v525, %v535
      %v544 = vadd.f32 %v526, %v536
      %v545 = vadd.f32 %v527, %v537
      %v546 = vadd.f32 %v528, %v538
      %v547 = vadd.f32 %v529, %v539
      %v548 = vld [vmem:[%s4 + $0x7] sm:$0x1]
      %v549 = vperm.slane %v548, 0
      %v550 = vmul.f32 %v504, %v549
      %v551 = vmul.f32 %v505, %v549
      %v552 = vmul.f32 %v506, %v549
      %v553 = vmul.f32 %v507, %v549
      %v554 = vmul.f32 %v508, %v549
      %v555 = vmul.f32 %v509, %v549
      %v556 = vmul.f32 %v510, %v549
      %v557 = vmul.f32 %v511, %v549
      %v558 = vadd.f32 %v540, %v550
      %v559 = vadd.f32 %v541, %v551
      %v560 = vadd.f32 %v542, %v552
      %v561 = vadd.f32 %v543, %v553
      %v562 = vadd.f32 %v544, %v554
      %v563 = vadd.f32 %v545, %v555
      %v564 = vadd.f32 %v546, %v556
      %v565 = vadd.f32 %v547, %v557
      %v566 = vld [vmem:[#allocation2 + $0x2] sm:$0xff]
      %v567 = vld [vmem:[#allocation2 + $0x12] sm:$0xff]
      %v568 = vld [vmem:[#allocation2 + $0x22] sm:$0xff]
      %v569 = vld [vmem:[#allocation2 + $0x32] sm:$0xff]
      %v570 = vld [vmem:[#allocation2 + $0x42] sm:$0xff]
      %v571 = vld [vmem:[#allocation2 + $0x52] sm:$0xff]
      %v572 = vld [vmem:[#allocation2 + $0x62] sm:$0xff]
      %v573 = vld [vmem:[#allocation2 + $0x72] sm:$0xff]
      %v574 = vld [vmem:[#allocation2 + $0x82] sm:$0xff]
      %v575 = vld [vmem:[#allocation2 + $0x92] sm:$0xff]
      %v576 = vld [vmem:[%s4 + $0x2] sm:$0x1]
      %v577 = vperm.slane %v576, 0
      %v578 = vmul.f32 %v566, %v577
      %v579 = vmul.f32 %v567, %v577
      %v580 = vmul.f32 %v568, %v577
      %v581 = vmul.f32 %v569, %v577
      %v582 = vmul.f32 %v570, %v577
      %v583 = vmul.f32 %v571, %v577
      %v584 = vmul.f32 %v572, %v577
      %v585 = vmul.f32 %v573, %v577
      %v586 = vadd.f32 %v558, %v578
      %v587 = vadd.f32 %v559, %v579
      %v588 = vadd.f32 %v560, %v580
      %v589 = vadd.f32 %v561, %v581
      %v590 = vadd.f32 %v562, %v582
      %v591 = vadd.f32 %v563, %v583
      %v592 = vadd.f32 %v564, %v584
      %v593 = vadd.f32 %v565, %v585
      %v594 = vld [vmem:[%s4 + $0x5] sm:$0x1]
      %v595 = vperm.slane %v594, 0
      %v596 = vmul.f32 %v567, %v595
      %v597 = vmul.f32 %v568, %v595
      %v598 = vmul.f32 %v569, %v595
      %v599 = vmul.f32 %v570, %v595
      %v600 = vmul.f32 %v571, %v595
      %v601 = vmul.f32 %v572, %v595
      %v602 = vmul.f32 %v573, %v595
      %v603 = vmul.f32 %v574, %v595
      %v604 = vadd.f32 %v586, %v596
      %v605 = vadd.f32 %v587, %v597
      %v606 = vadd.f32 %v588, %v598
      %v607 = vadd.f32 %v589, %v599
      %v608 = vadd.f32 %v590, %v600
      %v609 = vadd.f32 %v591, %v601
      %v610 = vadd.f32 %v592, %v602
      %v611 = vadd.f32 %v593, %v603
      %v612 = vld [vmem:[%s4 + $0x8] sm:$0x1]
      %v613 = vperm.slane %v612, 0
      %v614 = vmul.f32 %v568, %v613
      %v615 = vmul.f32 %v569, %v613
      %v616 = vmul.f32 %v570, %v613
      %v617 = vmul.f32 %v571, %v613
      %v618 = vmul.f32 %v572, %v613
      %v619 = vmul.f32 %v573, %v613
      %v620 = vmul.f32 %v574, %v613
      %v621 = vmul.f32 %v575, %v613
      %v622 = vadd.f32 %v604, %v614
      %v623 = vadd.f32 %v605, %v615
      %v624 = vadd.f32 %v606, %v616
      %v625 = vadd.f32 %v607, %v617
      %v626 = vadd.f32 %v608, %v618
      %v627 = vadd.f32 %v609, %v619
      %v628 = vadd.f32 %v610, %v620
      %v629 = vadd.f32 %v611, %v621
      %v630 = vld [vmem:[%s4 + $0xa] sm:$0x1]
      %v631 = vperm.slane %v630, 0
      %v632 = vmul.f32 %v622, %v631
      %v633 = vmul.f32 %v623, %v631
      %v634 = vmul.f32 %v624, %v631
      %v635 = vmul.f32 %v625, %v631
      %v636 = vmul.f32 %v626, %v631
      %v637 = vmul.f32 %v627, %v631
      %v638 = vmul.f32 %v628, %v631
      %v639 = vmul.f32 %v629, %v631
      %v640 = vld [vmem:[%s4 + $0xb] sm:$0x1]
      %v641 = vperm.slane %v640, 0
      %v642 = vadd.f32 %v632, %v641
      %v643 = vadd.f32 %v633, %v641
      %v644 = vadd.f32 %v634, %v641
      %v645 = vadd.f32 %v635, %v641
      %v646 = vadd.f32 %v636, %v641
      %v647 = vadd.f32 %v637, %v641
      %v648 = vadd.f32 %v638, %v641
      %v649 = vadd.f32 %v639, %v641
      %v650 = vmax.f32 %v642, 0.0
      %v651 = vmax.f32 %v643, 0.0
      %v652 = vmax.f32 %v644, 0.0
      %v653 = vmax.f32 %v645, 0.0
      %v654 = vmax.f32 %v646, 0.0
      %v655 = vmax.f32 %v647, 0.0
      %v656 = vmax.f32 %v648, 0.0
      %v657 = vmax.f32 %v649, 0.0
      %v658 = vmax.f32 %v650, %v651
      %v659 = vmax.f32 %v652, %v653
      %v660 = vmax.f32 %v654, %v655
      %v661 = vmax.f32 %v656, %v657
      %v666 = vrot.slane %v658, 1
      %v667 = vrot.slane %v659, 1
      %v668 = vrot.slane %v660, 1
      %v669 = vrot.slane %v661, 1
      %v674 = vmax.f32 %v658, %v666
      %v675 = vmax.f32 %v659, %v667
      %v676 = vmax.f32 %v660, %v668
      %v677 = vmax.f32 %v661, %v669
      %v682 = vrot.slane %v674, 1
      %v683 = vrot.slane %v675, 1
      %v684 = vrot.slane %v676, 1
      %v685 = vrot.slane %v677, 1
      %v690 = vrot.slane %v674, 2
      %v691 = vrot.slane %v675, 2
      %v692 = vrot.slane %v676, 2
      %v693 = vrot.slane %v677, 2
      %v698 = vrot.slane %v674, 3
      %v699 = vrot.slane %v675, 3
      %v700 = vrot.slane %v676, 3
      %v701 = vrot.slane %v677, 3
      %vm706 = vcmask 1040384
      %v707 = vsel %vm706, %v674, %v682
      %v708 = vsel %vm706, %v675, %v683
      %v709 = vsel %vm706, %v676, %v684
      %v710 = vsel %vm706, %v677, %v685
      %v711 = vsel %vm287, %v707, %v690
      %v712 = vsel %vm287, %v708, %v691
      %v713 = vsel %vm287, %v709, %v692
      %v714 = vsel %vm287, %v710, %v693
      %vm715 = vcmask 1042432
      %v716 = vsel %vm715, %v711, %v698
      %v717 = vsel %vm715, %v712, %v699
      %v718 = vsel %vm715, %v713, %v700
      %v719 = vsel %vm715, %v714, %v701
      %v720 = vpack.c.bf16 %v716, %v716
      %v721 = vpack.c.bf16 %v717, %v717
      %v722 = vpack.c.bf16 %v718, %v718
      %v723 = vpack.c.bf16 %v719, %v719
      %724 = vst.msk [vmem:[%s224] sm:$0x3] %vm403, %v720
      %725 = vst.msk [vmem:[%s224 + $0x2] sm:$0x3] %vm403, %v721
      %726 = vst.msk [vmem:[%s224 + $0x4] sm:$0x3] %vm403, %v722
      %727 = vst.msk [vmem:[%s224 + $0x6] sm:$0x3] %vm403, %v723
      %p728 = scmp.lt.s32.totalorder %s16, 1
      %s729 = scalar_select %p728, %s16, 1
      %s730 = smul.addr %s729, 4
      %s731 = smul.addr %s730, 2
      %s732 = scalar_lea.vmem %s5, %s731
      // Predicated region
      $region41: #{yunet_backbone.3} parent=39 // pred_check
        %p733 = pneg %p144
      $region42: #{yunet_backbone.3} parent=39 // pred_check_branch
        %735 = sbr.rel (%p733) target = $region44
      $region43: #{yunet_backbone.3} parent=39 // pred_region
        _
      $region44: #{yunet_backbone.3} parent=39 // pred_fallthru
        _
    $region40: #{yunet_backbone.3} parent=5 // pred_fallthru
      _
    %p736 = scmp.le.s32.totalorder 2, %s11
    // Predicated region
    $region45: #{yunet_backbone.3} parent=5 // pred_check
      %p737 = pneg %p736
    $region46: #{yunet_backbone.3} parent=5 // pred_check_branch
      %739 = sbr.rel (%p737) target = $region48
    $region47: #{yunet_backbone.3} parent=5 // pred_region
      %s740 = ssub.s32 %s11, 2
      // Predicated region
      $region49: #{yunet_backbone.3} parent=47 // pred_check
        %p741 = pneg %p150
      $region50: #{yunet_backbone.3} parent=47 // pred_check_branch
        %743 = sbr.rel (%p741) target = $region52
      $region51: #{yunet_backbone.3} parent=47 // pred_region
        %p744 = scmp.lt.s32.totalorder %s17, 1
        %s745 = scalar_select %p744, %s17, 1
        %s746 = smul.addr %s745, 4
        %s747 = smul.addr %s746, 2
        %s748 = scalar_lea.vmem %s5, %s747
      $region52: #{yunet_backbone.3} parent=47 // pred_fallthru
        _
    $region48: #{yunet_backbone.3} parent=5 // pred_fallthru
      _
  $region6: #{yunet_backbone.3} parent=0 // loop_footer
    %s15 = sadd.s32 1, %s11
  $region7: #{yunet_backbone.3} parent=0 // loop_footer_branch
    %10 = sbr.rel target = $region3
  $region8: #{yunet_backbone.3} parent=0 // loop_exit
    _

// kernel: yunet_backbone.4
$region0: #{yunet_backbone.4}
  #allocation0 [shape = 'u32[]', space=smem, size = 0x4, offset = 0x4, fixed_abs, tag = 'smem constant byte address 0x4 - core index']
  #allocation1 [shape = 'u32[72,128]{1,0:T(1,128)}', space=vmem, size = 0x9000, scoped, tag = 'internal scratch']
  #allocation2 [shape = 'f32[6,6,16]{2,1,0:T(8,128)}', space=vmem, size = 0x6000, scoped, tag = 'scratch operand']
  #allocation3 [shape = 'f32[6,6,32]{2,1,0:T(8,128)}', space=vmem, size = 0x6000, scoped, tag = 'scratch operand']
  %s0 = inlined_call_operand.vmem [shape: bf16[2,16,16], index: 0, kind: input, shape index: {}]
  %s1 = inlined_call_operand.vmem [shape: bf16[16,16], index: 1, kind: input, shape index: {}]
  %s2 = inlined_call_operand.vmem [shape: f32[12,16], index: 2, kind: input, shape index: {}]
  %s3 = inlined_call_operand.vmem [shape: bf16[16,32], index: 3, kind: input, shape index: {}]
  %s4 = inlined_call_operand.vmem [shape: f32[12,32], index: 4, kind: input, shape index: {}]
  %s5 = inlined_call_operand.vmem [shape: bf16[2,4,4,32], index: 5, kind: output, shape index: {0}]
  %s6 = inlined_call_operand.vmem [shape: bf16[2,2,2,32], index: 6, kind: output, shape index: {1}]
  %7 = xla_tuple %s5, %s6
  %s8 = sld [smem:[#allocation0]]
  $region61: #{yunet_backbone.4} parent=0
    _
  %s10 = ssub.s32 1, %s8
  %s11 = scalar_select 0, %s10, %s8
  loop: start=0, step=1, limit=4
  $region2: #{yunet_backbone.4} parent=0 // loop_pre_header
    _
  $region3: #{yunet_backbone.4} parent=0 // loop_header
    %s13 = sphi 0, %s17
    %p14 = scmp.ge.s32.totalorder %s13, 4
    %s23 = sphi 0, %s25
    %s26 = sphi 0, %s23
    %s27 = sphi 0, %s26
    %s43 = sphi 0, %s27
    %s47 = sphi 0, %s47
    %s49 = sphi 0, %s47
    %s50 = sphi 0, %s49
    %s64 = sphi 0, %s50
    %s68 = sphi 0, %s68
    %s70 = sphi 0, %s68
    %s71 = sphi 0, %s70
    %s85 = sphi 0, %s71
    %s89 = sphi 0, %s89
    %s91 = sphi 0, %s89
    %s92 = sphi 0, %s91
    %s106 = sphi 0, %s92
    %s110 = sphi 0, %s110
    %s112 = sphi 0, %s110
    %s113 = sphi 0, %s112
    %s127 = sphi 0, %s113
    %s133 = sphi 0, %s135
    %s136 = sphi 0, %s133
    %s137 = sphi 0, %s136
    %s153 = sphi 0, %s137
    %s159 = sphi 0, %s161
    %s162 = sphi 0, %s159
    %s163 = sphi 0, %s162
    %s179 = sphi 0, %s163
  $region4: #{yunet_backbone.4} parent=0 // loop_header_branch
    %16 = sbr.rel (%p14) target = $region8
  $region5: #{yunet_backbone.4} parent=0 // loop_body
    %s18 = ssub.s32 %s13, 1
    %s19 = ssub.s32 %s13, 2
    %s20 = sadd.s32 %s13, 1
    %s21 = ssub.s32 %s13, %s20
    %p22 = scmp.eq.s32.totalorder %s21, 0
    %s24 = sadd.s32 %s23, 1
    %s25 = scalar_select %p22, %s23, %s24
    %p28 = pneg %p22
    %p29 = scmp.eq.s32.totalorder %s13, 1
    %p30 = por %p28, %p29
    %p31 = scmp.ne.s32.totalorder %s23, %s26
    %p32 = scmp.eq.s32.totalorder %s13, 0
    %p33 = por %p31, %p32
    %p34 = scmp.ne.s32.totalorder %s23, %s26
    %p35 = scmp.eq.s32.totalorder %s18, 1
    %p36 = por %p34, %p35
    %p37 = scmp.ne.s32.totalorder %s26, %s27
    %p38 = scmp.eq.s32.totalorder %s18, 0
    %p39 = por %p37, %p38
    %p40 = scmp.ne.s32.totalorder %s26, %s27
    %p41 = scmp.eq.s32.totalorder %s19, 1
    %p42 = por %p40, %p41
    %p44 = scmp.ne.s32.totalorder %s27, %s43
    %p45 = scmp.eq.s32.totalorder %s19, 0
    %p46 = por %p44, %p45
    %s48 = sadd.s32 %s47, 1
    %p51 = scmp.eq.s32.totalorder %s13, 1
    %p52 = scmp.ne.s32.totalorder %s47, %s49
    %p53 = scmp.eq.s32.totalorder %s13, 0
    %p54 = por %p52, %p53
    %p55 = scmp.ne.s32.totalorder %s47, %s49
    %p56 = scmp.eq.s32.totalorder %s18, 1
    %p57 = por %p55, %p56
    %p58 = scmp.ne.s32.totalorder %s49, %s50
    %p59 = scmp.eq.s32.totalorder %s18, 0
    %p60 = por %p58, %p59
    %p61 = scmp.ne.s32.totalorder %s49, %s50
    %p62 = scmp.eq.s32.totalorder %s19, 1
    %p63 = por %p61, %p62
    %p65 = scmp.ne.s32.totalorder %s50, %s64
    %p66 = scmp.eq.s32.totalorder %s19, 0
    %p67 = por %p65, %p66
    %s69 = sadd.s32 %s68, 1
    %p72 = scmp.eq.s32.totalorder %s13, 1
    %p73 = scmp.ne.s32.totalorder %s68, %s70
    %p74 = scmp.eq.s32.totalorder %s13, 0
    %p75 = por %p73, %p74
    %p76 = scmp.ne.s32.totalorder %s68, %s70
    %p77 = scmp.eq.s32.totalorder %s18, 1
    %p78 = por %p76, %p77
    %p79 = scmp.ne.s32.totalorder %s70, %s71
    %p80 = scmp.eq.s32.totalorder %s18, 0
    %p81 = por %p79, %p80
    %p82 = scmp.ne.s32.totalorder %s70, %s71
    %p83 = scmp.eq.s32.totalorder %s19, 1
    %p84 = por %p82, %p83
    %p86 = scmp.ne.s32.totalorder %s71, %s85
    %p87 = scmp.eq.s32.totalorder %s19, 0
    %p88 = por %p86, %p87
    %s90 = sadd.s32 %s89, 1
    %p93 = scmp.eq.s32.totalorder %s13, 1
    %p94 = scmp.ne.s32.totalorder %s89, %s91
    %p95 = scmp.eq.s32.totalorder %s13, 0
    %p96 = por %p94, %p95
    %p97 = scmp.ne.s32.totalorder %s89, %s91
    %p98 = scmp.eq.s32.totalorder %s18, 1
    %p99 = por %p97, %p98
    %p100 = scmp.ne.s32.totalorder %s91, %s92
    %p101 = scmp.eq.s32.totalorder %s18, 0
    %p102 = por %p100, %p101
    %p103 = scmp.ne.s32.totalorder %s91, %s92
    %p104 = scmp.eq.s32.totalorder %s19, 1
    %p105 = por %p103, %p104
    %p107 = scmp.ne.s32.totalorder %s92, %s106
    %p108 = scmp.eq.s32.totalorder %s19, 0
    %p109 = por %p107, %p108
    %s111 = sadd.s32 %s110, 1
    %p114 = scmp.eq.s32.totalorder %s13, 1
    %p115 = scmp.ne.s32.totalorder %s110, %s112
    %p116 = scmp.eq.s32.totalorder %s13, 0
    %p117 = por %p115, %p116
    %p118 = scmp.ne.s32.totalorder %s110, %s112
    %p119 = scmp.eq.s32.totalorder %s18, 1
    %p120 = por %p118, %p119
    %p121 = scmp.ne.s32.totalorder %s112, %s113
    %p122 = scmp.eq.s32.totalorder %s18, 0
    %p123 = por %p121, %p122
    %p124 = scmp.ne.s32.totalorder %s112, %s113
    %p125 = scmp.eq.s32.totalorder %s19, 1
    %p126 = por %p124, %p125
    %p128 = scmp.ne.s32.totalorder %s113, %s127
    %p129 = scmp.eq.s32.totalorder %s19, 0
    %p130 = por %p128, %p129
    %s131 = ssub.s32 %s13, %s20
    %p132 = scmp.eq.s32.totalorder %s131, 0
    %s134 = sadd.s32 %s133, 1
    %s135 = scalar_select %p132, %s133, %s134
    %p138 = pneg %p132
    %p139 = scmp.eq.s32.totalorder %s13, 1
    %p140 = por %p138, %p139
    %p141 = scmp.ne.s32.totalorder %s133, %s136
    %p142 = scmp.eq.s32.totalorder %s13, 0
    %p143 = por %p141, %p142
    %p144 = scmp.ne.s32.totalorder %s133, %s136
    %p145 = scmp.eq.s32.totalorder %s18, 1
    %p146 = por %p144, %p145
    %p147 = scmp.ne.s32.totalorder %s136, %s137
    %p148 = scmp.eq.s32.totalorder %s18, 0
    %p149 = por %p147, %p148
    %p150 = scmp.ne.s32.totalorder %s136, %s137
    %p151 = scmp.eq.s32.totalorder %s19, 1
    %p152 = por %p150, %p151
    %p154 = scmp.ne.s32.totalorder %s137, %s153
    %p155 = scmp.eq.s32.totalorder %s19, 0
    %p156 = por %p154, %p155
    %s157 = ssub.s32 %s13, %s20
    %p158 = scmp.eq.s32.totalorder %s157, 0
    %s160 = sadd.s32 %s159, 1
    %s161 = scalar_select %p158, %s159, %s160
    %p164 = pneg %p158
    %p165 = scmp.eq.s32.totalorder %s13, 1
    %p166 = por %p164, %p165
    %p167 = scmp.ne.s32.totalorder %s159, %s162
    %p168 = scmp.eq.s32.totalorder %s13, 0
    %p169 = por %p167, %p168
    %p170 = scmp.ne.s32.totalorder %s159, %s162
    %p171 = scmp.eq.s32.totalorder %s18, 1
    %p172 = por %p170, %p171
    %p173 = scmp.ne.s32.totalorder %s162, %s163
    %p174 = scmp.eq.s32.totalorder %s18, 0
    %p175 = por %p173, %p174
    %p176 = scmp.ne.s32.totalorder %s162, %s163
    %p177 = scmp.eq.s32.totalorder %s19, 1
    %p178 = por %p176, %p177
    %p180 = scmp.ne.s32.totalorder %s163, %s179
    %p181 = scmp.eq.s32.totalorder %s19, 0
    %p182 = por %p180, %p181
    %p183 = scmp.le.s32.totalorder 1, %s13
    %p184 = scmp.lt.s32.totalorder %s13, 3
    %p185 = pnand %p183, %p184
    %p186 = pneg %p185
    // Predicated region
    $region9: #{yunet_backbone.4} parent=5 // pred_check
      _
    $region10: #{yunet_backbone.4} parent=5 // pred_check_branch
      %188 = sbr.rel (%p185) target = $region12
    $region11: #{yunet_backbone.4} parent=5 // pred_region
      %s189 = ssub.s32 %s13, 1
      // Predicated region
      $region13: #{yunet_backbone.4} parent=11 // pred_check
        %p190 = pneg %p60
      $region14: #{yunet_backbone.4} parent=11 // pred_check_branch
        %192 = sbr.rel (%p190) target = $region16
      $region15: #{yunet_backbone.4} parent=11 // pred_region
        _
      $region16: #{yunet_backbone.4} parent=11 // pred_fallthru
        _
      // Predicated region
      $region17: #{yunet_backbone.4} parent=11 // pred_check
        %p193 = pneg %p81
      $region18: #{yunet_backbone.4} parent=11 // pred_check_branch
        %195 = sbr.rel (%p193) target = $region20
      $region19: #{yunet_backbone.4} parent=11 // pred_region
        _
      $region20: #{yunet_backbone.4} parent=11 // pred_fallthru
        _
      // Predicated region
      $region21: #{yunet_backbone.4} parent=11 // pred_check
        %p196 = pneg %p102
      $region22: #{yunet_backbone.4} parent=11 // pred_check_branch
        %198 = sbr.rel (%p196) target = $region24
      $region23: #{yunet_backbone.4} parent=11 // pred_region
        _
      $region24: #{yunet_backbone.4} parent=11 // pred_fallthru
        _
      // Predicated region
      $region25: #{yunet_backbone.4} parent=11 // pred_check
        %p199 = pneg %p123
      $region26: #{yunet_backbone.4} parent=11 // pred_check_branch
        %201 = sbr.rel (%p199) target = $region28
      $region27: #{yunet_backbone.4} parent=11 // pred_region
        _
      $region28: #{yunet_backbone.4} parent=11 // pred_fallthru
        _
    $region12: #{yunet_backbone.4} parent=5 // pred_fallthru
      _
    %p202 = scmp.lt.s32.totalorder %s13, 2
    // Predicated region
    $region29: #{yunet_backbone.4} parent=5 // pred_check
      %p203 = pneg %p202
    $region30: #{yunet_backbone.4} parent=5 // pred_check_branch
      %205 = sbr.rel (%p203) target = $region32
    $region31: #{yunet_backbone.4} parent=5 // pred_region
      // Predicated region
      $region33: #{yunet_backbone.4} parent=31 // pred_check
        %p206 = pneg %p33
      $region34: #{yunet_backbone.4} parent=31 // pred_check_branch
        %208 = sbr.rel (%p206) target = $region36
      $region35: #{yunet_backbone.4} parent=31 // pred_region
        %p209 = scmp.lt.s32.totalorder %s13, 1
        %s210 = scalar_select %p209, %s13, 1
        %s211 = smul.addr %s210, 2
        %s212 = smul.addr %s211, 4
        %s213 = scalar_lea.vmem %s0, %s212
      $region36: #{yunet_backbone.4} parent=31 // pred_fallthru
        _
    $region32: #{yunet_backbone.4} parent=5 // pred_fallthru
      _
    %p214 = scmp.le.s32.totalorder 1, %s13
    %p215 = scmp.lt.s32.totalorder %s13, 3
    %p216 = pnand %p214, %p215
    %p217 = pneg %p216
    // Predicated region
    $region37: #{yunet_backbone.4} parent=5 // pred_check
      _
    $region38: #{yunet_backbone.4} parent=5 // pred_check_branch
      %219 = sbr.rel (%p216) target = $region40
    $region39: #{yunet_backbone.4} parent=5 // pred_region
      %s220 = ssub.s32 %s13, 1
      %p221 = scmp.lt.s32.totalorder %s18, 1
      %s222 = scalar_select %p221, %s18, 1
      %s223 = smul.addr %s222, 2
      %s224 = smul.addr %s223, 4
      %s225 = scalar_lea.vmem %s0, %s224
      %p226 = pneg %p39
      %p227 = pneg %p36
      %p228 = pneg %p60
      %p229 = pneg %p57
      %p230 = pneg %p81
      %p231 = pneg %p78
      %p232 = pneg %p102
      %p233 = pneg %p99
      %p234 = pneg %p123
      %p235 = pneg %p120
      %p236 = pneg %p149
      %p237 = pneg %p146
      %p238 = scmp.lt.s32.totalorder %s18, 1
      %s239 = scalar_select %p238, %s18, 1
      %s240 = smul.addr %s239, 4
      %s241 = smul.addr %s240, 2
      %s242 = scalar_lea.vmem %s5, %s241
      %p243 = pneg %p175
      %p244 = pneg %p172
      %p245 = scmp.lt.s32.totalorder %s18, 1
      %s246 = scalar_select %p245, %s18, 1
      %s247 = smul.addr %s246, 2
      %s248 = scalar_lea.vmem %s6, %s247
      %p249 = scmp.lt.s32.totalorder %s18, 1
      %s250 = scalar_select %p249, %s18, 1
      %s251 = smul.addr %s250, 2
      %s252 = smul.addr %s251, 4
      %s253 = scalar_lea.vmem %s0, %s252
      %p254 = scmp.lt.s32.totalorder %s18, 1
      %s255 = scalar_select %p254, %s18, 1
      %s256 = smul.addr %s255, 4
      %s257 = smul.addr %s256, 2
      %s258 = scalar_lea.vmem %s5, %s257
      %p259 = scmp.lt.s32.totalorder %s18, 1
      %s260 = scalar_select %p259, %s18, 1
      %s261 = smul.addr %s260, 2
      %s262 = scalar_lea.vmem %s6, %s261
      %v264 = vld [vmem:[%s253] sm:$0xf]
      %v265 = vld [vmem:[%s253 + $0x4] sm:$0xf]
      %v266 = vld [vmem:[%s1] sm:$0xf]
      %v267 = vld [vmem:[%s1 + $0x4] sm:$0xf]
      %v268 = vld [vmem:[%s2 + $0x9] sm:$0x1]
      %v269 = vperm.slane %v268, 0
      %v272 = vunpack.c.l.b16 %v264
      %v273 = vunpack.c.l.b16 %v265
      %v274 = vpack.c.b16 %v273, %v272
      %v277 = vunpack.c.l.b16 %v266
      %v278 = vunpack.c.l.b16 %v267
      %v279 = vpack.c.b16 %v278, %v277
      %vm281 = vcmask 130048
      %v283 = vsel %vm281, %v274, 0
      %285 = vmatpush.bf16.msra.mxu0 0
      %286 = vmatpush.bf16.msra.mxu0 0
      %287 = vmatpush.bf16.msra.mxu0 0
      %288 = vmatpush.bf16.msra.mxu0 0
      %289 = vmatpush.bf16.msra.mxu0 0
      %290 = vmatpush.bf16.msra.mxu0 0
      %291 = vmatpush.bf16.msra.mxu0 0
      %292 = vmatpush.bf16.msra.mxu0 %v279
      %293 = vmatmul.bf16.gmra.mxu0 %v283
      %v294 = vpop.f32.mrf.mxu0
      %v295 = vadd.f32 %v269, %v294
      %v296 = vpop.f32.mrf.mxu0
      %v297 = vadd.f32 %v269, %v296
      %298 = vdwg.mxu0
      %vm299 = vcmask 128000
      %300 = vst.msk [vmem:[#allocation2] sm:$0x3f] %vm299, 0.0
      %s301 = scalar_lea.vmem [#allocation2], 40
      %302 = vst.msk [vmem:[%s301] sm:$0x3f] %vm299, 0.0
      %vm303 = vcmask 122880
      %304 = vst.msk [vmem:[#allocation2] sm:$0x1] %vm303, 0.0
      %305 = vst.msk [vmem:[#allocation2 + $0x8] sm:$0x1] %vm303, 0.0
      %306 = vst.msk [vmem:[#allocation2 + $0x10] sm:$0x1] %vm303, 0.0
      %307 = vst.msk [vmem:[#allocation2 + $0x18] sm:$0x1] %vm303, 0.0
      %308 = vst.msk [vmem:[#allocation2 + $0x20] sm:$0x1] %vm303, 0.0
      %309 = vst.msk [vmem:[#allocation2 + $0x28] sm:$0x1] %vm303, 0.0
      %310 = vst.msk [vmem:[#allocation2 + $0x5] sm:$0x1] %vm303, 0.0
      %311 = vst.msk [vmem:[#allocation2 + $0xd] sm:$0x1] %vm303, 0.0
      %312 = vst.msk [vmem:[#allocation2 + $0x15] sm:$0x1] %vm303, 0.0
      %313 = vst.msk [vmem:[#allocation2 + $0x1d] sm:$0x1] %vm303, 0.0
      %314 = vst.msk [vmem:[#allocation2 + $0x25] sm:$0x1] %vm303, 0.0
      %315 = vst.msk [vmem:[#allocation2 + $0x2d] sm:$0x1] %vm303, 0.0
      %s316 = scalar_lea.vmem [#allocation2], 8
      %vm317 = vcmask 125952
      %318 = vst.msk [vmem:[%s316 + $0x1] sm:$0xf] %vm317, %v295
      %s319 = scalar_lea.vmem [#allocation2], 16
      %vm320 = vcmask 130052
      %321 = vst.msk [vmem:[%s319 - $0x3] sm:$0xf0] %vm320, %v295
      %s322 = scalar_lea.vmem [#allocation2], 24
      %323 = vst.msk [vmem:[%s322 + $0x1] sm:$0xf] %vm317, %v297
      %s324 = scalar_lea.vmem [#allocation2], 32
      %325 = vst.msk [vmem:[%s324 - $0x3] sm:$0xf0] %vm320, %v297
      %v326 = vld [vmem:[#allocation2] sm:$0xf]
      %v327 = vld [vmem:[#allocation2 + $0x8] sm:$0xf]
      %v328 = vld [vmem:[#allocation2 + $0x10] sm:$0xf]
      %v329 = vld [vmem:[#allocation2 + $0x18] sm:$0xf]
      %v330 = vld [vmem:[#allocation2 + $0x20] sm:$0xf]
      %v331 = vld [vmem:[#allocation2 + $0x28] sm:$0xf]
      %v332 = vld [vmem:[%s2] sm:$0x1]
      %v333 = vperm.slane %v332, 0
      %v334 = vmul.f32 %v326, %v333
      %v335 = vmul.f32 %v327, %v333
      %v336 = vmul.f32 %v328, %v333
      %v337 = vmul.f32 %v329, %v333
      %v338 = vadd.f32 %v334, 0.0
      %v339 = vadd.f32 %v335, 0.0
      %v340 = vadd.f32 %v336, 0.0
      %v341 = vadd.f32 %v337, 0.0
      %v342 = vld [vmem:[%s2 + $0x3] sm:$0x1]
      %v343 = vperm.slane %v342, 0
      %v344 = vmul.f32 %v327, %v343
      %v345 = vmul.f32 %v328, %v343
      %v346 = vmul.f32 %v329, %v343
      %v347 = vmul.f32 %v330, %v343
      %v348 = vadd.f32 %v338, %v344
      %v349 = vadd.f32 %v339, %v345
      %v350 = vadd.f32 %v340, %v346
      %v351 = vadd.f32 %v341, %v347
      %v352 = vld [vmem:[%s2 + $0x6] sm:$0x1]
      %v353 = vperm.slane %v352, 0
      %v354 = vmul.f32 %v328, %v353
      %v355 = vmul.f32 %v329, %v353
      %v356 = vmul.f32 %v330, %v353
      %v357 = vmul.f32 %v331, %v353
      %v358 = vadd.f32 %v348, %v354
      %v359 = vadd.f32 %v349, %v355
      %v360 = vadd.f32 %v350, %v356
      %v361 = vadd.f32 %v351, %v357
      %v362 = vld [vmem:[#allocation2 + $0x1] sm:$0xf]
      %v363 = vld [vmem:[#allocation2 + $0x9] sm:$0xf]
      %v364 = vld [vmem:[#allocation2 + $0x11] sm:$0xf]
      %v365 = vld [vmem:[#allocation2 + $0x19] sm:$0xf]
      %v366 = vld [vmem:[#allocation2 + $0x21] sm:$0xf]
      %v367 = vld [vmem:[#allocation2 + $0x29] sm:$0xf]
      %v368 = vld [vmem:[%s2 + $0x1] sm:$0x1]
      %v369 = vperm.slane %v368, 0
      %v370 = vmul.f32 %v362, %v369
      %v371 = vmul.f32 %v363, %v369
      %v372 = vmul.f32 %v364, %v369
      %v373 = vmul.f32 %v365, %v369
      %v374 = vadd.f32 %v358, %v370
      %v375 = vadd.f32 %v359, %v371
      %v376 = vadd.f32 %v360, %v372
      %v377 = vadd.f32 %v361, %v373
      %v378 = vld [vmem:[%s2 + $0x4] sm:$0x1]
      %v379 = vperm.slane %v378, 0
      %v380 = vmul.f32 %v363, %v379
      %v381 = vmul.f32 %v364, %v379
      %v382 = vmul.f32 %v365, %v379
      %v383 = vmul.f32 %v366, %v379
      %v384 = vadd.f32 %v374, %v380
      %v385 = vadd.f32 %v375, %v381
      %v386 = vadd.f32 %v376, %v382
      %v387 = vadd.f32 %v377, %v383
      %v388 = vld [vmem:[%s2 + $0x7] sm:$0x1]
      %v389 = vperm.slane %v388, 0
      %v390 = vmul.f32 %v364, %v389
      %v391 = vmul.f32 %v365, %v389
      %v392 = vmul.f32 %v366, %v389
      %v393 = vmul.f32 %v367, %v389
      %v394 = vadd.f32 %v384, %v390
      %v395 = vadd.f32 %v385, %v391
      %v396 = vadd.f32 %v386, %v392
      %v397 = vadd.f32 %v387, %v393
      %v398 = vld [vmem:[#allocation2 + $0x2] sm:$0xf]
      %v399 = vld [vmem:[#allocation2 + $0xa] sm:$0xf]
      %v400 = vld [vmem:[#allocation2 + $0x12] sm:$0xf]
      %v401 = vld [vmem:[#allocation2 + $0x1a] sm:$0xf]
      %v402 = vld [vmem:[#allocation2 + $0x22] sm:$0xf]
      %v403 = vld [vmem:[#allocation2 + $0x2a] sm:$0xf]
      %v404 = vld [vmem:[%s2 + $0x2] sm:$0x1]
      %v405 = vperm.slane %v404, 0
      %v406 = vmul.f32 %v398, %v405
      %v407 = vmul.f32 %v399, %v405
      %v408 = vmul.f32 %v400, %v405
      %v409 = vmul.f32 %v401, %v405
      %v410 = vadd.f32 %v394, %v406
      %v411 = vadd.f32 %v395, %v407
      %v412 = vadd.f32 %v396, %v408
      %v413 = vadd.f32 %v397, %v409
      %v414 = vld [vmem:[%s2 + $0x5] sm:$0x1]
      %v415 = vperm.slane %v414, 0
      %v416 = vmul.f32 %v399, %v415
      %v417 = vmul.f32 %v400, %v415
      %v418 = vmul.f32 %v401, %v415
      %v419 = vmul.f32 %v402, %v415
      %v420 = vadd.f32 %v410, %v416
      %v421 = vadd.f32 %v411, %v417
      %v422 = vadd.f32 %v412, %v418
      %v423 = vadd.f32 %v413, %v419
      %v424 = vld [vmem:[%s2 + $0x8] sm:$0x1]
      %v425 = vperm.slane %v424, 0
      %v426 = vmul.f32 %v400, %v425
      %v427 = vmul.f32 %v401, %v425
      %v428 = vmul.f32 %v402, %v425
      %v429 = vmul.f32 %v403, %v425
      %v430 = vadd.f32 %v420, %v426
      %v431 = vadd.f32 %v421, %v427
      %v432 = vadd.f32 %v422, %v428
      %v433 = vadd.f32 %v423, %v429
      %v434 = vld [vmem:[%s2 + $0xa] sm:$0x1]
      %v435 = vperm.slane %v434, 0
      %v436 = vmul.f32 %v430, %v435
      %v437 = vmul.f32 %v431, %v435
      %v438 = vmul.f32 %v432, %v435
      %v439 = vmul.f32 %v433, %v435
      %v440 = vld [vmem:[%s2 + $0xb] sm:$0x1]
      %v441 = vperm.slane %v440, 0
      %v442 = vadd.f32 %v436, %v441
      %v443 = vadd.f32 %v437, %v441
      %v444 = vadd.f32 %v438, %v441
      %v445 = vadd.f32 %v439, %v441
      %v446 = vmax.f32 %v442, 0.0
      %v447 = vmax.f32 %v443, 0.0
      %v448 = vmax.f32 %v444, 0.0
      %v449 = vmax.f32 %v445, 0.0
      %v451 = vrot.slane %v447, 4
      %v454 = vrot.slane %v449, 4
      %vm456 = vcmask 1043456
      %v457 = vsel %vm456, %v446, %v451
      %v458 = vsel %vm456, %v448, %v454
      %v459 = vpack.c.bf16 %v458, %v457
      %v460 = vld [vmem:[%s3] sm:$0xf]
      %v461 = vld [vmem:[%s3 + $0x4] sm:$0xf]
      %v462 = vld [vmem:[%s4 + $0x9] sm:$0x1]
      %v463 = vperm.slane %v462, 0
      %v466 = vunpack.c.l.b16 %v460
      %v467 = vunpack.c.l.b16 %v461
      %v468 = vpack.c.b16 %v467, %v466
      %v471 = vsel %vm281, %v459, 0
      %473 = vmatpush.bf16.msra.mxu0 0
      %474 = vmatpush.bf16.msra.mxu0 0
      %475 = vmatpush.bf16.msra.mxu0 0
      %476 = vmatpush.bf16.msra.mxu0 0
      %477 = vmatpush.bf16.msra.mxu0 0
      %478 = vmatpush.bf16.msra.mxu0 0
      %479 = vmatpush.bf16.msra.mxu0 0
      %480 = vmatpush.bf16.msra.mxu0 %v468
      %481 = vmatmul.bf16.gmra.mxu0 %v471
      %v482 = vpop.f32.mrf.mxu0
      %v483 = vadd.f32 %v463, %v482
      %v484 = vpop.f32.mrf.mxu0
      %v485 = vadd.f32 %v463, %v484
      %486 = vdwg.mxu0
      %vm487 = vcmask 259072
      %488 = vst.msk [vmem:[#allocation3] sm:$0x3f] %vm487, 0.0
      %s489 = scalar_lea.vmem [#allocation3], 40
      %490 = vst.msk [vmem:[%s489] sm:$0x3f] %vm487, 0.0
      %vm491 = vcmask 253952
      %492 = vst.msk [vmem:[#allocation3] sm:$0x1] %vm491, 0.0
      %493 = vst.msk [vmem:[#allocation3 + $0x8] sm:$0x1] %vm491, 0.0
      %494 = vst.msk [vmem:[#allocation3 + $0x10] sm:$0x1] %vm491, 0.0
      %495 = vst.msk [vmem:[#allocation3 + $0x18] sm:$0x1] %vm491, 0.0
      %496 = vst.msk [vmem:[#allocation3 + $0x20] sm:$0x1] %vm491, 0.0
      %497 = vst.msk [vmem:[#allocation3 + $0x28] sm:$0x1] %vm491, 0.0
      %498 = vst.msk [vmem:[#allocation3 + $0x5] sm:$0x1] %vm491, 0.0
      %499 = vst.msk [vmem:[#allocation3 + $0xd] sm:$0x1] %vm491, 0.0
      %500 = vst.msk [vmem:[#allocation3 + $0x15] sm:$0x1] %vm491, 0.0
      %501 = vst.msk [vmem:[#allocation3 + $0x1d] sm:$0x1] %vm491, 0.0
      %502 = vst.msk [vmem:[#allocation3 + $0x25] sm:$0x1] %vm491, 0.0
      %503 = vst.msk [vmem:[#allocation3 + $0x2d] sm:$0x1] %vm491, 0.0
      %s504 = scalar_lea.vmem [#allocation3], 8
      %vm505 = vcmask 257024
      %506 = vst.msk [vmem:[%s504 + $0x1] sm:$0xf] %vm505, %v483
      %s507 = scalar_lea.vmem [#allocation3], 16
      %vm508 = vcmask 261124
      %509 = vst.msk [vmem:[%s507 - $0x3] sm:$0xf0] %vm508, %v483
      %s510 = scalar_lea.vmem [#allocation3], 24
      %511 = vst.msk [vmem:[%s510 + $0x1] sm:$0xf] %vm505, %v485
      %s512 = scalar_lea.vmem [#allocation3], 32
      %513 = vst.msk [vmem:[%s512 - $0x3] sm:$0xf0] %vm508, %v485
      %v514 = vld [vmem:[#allocation3] sm:$0xf]
      %v515 = vld [vmem:[#allocation3 + $0x8] sm:$0xf]
      %v516 = vld [vmem:[#allocation3 + $0x10] sm:$0xf]
      %v517 = vld [vmem:[#allocation3 + $0x18] sm:$0xf]
      %v518 = vld [vmem:[#allocation3 + $0x20] sm:$0xf]
      %v519 = vld [vmem:[#allocation3 + $0x28] sm:$0xf]
      %v520 = vld [vmem:[%s4] sm:$0x1]
      %v521 = vperm.slane %v520, 0
      %v522 = vmul.f32 %v514, %v521
      %v523 = vmul.f32 %v515, %v521
      %v524 = vmul.f32 %v516, %v521
      %v525 = vmul.f32 %v517, %v521
      %v526 = vadd.f32 %v522, 0.0
      %v527 = vadd.f32 %v523, 0.0
      %v528 = vadd.f32 %v524, 0.0
      %v529 = vadd.f32 %v525, 0.0
      %v530 = vld [vmem:[%s4 + $0x3] sm:$0x1]
      %v531 = vperm.slane %v530, 0
      %v532 = vmul.f32 %v515, %v531
      %v533 = vmul.f32 %v516, %v531
      %v534 = vmul.f32 %v517, %v531
      %v535 = vmul.f32 %v518, %v531
      %v536 = vadd.f32 %v526, %v532
      %v537 = vadd.f32 %v527, %v533
      %v538 = vadd.f32 %v528, %v534
      %v539 = vadd.f32 %v529, %v535
      %v540 = vld [vmem:[%s4 + $0x6] sm:$0x1]
      %v541 = vperm.slane %v540, 0
      %v542 = vmul.f32 %v516, %v541
      %v543 = vmul.f32 %v517, %v541
      %v544 = vmul.f32 %v518, %v541
      %v545 = vmul.f32 %v519, %v541
      %v546 = vadd.f32 %v536, %v542
      %v547 = vadd.f32 %v537, %v543
      %v548 = vadd.f32 %v538, %v544
      %v549 = vadd.f32 %v539, %v545
      %v550 = vld [vmem:[#allocation3 + $0x1] sm:$0xf]
      %v551 = vld [vmem:[#allocation3 + $0x9] sm:$0xf]
      %v552 = vld [vmem:[#allocation3 + $0x11] sm:$0xf]
      %v553 = vld [vmem:[#allocation3 + $0x19] sm:$0xf]
      %v554 = vld [vmem:[#allocation3 + $0x21] sm:$0xf]
      %v555 = vld [vmem:[#allocation3 + $0x29] sm:$0xf]
      %v556 = vld [vmem:[%s4 + $0x1] sm:$0x1]
      %v557 = vperm.slane %v556, 0
      %v558 = vmul.f32 %v550, %v557
      %v559 = vmul.f32 %v551, %v557
      %v560 = vmul.f32 %v552, %v557
      %v561 = vmul.f32 %v553, %v557
      %v562 = vadd.f32 %v546, %v558
      %v563 = vadd.f32 %v547, %v559
      %v564 = vadd.f32 %v548, %v560
      %v565 = vadd.f32 %v549, %v561
      %v566 = vld [vmem:[%s4 + $0x4] sm:$0x1]
      %v567 = vperm.slane %v566, 0
      %v568 = vmul.f32 %v551, %v567
      %v569 = vmul.f32 %v552, %v567
      %v570 = vmul.f32 %v553, %v567
      %v571 = vmul.f32 %v554, %v567
      %v572 = vadd.f32 %v562, %v568
      %v573 = vadd.f32 %v563, %v569
      %v574 = vadd.f32 %v564, %v570
      %v575 = vadd.f32 %v565, %v571
      %v576 = vld [vmem:[%s4 + $0x7] sm:$0x1]
      %v577 = vperm.slane %v576, 0
      %v578 = vmul.f32 %v552, %v577
      %v579 = vmul.f32 %v553, %v577
      %v580 = vmul.f32 %v554, %v577
      %v581 = vmul.f32 %v555, %v577
      %v582 = vadd.f32 %v572, %v578
      %v583 = vadd.f32 %v573, %v579
      %v584 = vadd.f32 %v574, %v580
      %v585 = vadd.f32 %v575, %v581
      %v586 = vld [vmem:[#allocation3 + $0x2] sm:$0xf]
      %v587 = vld [vmem:[#allocation3 + $0xa] sm:$0xf]
      %v588 = vld [vmem:[#allocation3 + $0x12] sm:$0xf]
      %v589 = vld [vmem:[#allocation3 + $0x1a] sm:$0xf]
      %v590 = vld [vmem:[#allocation3 + $0x22] sm:$0xf]
      %v591 = vld [vmem:[#allocation3 + $0x2a] sm:$0xf]
      %v592 = vld [vmem:[%s4 + $0x2] sm:$0x1]
      %v593 = vperm.slane %v592, 0
      %v594 = vmul.f32 %v586, %v593
      %v595 = vmul.f32 %v587, %v593
      %v596 = vmul.f32 %v588, %v593
      %v597 = vmul.f32 %v589, %v593
      %v598 = vadd.f32 %v582, %v594
      %v599 = vadd.f32 %v583, %v595
      %v600 = vadd.f32 %v584, %v596
      %v601 = vadd.f32 %v585, %v597
      %v602 = vld [vmem:[%s4 + $0x5] sm:$0x1]
      %v603 = vperm.slane %v602, 0
      %v604 = vmul.f32 %v587, %v603
      %v605 = vmul.f32 %v588, %v603
      %v606 = vmul.f32 %v589, %v603
      %v607 = vmul.f32 %v590, %v603
      %v608 = vadd.f32 %v598, %v604
      %v609 = vadd.f32 %v599, %v605
      %v610 = vadd.f32 %v600, %v606
      %v611 = vadd.f32 %v601, %v607
      %v612 = vld [vmem:[%s4 + $0x8] sm:$0x1]
      %v613 = vperm.slane %v612, 0
      %v614 = vmul.f32 %v588, %v613
      %v615 = vmul.f32 %v589, %v613
      %v616 = vmul.f32 %v590, %v613
      %v617 = vmul.f32 %v591, %v613
      %v618 = vadd.f32 %v608, %v614
      %v619 = vadd.f32 %v609, %v615
      %v620 = vadd.f32 %v610, %v616
      %v621 = vadd.f32 %v611, %v617
      %v622 = vld [vmem:[%s4 + $0xa] sm:$0x1]
      %v623 = vperm.slane %v622, 0
      %v624 = vmul.f32 %v618, %v623
      %v625 = vmul.f32 %v619, %v623
      %v626 = vmul.f32 %v620, %v623
      %v627 = vmul.f32 %v621, %v623
      %v628 = vld [vmem:[%s4 + $0xb] sm:$0x1]
      %v629 = vperm.slane %v628, 0
      %v630 = vadd.f32 %v624, %v629
      %v631 = vadd.f32 %v625, %v629
      %v632 = vadd.f32 %v626, %v629
      %v633 = vadd.f32 %v627, %v629
      %v634 = vmax.f32 %v630, 0.0
      %v635 = vmax.f32 %v631, 0.0
      %v636 = vmax.f32 %v632, 0.0
      %v637 = vmax.f32 %v633, 0.0
      %v638 = vpack.c.bf16 %v634, %v634
      %v639 = vpack.c.bf16 %v635, %v635
      %v640 = vpack.c.bf16 %v636, %v636
      %v641 = vpack.c.bf16 %v637, %v637
      %vm642 = vcmask 254976
      %643 = vst.msk [vmem:[%s258] sm:$0x3] %vm642, %v638
      %644 = vst.msk [vmem:[%s258 + $0x2] sm:$0x3] %vm642, %v639
      %645 = vst.msk [vmem:[%s258 + $0x4] sm:$0x3] %vm642, %v640
      %646 = vst.msk [vmem:[%s258 + $0x6] sm:$0x3] %vm642, %v641
      %v647 = vmax.f32 %v634, %v635
      %v648 = vmax.f32 %v636, %v637
      %v651 = vrot.slane %v647, 1
      %v652 = vrot.slane %v648, 1
      %v655 = vmax.f32 %v647, %v651
      %v656 = vmax.f32 %v648, %v652
      %v659 = vrot.slane %v655, 1
      %v660 = vrot.slane %v656, 1
      %vm663 = vcmask 1040384
      %v664 = vsel %vm663, %v655, %v659
      %v665 = vsel %vm663, %v656, %v660
      %v666 = vpack.c.bf16 %v664, %v664
      %v667 = vpack.c.bf16 %v665, %v665
      %668 = vst.msk [vmem:[%s262] sm:$0x1] %vm491, %v666
      %669 = vst.msk [vmem:[%s262 + $0x1] sm:$0x1] %vm491, %v667
      %p670 = scmp.lt.s32.totalorder %s18, 1
      %s671 = scalar_select %p670, %s18, 1
      %s672 = smul.addr %s671, 4
      %s673 = smul.addr %s672, 2
      %s674 = scalar_lea.vmem %s5, %s673
      %p675 = scmp.lt.s32.totalorder %s18, 1
      %s676 = scalar_select %p675, %s18, 1
      %s677 = smul.addr %s676, 2
      %s678 = scalar_lea.vmem %s6, %s677
      // Predicated region
      $region41: #{yunet_backbone.4} parent=39 // pred_check
        %p679 = pneg %p146
      $region42: #{yunet_backbone.4} parent=39 // pred_check_branch
        %681 = sbr.rel (%p679) target = $region44
      $region43: #{yunet_backbone.4} parent=39 // pred_region
        _
      $region44: #{yunet_backbone.4} parent=39 // pred_fallthru
        _
      // Predicated region
      $region45: #{yunet_backbone.4} parent=39 // pred_check
        %p682 = pneg %p172
      $region46: #{yunet_backbone.4} parent=39 // pred_check_branch
        %684 = sbr.rel (%p682) target = $region48
      $region47: #{yunet_backbone.4} parent=39 // pred_region
        _
      $region48: #{yunet_backbone.4} parent=39 // pred_fallthru
        _
    $region40: #{yunet_backbone.4} parent=5 // pred_fallthru
      _
    %p685 = scmp.le.s32.totalorder 2, %s13
    // Predicated region
    $region49: #{yunet_backbone.4} parent=5 // pred_check
      %p686 = pneg %p685
    $region50: #{yunet_backbone.4} parent=5 // pred_check_branch
      %688 = sbr.rel (%p686) target = $region52
    $region51: #{yunet_backbone.4} parent=5 // pred_region
      %s689 = ssub.s32 %s13, 2
      // Predicated region
      $region53: #{yunet_backbone.4} parent=51 // pred_check
        %p690 = pneg %p152
      $region54: #{yunet_backbone.4} parent=51 // pred_check_branch
        %692 = sbr.rel (%p690) target = $region56
      $region55: #{yunet_backbone.4} parent=51 // pred_region
        %p693 = scmp.lt.s32.totalorder %s19, 1
        %s694 = scalar_select %p693, %s19, 1
        %s695 = smul.addr %s694, 4
        %s696 = smul.addr %s695, 2
        %s697 = scalar_lea.vmem %s5, %s696
      $region56: #{yunet_backbone.4} parent=51 // pred_fallthru
        _
      // Predicated region
      $region57: #{yunet_backbone.4} parent=51 // pred_check
        %p698 = pneg %p178
      $region58: #{yunet_backbone.4} parent=51 // pred_check_branch
        %700 = sbr.rel (%p698) target = $region60
      $region59: #{yunet_backbone.4} parent=51 // pred_region
        %p701 = scmp.lt.s32.totalorder %s19, 1
        %s702 = scalar_select %p701, %s19, 1
        %s703 = smul.addr %s702, 2
        %s704 = scalar_lea.vmem %s6, %s703
      $region60: #{yunet_backbone.4} parent=51 // pred_fallthru
        _
    $region52: #{yunet_backbone.4} parent=5 // pred_fallthru
      _
  $region6: #{yunet_backbone.4} parent=0 // loop_footer
    %s17 = sadd.s32 1, %s13
  $region7: #{yunet_backbone.4} parent=0 // loop_footer_branch
    %12 = sbr.rel target = $region3
  $region8: #{yunet_backbone.4} parent=0 // loop_exit
    _

// kernel: yunet_backbone.5
$region0: #{yunet_backbone.5}
  #allocation0 [shape = 'u32[]', space=smem, size = 0x4, offset = 0x4, fixed_abs, tag = 'smem constant byte address 0x4 - core index']
  #allocation1 [shape = 'u32[72,128]{1,0:T(1,128)}', space=vmem, size = 0x9000, scoped, tag = 'internal scratch']
  #allocation2 [shape = 'f32[4,4,32]{2,1,0:T(4,128)}', space=vmem, size = 0x2000, scoped, tag = 'scratch operand']
  #allocation3 [shape = 'f32[4,4,48]{2,1,0:T(4,128)}', space=vmem, size = 0x2000, scoped, tag = 'scratch operand']
  %s0 = inlined_call_operand.vmem [shape: bf16[2,4,32], index: 0, kind: input, shape index: {}]
  %s1 = inlined_call_operand.vmem [shape: bf16[32,32], index: 1, kind: input, shape index: {}]
  %s2 = inlined_call_operand.vmem [shape: f32[12,32], index: 2, kind: input, shape index: {}]
  %s3 = inlined_call_operand.vmem [shape: bf16[32,48], index: 3, kind: input, shape index: {}]
  %s4 = inlined_call_operand.vmem [shape: f32[12,48], index: 4, kind: input, shape index: {}]
  %s5 = inlined_call_operand.vmem [shape: bf16[2,2,2,48], index: 5, kind: output, shape index: {}]
  %s6 = sld [smem:[#allocation0]]
  $region53: #{yunet_backbone.5} parent=0
    _
  %s8 = ssub.s32 1, %s6
  %s9 = scalar_select 0, %s8, %s6
  loop: start=0, step=1, limit=4
  $region2: #{yunet_backbone.5} parent=0 // loop_pre_header
    _
  $region3: #{yunet_backbone.5} parent=0 // loop_header
    %s11 = sphi 0, %s15
    %p12 = scmp.ge.s32.totalorder %s11, 4
    %s21 = sphi 0, %s23
    %s24 = sphi 0, %s21
    %s25 = sphi 0, %s24
    %s41 = sphi 0, %s25
    %s45 = sphi 0, %s45
    %s47 = sphi 0, %s45
    %s48 = sphi 0, %s47
    %s62 = sphi 0, %s48
    %s66 = sphi 0, %s66
    %s68 = sphi 0, %s66
    %s69 = sphi 0, %s68
    %s83 = sphi 0, %s69
    %s87 = sphi 0, %s87
    %s89 = sphi 0, %s87
    %s90 = sphi 0, %s89
    %s104 = sphi 0, %s90
    %s108 = sphi 0, %s108
    %s110 = sphi 0, %s108
    %s111 = sphi 0, %s110
    %s125 = sphi 0, %s111
    %s131 = sphi 0, %s133
    %s134 = sphi 0, %s131
    %s135 = sphi 0, %s134
    %s151 = sphi 0, %s135
  $region4: #{yunet_backbone.5} parent=0 // loop_header_branch
    %14 = sbr.rel (%p12) target = $region8
  $region5: #{yunet_backbone.5} parent=0 // loop_body
    %s16 = ssub.s32 %s11, 1
    %s17 = ssub.s32 %s11, 2
    %s18 = sadd.s32 %s11, 1
    %s19 = ssub.s32 %s11, %s18
    %p20 = scmp.eq.s32.totalorder %s19, 0
    %s22 = sadd.s32 %s21, 1
    %s23 = scalar_select %p20, %s21, %s22
    %p26 = pneg %p20
    %p27 = scmp.eq.s32.totalorder %s11, 1
    %p28 = por %p26, %p27
    %p29 = scmp.ne.s32.totalorder %s21, %s24
    %p30 = scmp.eq.s32.totalorder %s11, 0
    %p31 = por %p29, %p30
    %p32 = scmp.ne.s32.totalorder %s21, %s24
    %p33 = scmp.eq.s32.totalorder %s16, 1
    %p34 = por %p32, %p33
    %p35 = scmp.ne.s32.totalorder %s24, %s25
    %p36 = scmp.eq.s32.totalorder %s16, 0
    %p37 = por %p35, %p36
    %p38 = scmp.ne.s32.totalorder %s24, %s25
    %p39 = scmp.eq.s32.totalorder %s17, 1
    %p40 = por %p38, %p39
    %p42 = scmp.ne.s32.totalorder %s25, %s41
    %p43 = scmp.eq.s32.totalorder %s17, 0
    %p44 = por %p42, %p43
    %s46 = sadd.s32 %s45, 1
    %p49 = scmp.eq.s32.totalorder %s11, 1
    %p50 = scmp.ne.s32.totalorder %s45, %s47
    %p51 = scmp.eq.s32.totalorder %s11, 0
    %p52 = por %p50, %p51
    %p53 = scmp.ne.s32.totalorder %s45, %s47
    %p54 = scmp.eq.s32.totalorder %s16, 1
    %p55 = por %p53, %p54
    %p56 = scmp.ne.s32.totalorder %s47, %s48
    %p57 = scmp.eq.s32.totalorder %s16, 0
    %p58 = por %p56, %p57
    %p59 = scmp.ne.s32.totalorder %s47, %s48
    %p60 = scmp.eq.s32.totalorder %s17, 1
    %p61 = por %p59, %p60
    %p63 = scmp.ne.s32.totalorder %s48, %s62
    %p64 = scmp.eq.s32.totalorder %s17, 0
    %p65 = por %p63, %p64
    %s67 = sadd.s32 %s66, 1
    %p70 = scmp.eq.s32.totalorder %s11, 1
    %p71 = scmp.ne.s32.totalorder %s66, %s68
    %p72 = scmp.eq.s32.totalorder %s11, 0
    %p73 = por %p71, %p72
    %p74 = scmp.ne.s32.totalorder %s66, %s68
    %p75 = scmp.eq.s32.totalorder %s16, 1
    %p76 = por %p74, %p75
    %p77 = scmp.ne.s32.totalorder %s68, %s69
    %p78 = scmp.eq.s32.totalorder %s16, 0
    %p79 = por %p77, %p78
    %p80 = scmp.ne.s32.totalorder %s68, %s69
    %p81 = scmp.eq.s32.totalorder %s17, 1
    %p82 = por %p80, %p81
    %p84 = scmp.ne.s32.totalorder %s69, %s83
    %p85 = scmp.eq.s32.totalorder %s17, 0
    %p86 = por %p84, %p85
    %s88 = sadd.s32 %s87, 1
    %p91 = scmp.eq.s32.totalorder %s11, 1
    %p92 = scmp.ne.s32.totalorder %s87, %s89
    %p93 = scmp.eq.s32.totalorder %s11, 0
    %p94 = por %p92, %p93
    %p95 = scmp.ne.s32.totalorder %s87, %s89
    %p96 = scmp.eq.s32.totalorder %s16, 1
    %p97 = por %p95, %p96
    %p98 = scmp.ne.s32.totalorder %s89, %s90
    %p99 = scmp.eq.s32.totalorder %s16, 0
    %p100 = por %p98, %p99
    %p101 = scmp.ne.s32.totalorder %s89, %s90
    %p102 = scmp.eq.s32.totalorder %s17, 1
    %p103 = por %p101, %p102
    %p105 = scmp.ne.s32.totalorder %s90, %s104
    %p106 = scmp.eq.s32.totalorder %s17, 0
    %p107 = por %p105, %p106
    %s109 = sadd.s32 %s108, 1
    %p112 = scmp.eq.s32.totalorder %s11, 1
    %p113 = scmp.ne.s32.totalorder %s108, %s110
    %p114 = scmp.eq.s32.totalorder %s11, 0
    %p115 = por %p113, %p114
    %p116 = scmp.ne.s32.totalorder %s108, %s110
    %p117 = scmp.eq.s32.totalorder %s16, 1
    %p118 = por %p116, %p117
    %p119 = scmp.ne.s32.totalorder %s110, %s111
    %p120 = scmp.eq.s32.totalorder %s16, 0
    %p121 = por %p119, %p120
    %p122 = scmp.ne.s32.totalorder %s110, %s111
    %p123 = scmp.eq.s32.totalorder %s17, 1
    %p124 = por %p122, %p123
    %p126 = scmp.ne.s32.totalorder %s111, %s125
    %p127 = scmp.eq.s32.totalorder %s17, 0
    %p128 = por %p126, %p127
    %s129 = ssub.s32 %s11, %s18
    %p130 = scmp.eq.s32.totalorder %s129, 0
    %s132 = sadd.s32 %s131, 1
    %s133 = scalar_select %p130, %s131, %s132
    %p136 = pneg %p130
    %p137 = scmp.eq.s32.totalorder %s11, 1
    %p138 = por %p136, %p137
    %p139 = scmp.ne.s32.totalorder %s131, %s134
    %p140 = scmp.eq.s32.totalorder %s11, 0
    %p141 = por %p139, %p140
    %p142 = scmp.ne.s32.totalorder %s131, %s134
    %p143 = scmp.eq.s32.totalorder %s16, 1
    %p144 = por %p142, %p143
    %p145 = scmp.ne.s32.totalorder %s134, %s135
    %p146 = scmp.eq.s32.totalorder %s16, 0
    %p147 = por %p145, %p146
    %p148 = scmp.ne.s32.totalorder %s134, %s135
    %p149 = scmp.eq.s32.totalorder %s17, 1
    %p150 = por %p148, %p149
    %p152 = scmp.ne.s32.totalorder %s135, %s151
    %p153 = scmp.eq.s32.totalorder %s17, 0
    %p154 = por %p152, %p153
    %p155 = scmp.le.s32.totalorder 1, %s11
    %p156 = scmp.lt.s32.totalorder %s11, 3
    %p157 = pnand %p155, %p156
    %p158 = pneg %p157
    // Predicated region
    $region9: #{yunet_backbone.5} parent=5 // pred_check
      _
    $region10: #{yunet_backbone.5} parent=5 // pred_check_branch
      %160 = sbr.rel (%p157) target = $region12
    $region11: #{yunet_backbone.5} parent=5 // pred_region
      %s161 = ssub.s32 %s11, 1
      // Predicated region
      $region13: #{yunet_backbone.5} parent=11 // pred_check
        %p162 = pneg %p58
      $region14: #{yunet_backbone.5} parent=11 // pred_check_branch
        %164 = sbr.rel (%p162) target = $region16
      $region15: #{yunet_backbone.5} parent=11 // pred_region
        _
      $region16: #{yunet_backbone.5} parent=11 // pred_fallthru
        _
      // Predicated region
      $region17: #{yunet_backbone.5} parent=11 // pred_check
        %p165 = pneg %p79
      $region18: #{yunet_backbone.5} parent=11 // pred_check_branch
        %167 = sbr.rel (%p165) target = $region20
      $region19: #{yunet_backbone.5} parent=11 // pred_region
        _
      $region20: #{yunet_backbone.5} parent=11 // pred_fallthru
        _
      // Predicated region
      $region21: #{yunet_backbone.5} parent=11 // pred_check
        %p168 = pneg %p100
      $region22: #{yunet_backbone.5} parent=11 // pred_check_branch
        %170 = sbr.rel (%p168) target = $region24
      $region23: #{yunet_backbone.5} parent=11 // pred_region
        _
      $region24: #{yunet_backbone.5} parent=11 // pred_fallthru
        _
      // Predicated region
      $region25: #{yunet_backbone.5} parent=11 // pred_check
        %p171 = pneg %p121
      $region26: #{yunet_backbone.5} parent=11 // pred_check_branch
        %173 = sbr.rel (%p171) target = $region28
      $region27: #{yunet_backbone.5} parent=11 // pred_region
        _
      $region28: #{yunet_backbone.5} parent=11 // pred_fallthru
        _
    $region12: #{yunet_backbone.5} parent=5 // pred_fallthru
      _
    %p174 = scmp.lt.s32.totalorder %s11, 2
    // Predicated region
    $region29: #{yunet_backbone.5} parent=5 // pred_check
      %p175 = pneg %p174
    $region30: #{yunet_backbone.5} parent=5 // pred_check_branch
      %177 = sbr.rel (%p175) target = $region32
    $region31: #{yunet_backbone.5} parent=5 // pred_region
      // Predicated region
      $region33: #{yunet_backbone.5} parent=31 // pred_check
        %p178 = pneg %p31
      $region34: #{yunet_backbone.5} parent=31 // pred_check_branch
        %180 = sbr.rel (%p178) target = $region36
      $region35: #{yunet_backbone.5} parent=31 // pred_region
        %p181 = scmp.lt.s32.totalorder %s11, 1
        %s182 = scalar_select %p181, %s11, 1
        %s183 = smul.addr %s182, 2
        %s184 = scalar_lea.vmem %s0, %s183
      $region36: #{yunet_backbone.5} parent=31 // pred_fallthru
        _
    $region32: #{yunet_backbone.5} parent=5 // pred_fallthru
      _
    %p185 = scmp.le.s32.totalorder 1, %s11
    %p186 = scmp.lt.s32.totalorder %s11, 3
    %p187 = pnand %p185, %p186
    %p188 = pneg %p187
    // Predicated region
    $region37: #{yunet_backbone.5} parent=5 // pred_check
      _
    $region38: #{yunet_backbone.5} parent=5 // pred_check_branch
      %190 = sbr.rel (%p187) target = $region40
    $region39: #{yunet_backbone.5} parent=5 // pred_region
      %s191 = ssub.s32 %s11, 1
      %p192 = scmp.lt.s32.totalorder %s16, 1
      %s193 = scalar_select %p192, %s16, 1
      %s194 = smul.addr %s193, 2
      %s195 = scalar_lea.vmem %s0, %s194
      %p196 = pneg %p37
      %p197 = pneg %p34
      %p198 = pneg %p58
      %p199 = pneg %p55
      %p200 = pneg %p79
      %p201 = pneg %p76
      %p202 = pneg %p100
      %p203 = pneg %p97
      %p204 = pneg %p121
      %p205 = pneg %p118
      %p206 = pneg %p147
      %p207 = pneg %p144
      %p208 = scmp.lt.s32.totalorder %s16, 1
      %s209 = scalar_select %p208, %s16, 1
      %s210 = smul.addr %s209, 2
      %s211 = scalar_lea.vmem %s5, %s210
      %p212 = scmp.lt.s32.totalorder %s16, 1
      %s213 = scalar_select %p212, %s16, 1
      %s214 = smul.addr %s213, 2
      %s215 = scalar_lea.vmem %s0, %s214
      %p216 = scmp.lt.s32.totalorder %s16, 1
      %s217 = scalar_select %p216, %s16, 1
      %s218 = smul.addr %s217, 2
      %s219 = scalar_lea.vmem %s5, %s218
      %v221 = vld [vmem:[%s215] sm:$0x3]
      %v222 = vld [vmem:[%s1] sm:$0xf]
      %v223 = vld [vmem:[%s1 + $0x4] sm:$0xf]
      %v224 = vld [vmem:[%s1 + $0x8] sm:$0xf]
      %v225 = vld [vmem:[%s1 + $0xc] sm:$0xf]
      %v226 = vld [vmem:[%s2 + $0x9] sm:$0x1]
      %v227 = vperm.slane %v226, 0
      %v232 = vunpack.c.l.b16 %v222
      %v233 = vunpack.c.l.b16 %v223
      %v234 = vunpack.c.l.b16 %v224
      %v235 = vunpack.c.l.b16 %v225
      %v236 = vpack.c.b16 %v233, %v232
      %v237 = vpack.c.b16 %v235, %v234
      %vm240 = vcmask 261120
      %v242 = vsel %vm240, %v221, 0
      %244 = vmatpush.bf16.msra.mxu0 0
      %245 = vmatpush.bf16.msra.mxu0 0
      %246 = vmatpush.bf16.msra.mxu0 0
      %247 = vmatpush.bf16.msra.mxu0 0
      %248 = vmatpush.bf16.msra.mxu0 0
      %249 = vmatpush.bf16.msra.mxu0 0
      %250 = vmatpush.bf16.msra.mxu0 %v237
      %251 = vmatpush.bf16.msra.mxu0 %v236
      %252 = vmatmul.bf16.gmra.mxu0 %v242
      %v253 = vpop.f32.mrf.mxu0
      %v254 = vadd.f32 %v227, %v253
      %v255 = vpop.f32.mrf.mxu0
      %256 = vdwg.mxu0
      %vm257 = vcmask 257024
      %258 = vst.msk [vmem:[#allocation2] sm:$0xf] %vm257, 0.0
      %s259 = scalar_lea.vmem [#allocation2], 12
      %260 = vst.msk [vmem:[%s259] sm:$0xf] %vm257, 0.0
      %vm261 = vcmask 253952
      %262 = vst.msk [vmem:[#allocation2] sm:$0x1] %vm261, 0.0
      %263 = vst.msk [vmem:[#allocation2 + $0x4] sm:$0x1] %vm261, 0.0
      %264 = vst.msk [vmem:[#allocation2 + $0x8] sm:$0x1] %vm261, 0.0
      %265 = vst.msk [vmem:[#allocation2 + $0xc] sm:$0x1] %vm261, 0.0
      %266 = vst.msk [vmem:[#allocation2 + $0x3] sm:$0x1] %vm261, 0.0
      %267 = vst.msk [vmem:[#allocation2 + $0x7] sm:$0x1] %vm261, 0.0
      %268 = vst.msk [vmem:[#allocation2 + $0xb] sm:$0x1] %vm261, 0.0
      %269 = vst.msk [vmem:[#allocation2 + $0xf] sm:$0x1] %vm261, 0.0
      %s270 = scalar_lea.vmem [#allocation2], 4
      %vm271 = vcmask 254976
      %272 = vst.msk [vmem:[%s270 + $0x1] sm:$0x3] %vm271, %v254
      %s273 = scalar_lea.vmem [#allocation2], 8
      %vm274 = vcmask 257026
      %275 = vst.msk [vmem:[%s273 - $0x1] sm:$0xc] %vm274, %v254
      %v276 = vld [vmem:[#allocation2] sm:$0x3]
      %v277 = vld [vmem:[#allocation2 + $0x4] sm:$0x3]
      %v278 = vld [vmem:[#allocation2 + $0x8] sm:$0x3]
      %v279 = vld [vmem:[#allocation2 + $0xc] sm:$0x3]
      %v280 = vld [vmem:[%s2] sm:$0x1]
      %v281 = vperm.slane %v280, 0
      %v282 = vmul.f32 %v276, %v281
      %v283 = vmul.f32 %v277, %v281
      %v284 = vadd.f32 %v282, 0.0
      %v285 = vadd.f32 %v283, 0.0
      %v286 = vld [vmem:[%s2 + $0x3] sm:$0x1]
      %v287 = vperm.slane %v286, 0
      %v288 = vmul.f32 %v277, %v287
      %v289 = vmul.f32 %v278, %v287
      %v290 = vadd.f32 %v284, %v288
      %v291 = vadd.f32 %v285, %v289
      %v292 = vld [vmem:[%s2 + $0x6] sm:$0x1]
      %v293 = vperm.slane %v292, 0
      %v294 = vmul.f32 %v278, %v293
      %v295 = vmul.f32 %v279, %v293
      %v296 = vadd.f32 %v290, %v294
      %v297 = vadd.f32 %v291, %v295
      %v298 = vld [vmem:[#allocation2 + $0x1] sm:$0x3]
      %v299 = vld [vmem:[#allocation2 + $0x5] sm:$0x3]
      %v300 = vld [vmem:[#allocation2 + $0x9] sm:$0x3]
      %v301 = vld [vmem:[#allocation2 + $0xd] sm:$0x3]
      %v302 = vld [vmem:[%s2 + $0x1] sm:$0x1]
      %v303 = vperm.slane %v302, 0
      %v304 = vmul.f32 %v298, %v303
      %v305 = vmul.f32 %v299, %v303
      %v306 = vadd.f32 %v296, %v304
      %v307 = vadd.f32 %v297, %v305
      %v308 = vld [vmem:[%s2 + $0x4] sm:$0x1]
      %v309 = vperm.slane %v308, 0
      %v310 = vmul.f32 %v299, %v309
      %v311 = vmul.f32 %v300, %v309
      %v312 = vadd.f32 %v306, %v310
      %v313 = vadd.f32 %v307, %v311
      %v314 = vld [vmem:[%s2 + $0x7] sm:$0x1]
      %v315 = vperm.slane %v314, 0
      %v316 = vmul.f32 %v300, %v315
      %v317 = vmul.f32 %v301, %v315
      %v318 = vadd.f32 %v312, %v316
      %v319 = vadd.f32 %v313, %v317
      %v320 = vld [vmem:[#allocation2 + $0x2] sm:$0x3]
      %v321 = vld [vmem:[#allocation2 + $0x6] sm:$0x3]
      %v322 = vld [vmem:[#allocation2 + $0xa] sm:$0x3]
      %v323 = vld [vmem:[#allocation2 + $0xe] sm:$0x3]
      %v324 = vld [vmem:[%s2 + $0x2] sm:$0x1]
      %v325 = vperm.slane %v324, 0
      %v326 = vmul.f32 %v320, %v325
      %v327 = vmul.f32 %v321, %v325
      %v328 = vadd.f32 %v318, %v326
      %v329 = vadd.f32 %v319, %v327
      %v330 = vld [vmem:[%s2 + $0x5] sm:$0x1]
      %v331 = vperm.slane %v330, 0
      %v332 = vmul.f32 %v321, %v331
      %v333 = vmul.f32 %v322, %v331
      %v334 = vadd.f32 %v328, %v332
      %v335 = vadd.f32 %v329, %v333
      %v336 = vld [vmem:[%s2 + $0x8] sm:$0x1]
      %v337 = vperm.slane %v336, 0
      %v338 = vmul.f32 %v322, %v337
      %v339 = vmul.f32 %v323, %v337
      %v340 = vadd.f32 %v334, %v338
      %v341 = vadd.f32 %v335, %v339
      %v342 = vld [vmem:[%s2 + $0xa] sm:$0x1]
      %v343 = vperm.slane %v342, 0
      %v344 = vmul.f32 %v340, %v343
      %v345 = vmul.f32 %v341, %v343
      %v346 = vld [vmem:[%s2 + $0xb] sm:$0x1]
      %v347 = vperm.slane %v346, 0
      %v348 = vadd.f32 %v344, %v347
      %v349 = vadd.f32 %v345, %v347
      %v350 = vmax.f32 %v348, 0.0
      %v351 = vmax.f32 %v349, 0.0
      %v353 = vrot.slane %v351, 6
      %vm355 = vcmask 1041408
      %v356 = vsel %vm355, %v350, %v353
      %v357 = vpack.c.bf16 %v356, %v356
      %v358 = vld [vmem:[%s3] sm:$0xf]
      %v359 = vld [vmem:[%s3 + $0x4] sm:$0xf]
      %v360 = vld [vmem:[%s3 + $0x8] sm:$0xf]
      %v361 = vld [vmem:[%s3 + $0xc] sm:$0xf]
      %v362 = vld [vmem:[%s4 + $0x9] sm:$0x1]
      %v363 = vperm.slane %v362, 0
      %v368 = vunpack.c.l.b16 %v358
      %v369 = vunpack.c.l.b16 %v359
      %v370 = vunpack.c.l.b16 %v360
      %v371 = vunpack.c.l.b16 %v361
      %v372 = vpack.c.b16 %v369, %v368
      %v373 = vpack.c.b16 %v371, %v370
      %v377 = vsel %vm240, %v357, 0
      %379 = vmatpush.bf16.msra.mxu0 0
      %380 = vmatpush.bf16.msra.mxu0 0
      %381 = vmatpush.bf16.msra.mxu0 0
      %382 = vmatpush.bf16.msra.mxu0 0
      %383 = vmatpush.bf16.msra.mxu0 0
      %384 = vmatpush.bf16.msra.mxu0 0
      %385 = vmatpush.bf16.msra.mxu0 %v373
      %386 = vmatpush.bf16.msra.mxu0 %v372
      %387 = vmatmul.bf16.gmra.mxu0 %v377
      %v388 = vpop.f32.mrf.mxu0
      %v389 = vadd.f32 %v363, %v388
      %v390 = vpop.f32.mrf.mxu0
      %391 = vdwg.mxu0
      %vm392 = vcmask 388096
      %393 = vst.msk [vmem:[#allocation3] sm:$0xf] %vm392, 0.0
      %s394 = scalar_lea.vmem [#allocation3], 12
      %395 = vst.msk [vmem:[%s394] sm:$0xf] %vm392, 0.0
      %vm396 = vcmask 385024
      %397 = vst.msk [vmem:[#allocation3] sm:$0x1] %vm396, 0.0
      %398 = vst.msk [vmem:[#allocation3 + $0x4] sm:$0x1] %vm396, 0.0
      %399 = vst.msk [vmem:[#allocation3 + $0x8] sm:$0x1] %vm396, 0.0
      %400 = vst.msk [vmem:[#allocation3 + $0xc] sm:$0x1] %vm396, 0.0
      %401 = vst.msk [vmem:[#allocation3 + $0x3] sm:$0x1] %vm396, 0.0
      %402 = vst.msk [vmem:[#allocation3 + $0x7] sm:$0x1] %vm396, 0.0
      %403 = vst.msk [vmem:[#allocation3 + $0xb] sm:$0x1] %vm396, 0.0
      %404 = vst.msk [vmem:[#allocation3 + $0xf] sm:$0x1] %vm396, 0.0
      %s405 = scalar_lea.vmem [#allocation3], 4
      %vm406 = vcmask 386048
      %407 = vst.msk [vmem:[%s405 + $0x1] sm:$0x3] %vm406, %v389
      %s408 = scalar_lea.vmem [#allocation3], 8
      %vm409 = vcmask 388098
      %410 = vst.msk [vmem:[%s408 - $0x1] sm:$0xc] %vm409, %v389
      %v411 = vld [vmem:[#allocation3] sm:$0x3]
      %v412 = vld [vmem:[#allocation3 + $0x4] sm:$0x3]
      %v413 = vld [vmem:[#allocation3 + $0x8] sm:$0x3]
      %v414 = vld [vmem:[#allocation3 + $0xc] sm:$0x3]
      %v415 = vld [vmem:[%s4] sm:$0x1]
      %v416 = vperm.slane %v415, 0
      %v417 = vmul.f32 %v411, %v416
      %v418 = vmul.f32 %v412, %v416
      %v419 = vadd.f32 %v417, 0.0
      %v420 = vadd.f32 %v418, 0.0
      %v421 = vld [vmem:[%s4 + $0x3] sm:$0x1]
      %v422 = vperm.slane %v421, 0
      %v423 = vmul.f32 %v412, %v422
      %v424 = vmul.f32 %v413, %v422
      %v425 = vadd.f32 %v419, %v423
      %v426 = vadd.f32 %v420, %v424
      %v427 = vld [vmem:[%s4 + $0x6] sm:$0x1]
      %v428 = vperm.slane %v427, 0
      %v429 = vmul.f32 %v413, %v428
      %v430 = vmul.f32 %v414, %v428
      %v431 = vadd.f32 %v425, %v429
      %v432 = vadd.f32 %v426, %v430
      %v433 = vld [vmem:[#allocation3 + $0x1] sm:$0x3]
      %v434 = vld [vmem:[#allocation3 + $0x5] sm:$0x3]
      %v435 = vld [vmem:[#allocation3 + $0x9] sm:$0x3]
      %v436 = vld [vmem:[#allocation3 + $0xd] sm:$0x3]
      %v437 = vld [vmem:[%s4 + $0x1] sm:$0x1]
      %v438 = vperm.slane %v437, 0
      %v439 = vmul.f32 %v433, %v438
      %v440 = vmul.f32 %v434, %v438
      %v441 = vadd.f32 %v431, %v439
      %v442 = vadd.f32 %v432, %v440
      %v443 = vld [vmem:[%s4 + $0x4] sm:$0x1]
      %v444 = vperm.slane %v443, 0
      %v445 = vmul.f32 %v434, %v444
      %v446 = vmul.f32 %v435, %v444
      %v447 = vadd.f32 %v441, %v445
      %v448 = vadd.f32 %v442, %v446
      %v449 = vld [vmem:[%s4 + $0x7] sm:$0x1]
      %v450 = vperm.slane %v449, 0
      %v451 = vmul.f32 %v435, %v450
      %v452 = vmul.f32 %v436, %v450
      %v453 = vadd.f32 %v447, %v451
      %v454 = vadd.f32 %v448, %v452
      %v455 = vld [vmem:[#allocation3 + $0x2] sm:$0x3]
      %v456 = vld [vmem:[#allocation3 + $0x6] sm:$0x3]
      %v457 = vld [vmem:[#allocation3 + $0xa] sm:$0x3]
      %v458 = vld [vmem:[#allocation3 + $0xe] sm:$0x3]
      %v459 = vld [vmem:[%s4 + $0x2] sm:$0x1]
      %v460 = vperm.slane %v459, 0
      %v461 = vmul.f32 %v455, %v460
      %v462 = vmul.f32 %v456, %v460
      %v463 = vadd.f32 %v453, %v461
      %v464 = vadd.f32 %v454, %v462
      %v465 = vld [vmem:[%s4 + $0x5] sm:$0x1]
      %v466 = vperm.slane %v465, 0
      %v467 = vmul.f32 %v456, %v466
      %v468 = vmul.f32 %v457, %v466
      %v469 = vadd.f32 %v463, %v467
      %v470 = vadd.f32 %v464, %v468
      %v471 = vld [vmem:[%s4 + $0x8] sm:$0x1]
      %v472 = vperm.slane %v471, 0
      %v473 = vmul.f32 %v457, %v472
      %v474 = vmul.f32 %v458, %v472
      %v475 = vadd.f32 %v469, %v473
      %v476 = vadd.f32 %v470, %v474
      %v477 = vld [vmem:[%s4 + $0xa] sm:$0x1]
      %v478 = vperm.slane %v477, 0
      %v479 = vmul.f32 %v475, %v478
      %v480 = vmul.f32 %v476, %v478
      %v481 = vld [vmem:[%s4 + $0xb] sm:$0x1]
      %v482 = vperm.slane %v481, 0
      %v483 = vadd.f32 %v479, %v482
      %v484 = vadd.f32 %v480, %v482
      %v485 = vmax.f32 %v483, 0.0
      %v486 = vmax.f32 %v484, 0.0
      %v487 = vpack.c.bf16 %v485, %v485
      %v488 = vpack.c.bf16 %v486, %v486
      %489 = vst.msk [vmem:[%s219] sm:$0x1] %vm396, %v487
      %490 = vst.msk [vmem:[%s219 + $0x1] sm:$0x1] %vm396, %v488
      %p491 = scmp.lt.s32.totalorder %s16, 1
      %s492 = scalar_select %p491, %s16, 1
      %s493 = smul.addr %s492, 2
      %s494 = scalar_lea.vmem %s5, %s493
      // Predicated region
      $region41: #{yunet_backbone.5} parent=39 // pred_check
        %p495 = pneg %p144
      $region42: #{yunet_backbone.5} parent=39 // pred_check_branch
        %497 = sbr.rel (%p495) target = $region44
      $region43: #{yunet_backbone.5} parent=39 // pred_region
        _
      $region44: #{yunet_backbone.5} parent=39 // pred_fallthru
        _
    $region40: #{yunet_backbone.5} parent=5 // pred_fallthru
      _
    %p498 = scmp.le.s32.totalorder 2, %s11
    // Predicated region
    $region45: #{yunet_backbone.5} parent=5 // pred_check
      %p499 = pneg %p498
    $region46: #{yunet_backbone.5} parent=5 // pred_check_branch
      %501 = sbr.rel (%p499) target = $region48
    $region47: #{yunet_backbone.5} parent=5 // pred_region
      %s502 = ssub.s32 %s11, 2
      // Predicated region
      $region49: #{yunet_backbone.5} parent=47 // pred_check
        %p503 = pneg %p150
      $region50: #{yunet_backbone.5} parent=47 // pred_check_branch
        %505 = sbr.rel (%p503) target = $region52
      $region51: #{yunet_backbone.5} parent=47 // pred_region
        %p506 = scmp.lt.s32.totalorder %s17, 1
        %s507 = scalar_select %p506, %s17, 1
        %s508 = smul.addr %s507, 2
        %s509 = scalar_lea.vmem %s5, %s508
      $region52: #{yunet_backbone.5} parent=47 // pred_fallthru
        _
    $region48: #{yunet_backbone.5} parent=5 // pred_fallthru
      _
  $region6: #{yunet_backbone.5} parent=0 // loop_footer
    %s15 = sadd.s32 1, %s11
  $region7: #{yunet_backbone.5} parent=0 // loop_footer_branch
    %10 = sbr.rel target = $region3
  $region8: #{yunet_backbone.5} parent=0 // loop_exit
    _

</llo_original>
